<compile_context>
chip_gen: v5e
topology: v5e:2x2
jax: 0.10.0
libtpu: 0.0.40
codegen_flags: <defaults>
</compile_context>

<pallas_src>
import functools
import math

import jax
import jax.numpy as jnp
from jax.experimental import pallas as pl
from jax.experimental.pallas import tpu as pltpu

VMEM = pltpu.MemorySpace.VMEM
_EPS = 1e-5


# --------------------------------------------------------------------------------------
# The single fused Pallas kernel
# --------------------------------------------------------------------------------------

def _forward_kernel(x_ref, slab_ref, o_ref, *, off, B, S, D, O, nhead, num_layers):
    """Whole TextTransformer forward on VMEM-resident data.

    Activation rows are ordered (b, s) -> row b*S + s.  nn.Transformer(batch_first=False)
    treats dim0 (=B) as the sequence attention mixes over and dim1 (=S=input_dim) as the
    batch, so L = B is the attention axis and N = S the per-position "batch" below.
    """
    L, N = B, S
    R = L * N
    dh = D // nhead
    scale = 1.0 / math.sqrt(dh)

    def get(name):
        r0, nr, nc = off[name]                      # static python ints -> zero-cost slicing
        return slab_ref[pl.ds(r0, nr), pl.ds(0, nc)]

    # Constant matrices baked into the slab at pack time.
    hmask = get("hmask")        # (D, D): column h<nhead selects features of head h, rest zero
    hexpand = get("hexpand")    # (D, D): transpose of hmask
    msum = get("msum")          # (R, L*R): sums the key-position (m) blocks
    x2d = x_ref[...]            # (R, I)

    def layer_norm(y, prefix):
        mu = jnp.mean(y, axis=-1, keepdims=True)
        var = jnp.mean(jnp.square(y - mu), axis=-1, keepdims=True)
        return (y - mu) * jax.lax.rsqrt(var + _EPS) * get(prefix + "g") + get(prefix + "b")

    def ffn(h, prefix):
        f = jnp.dot(h, get(prefix + "lin1_w"), preferred_element_type=jnp.float32)
        f = jnp.maximum(f + get(prefix + "lin1_b"), 0.0)
        return (jnp.dot(f, get(prefix + "lin2_w"), preferred_element_type=jnp.float32)
                + get(prefix + "lin2_b"))

    def mha(x_q, x_kv, prefix):
        q = (jnp.dot(x_q, get(prefix + "q_w"), preferred_element_type=jnp.float32)
             + get(prefix + "q_b")) * scale
        k = jnp.dot(x_kv, get(prefix + "k_w"), preferred_element_type=jnp.float32) + get(prefix + "k_b")
        v = jnp.dot(x_kv, get(prefix + "v_w"), preferred_element_type=jnp.float32) + get(prefix + "v_b")

        # (L*L*N, D) stacks, rows ordered (l, m, n): query position l, key position m, column n.
        q_exp = jnp.concatenate(
            [q[l * N:(l + 1) * N, :] for l in range(L) for _ in range(L)], axis=0)
        k_exp = jnp.concatenate([k] * L, axis=0)
        v_exp = jnp.concatenate([v] * L, axis=0)

        # Per-head scores for ALL (l, m) pairs with ONE MXU op.  Columns >= nhead of hmask are
        # zero, so they carry harmless zeros through the softmax and are annihilated by hexpand.
        s = jnp.dot(q_exp * k_exp, hmask, preferred_element_type=jnp.float32)    # (L*L*N, D)

        # Softmax over the key position m (blocks of N rows inside each l group); VPU-only work.
        prob_blocks = []
        for l in range(L):
            blk = [s[(l * L + m) * N:(l * L + m + 1) * N, :] for m in range(L)]
            smax = blk[0]
            for m in range(1, L):
                smax = jnp.maximum(smax, blk[m])
            ex = [jnp.exp(b - smax) for b in blk]
            den = ex[0]
            for m in range(1, L):
                den = den + ex[m]
            inv = 1.0 / den
            prob_blocks += [e * inv for e in ex]
        probs = jnp.concatenate(prob_blocks, axis=0)                              # (L*L*N, D)

        # Broadcast per-head probs onto their dh features, weight V, sum over m, out-project.
        w = jnp.dot(probs, hexpand, preferred_element_type=jnp.float32)           # (L*L*N, D)
        attn = jnp.dot(msum, w * v_exp, preferred_element_type=jnp.float32)       # (R, D)
        return (jnp.dot(attn, get(prefix + "out_w"), preferred_element_type=jnp.float32)
                + get(prefix + "out_b"))

    # Embedding (+ pre-tiled positional encoding + embedding bias, folded at pack time).
    emb = jnp.dot(x2d, get("emb_w"), preferred_element_type=jnp.float32) + get("bias_pos")

    # Encoder stack.
    h = emb
    for li in range(num_layers):
        p = f"enc{li}_"
        h = layer_norm(h + mha(h, h, p), p + "n1_")
        h = layer_norm(h + ffn(h, p), p + "n2_")
    memory = layer_norm(h, "enc_norm_")

    # Decoder stack (tgt == src == embedded input, no masks — matches self.transformer(x, x)).
    out = emb
    for li in range(num_layers):
        p = f"dec{li}_"
        out = layer_norm(out + mha(out, out, p + "sa_"), p + "n1_")
        out = layer_norm(out + mha(out, memory, p + "ca_"), p + "n2_")
        out = layer_norm(out + ffn(out, p), p + "n3_")
    out = layer_norm(out, "dec_norm_")

    # TODO(synk): dropout (p=0.1) inside nn.Transformer is treated as identity (eval mode).

    # Mean over dim=1 (the S axis) expressed as a matmul against the averaging matrix, then fc.
    pooled = jnp.dot(get("avg"), out, preferred_element_type=jnp.float32)          # (B, D)
    o_ref[...] = (jnp.dot(pooled, get("fc_w"), preferred_element_type=jnp.float32)
                  + get("fc_b"))


# --------------------------------------------------------------------------------------
# Wrapper: exactly one pallas_call, two inputs (data + parameter slab)
# --------------------------------------------------------------------------------------

def text_transformer_forward(x, slab, meta):
    B, S, I = x.shape
    assert (B, S) == (meta["B"], meta["S"]), "slab was packed for a different (batch, seq)"
    kernel = functools.partial(
        _forward_kernel, off=meta["off"], B=B, S=S, D=meta["D"], O=meta["O"],
        nhead=meta["nhead"], num_layers=meta["num_layers"])
    return pl.pallas_call(
        kernel,
        out_shape=jax.ShapeDtypeStruct((B, meta["O"]), jnp.float32),
        in_specs=[pl.BlockSpec(memory_space=VMEM), pl.BlockSpec(memory_space=VMEM)],
        out_specs=pl.BlockSpec(memory_space=VMEM),
    )(x.reshape(B * S, I), slab)


# --------------------------------------------------------------------------------------
# Parameter init (PyTorch layout) and packing into one flat slab
# --------------------------------------------------------------------------------------

def init_params(key, input_dim, output_dim, d_model, num_layers):
    keys = iter(jax.random.split(key, 128))

    def lin(o, i):
        w = 0.05 * jax.random.normal(next(keys), (o, i), jnp.float32)
        b = 0.05 * jax.random.normal(next(keys), (o,), jnp.float32)
        return w, b

    def mha_p():
        in_w, in_b = lin(3 * d_model, d_model)
        out_w, out_b = lin(d_model, d_model)
        return dict(in_w=in_w, in_b=in_b, out_w=out_w, out_b=out_b)

    def ln_p():
        return jnp.ones((d_model,), jnp.float32), jnp.zeros((d_model,), jnp.float32)

    def enc_layer_p():
        l1w, l1b = lin(d_model, d_model)   # dim_feedforward == d_model in this module
        l2w, l2b = lin(d_model, d_model)
        n1g, n1b = ln_p(); n2g, n2b = ln_p()
        return dict(self_attn=mha_p(), lin1_w=l1w, lin1_b=l1b, lin2_w=l2w, lin2_b=l2b,
                    norm1_g=n1g, norm1_b=n1b, norm2_g=n2g, norm2_b=n2b)

    def dec_layer_p():
        l1w, l1b = lin(d_model, d_model)
        l2w, l2b = lin(d_model, d_model)
        n1g, n1b = ln_p(); n2g, n2b = ln_p(); n3g, n3b = ln_p()
        return dict(self_attn=mha_p(), cross_attn=mha_p(),
                    lin1_w=l1w, lin1_b=l1b, lin2_w=l2w, lin2_b=l2b,
                    norm1_g=n1g, norm1_b=n1b, norm2_g=n2g, norm2_b=n2b,
                    norm3_g=n3g, norm3_b=n3b)

    emb_w, emb_b = lin(d_model, input_dim)
    pos = 0.05 * jax.random.normal(next(keys), (1, input_dim, d_model), jnp.float32)
    enc_layers = [enc_layer_p() for _ in range(num_layers)]
    dec_layers = [dec_layer_p() for _ in range(num_layers)]
    enc_ng, enc_nb = ln_p()
    dec_ng, dec_nb = ln_p()
    fc_w, fc_b = lin(output_dim, d_model)
    return dict(emb_w=emb_w, emb_b=emb_b, pos=pos,
                enc_layers=enc_layers, dec_layers=dec_layers,
                enc_norm_g=enc_ng, enc_norm_b=enc_nb,
                dec_norm_g=dec_ng, dec_norm_b=dec_nb,
                fc_w=fc_w, fc_b=fc_b)


def pack_params(params, batch_size, nhead):
    """Transpose to (K, O) matmul layout, build all constant matrices, and pack EVERYTHING
    into one (rows, width) f32 slab.  Returns (slab, meta) where meta['off'][name] =
    (row_offset, rows, cols) with 8-row-aligned offsets (static python ints)."""
    d = params["emb_w"].shape[0]
    input_dim = params["emb_w"].shape[1]
    S = params["pos"].shape[1]
    O = params["fc_w"].shape[0]
    B = batch_size
    H = nhead
    dh = d // H
    num_layers = len(params["enc_layers"])
    L, N = B, S

    width = max(d, L * L * N, L * N, O)

    blocks, off, cur = [], {}, [0]

    def add(name, arr):
        a = jnp.asarray(arr, jnp.float32)
        if a.ndim == 1:
            a = a.reshape(1, -1)
        r, c = a.shape
        pad_r = (-r) % 8
        a = jnp.pad(a, ((0, pad_r), (0, width - c)))
        off[name] = (cur[0], r, c)
        blocks.append(a)
        cur[0] += r + pad_r

    t = lambda w: jnp.asarray(w, jnp.float32).T

    # --- globals & constants -----------------------------------------------------------
    add("emb_w", t(params["emb_w"]))                                   # (I, D)
    pos = jnp.asarray(params["pos"], jnp.float32)[0]                   # (S, D)
    add("bias_pos", jnp.tile(pos + params["emb_b"].reshape(1, -1), (B, 1)))   # (B*S, D)
    hm = jnp.repeat(jnp.eye(H, dtype=jnp.float32), dh, axis=0)         # (D, H)
    hm_pad = jnp.pad(hm, ((0, 0), (0, d - H)))                         # (D, D), zero-padded cols
    add("hmask", hm_pad)
    add("hexpand", hm_pad.T)
    # msum[l*N+n, (l*L+m)*N+n] = 1  -> sums over the key position m
    msum = jnp.kron(jnp.eye(L, dtype=jnp.float32),
                    jnp.tile(jnp.eye(N, dtype=jnp.float32), (1, L)))   # (L*N, L*L*N)
    add("msum", msum)
    # avg[b, b*S+s] = 1/S  -> mean over dim=1
    add("avg", jnp.kron(jnp.eye(B, dtype=jnp.float32), jnp.ones((1, S), jnp.float32)) / S)
    add("fc_w", t(params["fc_w"]))
    add("fc_b", params["fc_b"])

    def add_mha(prefix, attn):
        E = attn["out_w"].shape[0]
        for name, sl in (("q", slice(0, E)), ("k", slice(E, 2 * E)), ("v", slice(2 * E, 3 * E))):
            add(prefix + name + "_w", t(attn["in_w"][sl]))
            add(prefix + name + "_b", attn["in_b"][sl])
        add(prefix + "out_w", t(attn["out_w"]))
        add(prefix + "out_b", attn["out_b"])

    # --- encoder layers ------------------------------------------------------------------
    for li, lyr in enumerate(params["enc_layers"]):
        p = f"enc{li}_"
        add_mha(p, lyr["self_attn"])
        add(p + "lin1_w", t(lyr["lin1_w"])); add(p + "lin1_b", lyr["lin1_b"])
        add(p + "lin2_w", t(lyr["lin2_w"])); add(p + "lin2_b", lyr["lin2_b"])
        add(p + "n1_g", lyr["norm1_g"]); add(p + "n1_b", lyr["norm1_b"])
        add(p + "n2_g", lyr["norm2_g"]); add(p + "n2_b", lyr["norm2_b"])
    add("enc_norm_g", params["enc_norm_g"]); add("enc_norm_b", params["enc_norm_b"])

    # --- decoder layers ------------------------------------------------------------------
    for li, lyr in enumerate(params["dec_layers"]):
        p = f"dec{li}_"
        add_mha(p + "sa_", lyr["self_attn"])
        add_mha(p + "ca_", lyr["cross_attn"])
        add(p + "lin1_w", t(lyr["lin1_w"])); add(p + "lin1_b", lyr["lin1_b"])
        add(p + "lin2_w", t(lyr["lin2_w"])); add(p + "lin2_b", lyr["lin2_b"])
        add(p + "n1_g", lyr["norm1_g"]); add(p + "n1_b", lyr["norm1_b"])
        add(p + "n2_g", lyr["norm2_g"]); add(p + "n2_b", lyr["norm2_b"])
        add(p + "n3_g", lyr["norm3_g"]); add(p + "n3_b", lyr["norm3_b"])
    add("dec_norm_g", params["dec_norm_g"]); add("dec_norm_b", params["dec_norm_b"])

    slab = jnp.concatenate(blocks, axis=0)
    meta = dict(off=off, B=B, S=S, D=d, O=O, nhead=H, num_layers=num_layers)
    return slab, meta


# --------------------------------------------------------------------------------------
# Pure-JAX reference (standard heads/einsum formulation) for a correctness check
# --------------------------------------------------------------------------------------

def _reference_forward(x, params, nhead):
    d = params["emb_w"].shape[0]
    emb = jnp.einsum("bsi,di->bsd", x, params["emb_w"]) + params["emb_b"] + params["pos"]

    def ln(y, g, b):
        mu = y.mean(-1, keepdims=True)
        var = ((y - mu) ** 2).mean(-1, keepdims=True)
        return (y - mu) / jnp.sqrt(var + _EPS) * g + b

    def mha(xq, xkv, a):
        E = a["out_w"].shape[0]; H = nhead; dh = E // H
        q = jnp.einsum("lnd,ed->lne", xq, a["in_w"][:E]) + a["in_b"][:E]
        k = jnp.einsum("lnd,ed->lne", xkv, a["in_w"][E:2 * E]) + a["in_b"][E:2 * E]
        v = jnp.einsum("lnd,ed->lne", xkv, a["in_w"][2 * E:]) + a["in_b"][2 * E:]
        Lq, N = q.shape[0], q.shape[1]
        q = q.reshape(Lq, N, H, dh); k = k.reshape(-1, N, H, dh); v = v.reshape(-1, N, H, dh)
        s = jnp.einsum("lnhd,mnhd->nhlm", q, k) / math.sqrt(dh)
        p = jax.nn.softmax(s, axis=-1)
        o = jnp.einsum("nhlm,mnhd->lnhd", p, v).reshape(Lq, N, E)
        return jnp.einsum("lne,oe->lno", o, a["out_w"]) + a["out_b"]

    def ffn(y, lyr):
        f = jnp.maximum(jnp.einsum("lnd,fd->lnf", y, lyr["lin1_w"]) + lyr["lin1_b"], 0.0)
        return jnp.einsum("lnf,df->lnd", f, lyr["lin2_w"]) + lyr["lin2_b"]

    h = emb  # axis0 = B is the sequence (batch_first=False quirk), axis1 = input_dim
    for lyr in params["enc_layers"]:
        h = ln(h + mha(h, h, lyr["self_attn"]), lyr["norm1_g"], lyr["norm1_b"])
        h = ln(h + ffn(h, lyr), lyr["norm2_g"], lyr["norm2_b"])
    memory = ln(h, params["enc_norm_g"], params["enc_norm_b"])

    out = emb
    for lyr in params["dec_layers"]:
        out = ln(out + mha(out, out, lyr["self_attn"]), lyr["norm1_g"], lyr["norm1_b"])
        out = ln(out + mha(out, memory, lyr["cross_attn"]), lyr["norm2_g"], lyr["norm2_b"])
        out = ln(out + ffn(out, lyr), lyr["norm3_g"], lyr["norm3_b"])
    out = ln(out, params["dec_norm_g"], params["dec_norm_b"])
    pooled = out.mean(axis=1)
    return jnp.einsum("bd,od->bo", pooled, params["fc_w"]) + params["fc_b"]


# --------------------------------------------------------------------------------------
# Main
# --------------------------------------------------------------------------------------

if __name__ == "__main__":
    INPUT_DIM = 8      # also the sequence length (required by the positional-encoding broadcast)
    OUTPUT_DIM = 4
    D_MODEL = 32       # d_model == dim_feedforward in the PyTorch module
    NHEAD = 4
    NUM_LAYERS = 2
    B = 2

    key = jax.random.PRNGKey(0)
    pkey, xkey = jax.random.split(key)
    params = init_params(pkey, INPUT_DIM, OUTPUT_DIM, D_MODEL, NUM_LAYERS)
    slab, meta = pack_params(params, batch_size=B, nhead=NHEAD)   # layout work done once, offline

    x = jax.random.normal(xkey, (B, INPUT_DIM, INPUT_DIM), jnp.float32)

    fwd = jax.jit(functools.partial(text_transformer_forward, meta=meta))
    out = jax.block_until_ready(fwd(x, slab))

    assert out.shape == (B, OUTPUT_DIM), out.shape
    assert bool(jnp.all(jnp.isfinite(out)))

    ref = _reference_forward(x, params, NHEAD)
    max_err = float(jnp.max(jnp.abs(out - ref)))
    assert max_err < 1e-2, f"kernel/reference mismatch: max abs err {max_err}"

    print("KERNEL_OK")
</pallas_src>

<mosaic_0001>
module attributes {stable_mosaic.version = 11 : i64} {
  func.func @_forward_kernel(%arg0: memref<16x8xf32, #tpu.memory_space<vmem>>, %arg1: memref<1624x32xf32, #tpu.memory_space<vmem>>, %arg2: memref<2x4xf32, #tpu.memory_space<vmem>>) attributes {dimension_semantics = [], scalar_prefetch = 0 : i64, scratch_operands = 0 : i64, tpu.core_type = #tpu.core_type<tc>} {
    %c24 = arith.constant 24 : index
    %c0 = arith.constant 0 : index
    %0 = vector.load %arg1[%c24, %c0] : memref<1624x32xf32, #tpu.memory_space<vmem>>, vector<32x32xf32>
    %c56 = arith.constant 56 : index
    %c0_0 = arith.constant 0 : index
    %1 = vector.load %arg1[%c56, %c0_0] : memref<1624x32xf32, #tpu.memory_space<vmem>>, vector<32x32xf32>
    %c88 = arith.constant 88 : index
    %c0_1 = arith.constant 0 : index
    %2 = vector.load %arg1[%c88, %c0_1] : memref<1624x32xf32, #tpu.memory_space<vmem>>, vector<16x32xf32>
    %c0_2 = arith.constant 0 : index
    %c0_3 = arith.constant 0 : index
    %3 = vector.load %arg0[%c0_2, %c0_3] : memref<16x8xf32, #tpu.memory_space<vmem>>, vector<16x8xf32>
    %c0_4 = arith.constant 0 : index
    %c0_5 = arith.constant 0 : index
    %4 = vector.load %arg1[%c0_4, %c0_5] : memref<1624x32xf32, #tpu.memory_space<vmem>>, vector<8x32xf32>
    %cst = arith.constant dense<0.000000e+00> : vector<16x32xf32>
    %5 = tpu.matmul %3, %4, %cst {dimension_numbers = #tpu.dot_dimension_numbers<[1], [0], [0], [1], [0, 0, 1, 1], [], []>} : vector<16x8xf32>, vector<8x32xf32>, vector<16x32xf32> -> vector<16x32xf32>
    %c8 = arith.constant 8 : index
    %c0_6 = arith.constant 0 : index
    %6 = vector.load %arg1[%c8, %c0_6] : memref<1624x32xf32, #tpu.memory_space<vmem>>, vector<16x32xf32>
    %7 = arith.addf %5, %6 : vector<16x32xf32>
    %c152 = arith.constant 152 : index
    %c0_7 = arith.constant 0 : index
    %8 = vector.load %arg1[%c152, %c0_7] : memref<1624x32xf32, #tpu.memory_space<vmem>>, vector<32x32xf32>
    %cst_8 = arith.constant dense<0.000000e+00> : vector<16x32xf32>
    %9 = tpu.matmul %7, %8, %cst_8 {dimension_numbers = #tpu.dot_dimension_numbers<[1], [0], [0], [1], [0, 0, 1, 1], [], []>} : vector<16x32xf32>, vector<32x32xf32>, vector<16x32xf32> -> vector<16x32xf32>
    %c184 = arith.constant 184 : index
    %c0_9 = arith.constant 0 : index
    %10 = vector.load %arg1[%c184, %c0_9] : memref<1624x32xf32, #tpu.memory_space<vmem>>, vector<1x32xf32>
    %11 = vector.broadcast %10 : vector<1x32xf32> to vector<16x32xf32>
    %12 = arith.addf %9, %11 : vector<16x32xf32>
    %cst_10 = arith.constant 0.353553385 : f32
    %13 = vector.broadcast %cst_10 : f32 to vector<16x32xf32>
    %14 = arith.mulf %12, %13 : vector<16x32xf32>
    %c192 = arith.constant 192 : index
    %c0_11 = arith.constant 0 : index
    %15 = vector.load %arg1[%c192, %c0_11] : memref<1624x32xf32, #tpu.memory_space<vmem>>, vector<32x32xf32>
    %cst_12 = arith.constant dense<0.000000e+00> : vector<16x32xf32>
    %16 = tpu.matmul %7, %15, %cst_12 {dimension_numbers = #tpu.dot_dimension_numbers<[1], [0], [0], [1], [0, 0, 1, 1], [], []>} : vector<16x32xf32>, vector<32x32xf32>, vector<16x32xf32> -> vector<16x32xf32>
    %c224 = arith.constant 224 : index
    %c0_13 = arith.constant 0 : index
    %17 = vector.load %arg1[%c224, %c0_13] : memref<1624x32xf32, #tpu.memory_space<vmem>>, vector<1x32xf32>
    %18 = vector.broadcast %17 : vector<1x32xf32> to vector<16x32xf32>
    %19 = arith.addf %16, %18 : vector<16x32xf32>
    %c232 = arith.constant 232 : index
    %c0_14 = arith.constant 0 : index
    %20 = vector.load %arg1[%c232, %c0_14] : memref<1624x32xf32, #tpu.memory_space<vmem>>, vector<32x32xf32>
    %cst_15 = arith.constant dense<0.000000e+00> : vector<16x32xf32>
    %21 = tpu.matmul %7, %20, %cst_15 {dimension_numbers = #tpu.dot_dimension_numbers<[1], [0], [0], [1], [0, 0, 1, 1], [], []>} : vector<16x32xf32>, vector<32x32xf32>, vector<16x32xf32> -> vector<16x32xf32>
    %c264 = arith.constant 264 : index
    %c0_16 = arith.constant 0 : index
    %22 = vector.load %arg1[%c264, %c0_16] : memref<1624x32xf32, #tpu.memory_space<vmem>>, vector<1x32xf32>
    %23 = vector.broadcast %22 : vector<1x32xf32> to vector<16x32xf32>
    %24 = arith.addf %21, %23 : vector<16x32xf32>
    %25 = vector.extract_strided_slice %14 {offsets = [0, 0], sizes = [8, 32], strides = [1, 1]} : vector<16x32xf32> to vector<8x32xf32>
    %26 = vector.extract_strided_slice %14 {offsets = [0, 0], sizes = [8, 32], strides = [1, 1]} : vector<16x32xf32> to vector<8x32xf32>
    %27 = vector.extract_strided_slice %14 {offsets = [8, 0], sizes = [8, 32], strides = [1, 1]} : vector<16x32xf32> to vector<8x32xf32>
    %28 = vector.extract_strided_slice %14 {offsets = [8, 0], sizes = [8, 32], strides = [1, 1]} : vector<16x32xf32> to vector<8x32xf32>
    %29 = tpu.concatenate %25, %26, %27, %28 in 0 : vector<8x32xf32>, vector<8x32xf32>, vector<8x32xf32>, vector<8x32xf32> -> vector<32x32xf32>
    %30 = tpu.concatenate %19, %19 in 0 : vector<16x32xf32>, vector<16x32xf32> -> vector<32x32xf32>
    %31 = tpu.concatenate %24, %24 in 0 : vector<16x32xf32>, vector<16x32xf32> -> vector<32x32xf32>
    %32 = arith.mulf %29, %30 : vector<32x32xf32>
    %cst_17 = arith.constant dense<0.000000e+00> : vector<32x32xf32>
    %33 = tpu.matmul %32, %0, %cst_17 {dimension_numbers = #tpu.dot_dimension_numbers<[1], [0], [0], [1], [0, 0, 1, 1], [], []>} : vector<32x32xf32>, vector<32x32xf32>, vector<32x32xf32> -> vector<32x32xf32>
    %34 = vector.extract_strided_slice %33 {offsets = [0, 0], sizes = [8, 32], strides = [1, 1]} : vector<32x32xf32> to vector<8x32xf32>
    %35 = vector.extract_strided_slice %33 {offsets = [8, 0], sizes = [8, 32], strides = [1, 1]} : vector<32x32xf32> to vector<8x32xf32>
    %36 = arith.maximumf %34, %35 : vector<8x32xf32>
    %37 = arith.subf %34, %36 : vector<8x32xf32>
    %38 = math.exp %37 : vector<8x32xf32>
    %39 = arith.subf %35, %36 : vector<8x32xf32>
    %40 = math.exp %39 : vector<8x32xf32>
    %41 = arith.addf %38, %40 : vector<8x32xf32>
    %cst_18 = arith.constant 1.000000e+00 : f32
    %42 = vector.broadcast %cst_18 : f32 to vector<8x32xf32>
    %43 = arith.divf %42, %41 : vector<8x32xf32>
    %44 = arith.mulf %38, %43 : vector<8x32xf32>
    %45 = arith.mulf %40, %43 : vector<8x32xf32>
    %46 = vector.extract_strided_slice %33 {offsets = [16, 0], sizes = [8, 32], strides = [1, 1]} : vector<32x32xf32> to vector<8x32xf32>
    %47 = vector.extract_strided_slice %33 {offsets = [24, 0], sizes = [8, 32], strides = [1, 1]} : vector<32x32xf32> to vector<8x32xf32>
    %48 = arith.maximumf %46, %47 : vector<8x32xf32>
    %49 = arith.subf %46, %48 : vector<8x32xf32>
    %50 = math.exp %49 : vector<8x32xf32>
    %51 = arith.subf %47, %48 : vector<8x32xf32>
    %52 = math.exp %51 : vector<8x32xf32>
    %53 = arith.addf %50, %52 : vector<8x32xf32>
    %cst_19 = arith.constant 1.000000e+00 : f32
    %54 = vector.broadcast %cst_19 : f32 to vector<8x32xf32>
    %55 = arith.divf %54, %53 : vector<8x32xf32>
    %56 = arith.mulf %50, %55 : vector<8x32xf32>
    %57 = arith.mulf %52, %55 : vector<8x32xf32>
    %58 = tpu.concatenate %44, %45, %56, %57 in 0 : vector<8x32xf32>, vector<8x32xf32>, vector<8x32xf32>, vector<8x32xf32> -> vector<32x32xf32>
    %cst_20 = arith.constant dense<0.000000e+00> : vector<32x32xf32>
    %59 = tpu.matmul %58, %1, %cst_20 {dimension_numbers = #tpu.dot_dimension_numbers<[1], [0], [0], [1], [0, 0, 1, 1], [], []>} : vector<32x32xf32>, vector<32x32xf32>, vector<32x32xf32> -> vector<32x32xf32>
    %60 = arith.mulf %59, %31 : vector<32x32xf32>
    %cst_21 = arith.constant dense<0.000000e+00> : vector<16x32xf32>
    %61 = tpu.matmul %2, %60, %cst_21 {dimension_numbers = #tpu.dot_dimension_numbers<[1], [0], [0], [1], [0, 0, 1, 1], [], []>} : vector<16x32xf32>, vector<32x32xf32>, vector<16x32xf32> -> vector<16x32xf32>
    %c272 = arith.constant 272 : index
    %c0_22 = arith.constant 0 : index
    %62 = vector.load %arg1[%c272, %c0_22] : memref<1624x32xf32, #tpu.memory_space<vmem>>, vector<32x32xf32>
    %cst_23 = arith.constant dense<0.000000e+00> : vector<16x32xf32>
    %63 = tpu.matmul %61, %62, %cst_23 {dimension_numbers = #tpu.dot_dimension_numbers<[1], [0], [0], [1], [0, 0, 1, 1], [], []>} : vector<16x32xf32>, vector<32x32xf32>, vector<16x32xf32> -> vector<16x32xf32>
    %c304 = arith.constant 304 : index
    %c0_24 = arith.constant 0 : index
    %64 = vector.load %arg1[%c304, %c0_24] : memref<1624x32xf32, #tpu.memory_space<vmem>>, vector<1x32xf32>
    %65 = vector.broadcast %64 : vector<1x32xf32> to vector<16x32xf32>
    %66 = arith.addf %63, %65 : vector<16x32xf32>
    %67 = arith.addf %7, %66 : vector<16x32xf32>
    %cst_25 = arith.constant dense<0.000000e+00> : vector<16xf32>
    %68 = vector.multi_reduction <add>, %67, %cst_25 [1] : vector<16x32xf32> to vector<16xf32>
    %69 = vector.shape_cast %68 : vector<16xf32> to vector<16x1xf32>
    %cst_26 = arith.constant 3.200000e+01 : f32
    %70 = vector.broadcast %cst_26 : f32 to vector<16x1xf32>
    %71 = arith.divf %69, %70 : vector<16x1xf32>
    %72 = vector.broadcast %71 : vector<16x1xf32> to vector<16x32xf32>
    %73 = arith.subf %67, %72 : vector<16x32xf32>
    %74 = arith.mulf %73, %73 : vector<16x32xf32>
    %cst_27 = arith.constant dense<0.000000e+00> : vector<16xf32>
    %75 = vector.multi_reduction <add>, %74, %cst_27 [1] : vector<16x32xf32> to vector<16xf32>
    %76 = vector.shape_cast %75 : vector<16xf32> to vector<16x1xf32>
    %cst_28 = arith.constant 3.200000e+01 : f32
    %77 = vector.broadcast %cst_28 : f32 to vector<16x1xf32>
    %78 = arith.divf %76, %77 : vector<16x1xf32>
    %79 = vector.broadcast %71 : vector<16x1xf32> to vector<16x32xf32>
    %80 = arith.subf %67, %79 : vector<16x32xf32>
    %cst_29 = arith.constant 9.99999974E-6 : f32
    %81 = vector.broadcast %cst_29 : f32 to vector<16x1xf32>
    %82 = arith.addf %78, %81 : vector<16x1xf32>
    %83 = math.rsqrt %82 : vector<16x1xf32>
    %84 = vector.broadcast %83 : vector<16x1xf32> to vector<16x32xf32>
    %85 = arith.mulf %80, %84 : vector<16x32xf32>
    %c392 = arith.constant 392 : index
    %c0_30 = arith.constant 0 : index
    %86 = vector.load %arg1[%c392, %c0_30] : memref<1624x32xf32, #tpu.memory_space<vmem>>, vector<1x32xf32>
    %87 = vector.broadcast %86 : vector<1x32xf32> to vector<16x32xf32>
    %88 = arith.mulf %85, %87 : vector<16x32xf32>
    %c400 = arith.constant 400 : index
    %c0_31 = arith.constant 0 : index
    %89 = vector.load %arg1[%c400, %c0_31] : memref<1624x32xf32, #tpu.memory_space<vmem>>, vector<1x32xf32>
    %90 = vector.broadcast %89 : vector<1x32xf32> to vector<16x32xf32>
    %91 = arith.addf %88, %90 : vector<16x32xf32>
    %c312 = arith.constant 312 : index
    %c0_32 = arith.constant 0 : index
    %92 = vector.load %arg1[%c312, %c0_32] : memref<1624x32xf32, #tpu.memory_space<vmem>>, vector<32x32xf32>
    %cst_33 = arith.constant dense<0.000000e+00> : vector<16x32xf32>
    %93 = tpu.matmul %91, %92, %cst_33 {dimension_numbers = #tpu.dot_dimension_numbers<[1], [0], [0], [1], [0, 0, 1, 1], [], []>} : vector<16x32xf32>, vector<32x32xf32>, vector<16x32xf32> -> vector<16x32xf32>
    %c344 = arith.constant 344 : index
    %c0_34 = arith.constant 0 : index
    %94 = vector.load %arg1[%c344, %c0_34] : memref<1624x32xf32, #tpu.memory_space<vmem>>, vector<1x32xf32>
    %95 = vector.broadcast %94 : vector<1x32xf32> to vector<16x32xf32>
    %96 = arith.addf %93, %95 : vector<16x32xf32>
    %cst_35 = arith.constant 0.000000e+00 : f32
    %97 = vector.broadcast %cst_35 : f32 to vector<16x32xf32>
    %98 = arith.maximumf %96, %97 : vector<16x32xf32>
    %c352 = arith.constant 352 : index
    %c0_36 = arith.constant 0 : index
    %99 = vector.load %arg1[%c352, %c0_36] : memref<1624x32xf32, #tpu.memory_space<vmem>>, vector<32x32xf32>
    %cst_37 = arith.constant dense<0.000000e+00> : vector<16x32xf32>
    %100 = tpu.matmul %98, %99, %cst_37 {dimension_numbers = #tpu.dot_dimension_numbers<[1], [0], [0], [1], [0, 0, 1, 1], [], []>} : vector<16x32xf32>, vector<32x32xf32>, vector<16x32xf32> -> vector<16x32xf32>
    %c384 = arith.constant 384 : index
    %c0_38 = arith.constant 0 : index
    %101 = vector.load %arg1[%c384, %c0_38] : memref<1624x32xf32, #tpu.memory_space<vmem>>, vector<1x32xf32>
    %102 = vector.broadcast %101 : vector<1x32xf32> to vector<16x32xf32>
    %103 = arith.addf %100, %102 : vector<16x32xf32>
    %104 = arith.addf %91, %103 : vector<16x32xf32>
    %cst_39 = arith.constant dense<0.000000e+00> : vector<16xf32>
    %105 = vector.multi_reduction <add>, %104, %cst_39 [1] : vector<16x32xf32> to vector<16xf32>
    %106 = vector.shape_cast %105 : vector<16xf32> to vector<16x1xf32>
    %cst_40 = arith.constant 3.200000e+01 : f32
    %107 = vector.broadcast %cst_40 : f32 to vector<16x1xf32>
    %108 = arith.divf %106, %107 : vector<16x1xf32>
    %109 = vector.broadcast %108 : vector<16x1xf32> to vector<16x32xf32>
    %110 = arith.subf %104, %109 : vector<16x32xf32>
    %111 = arith.mulf %110, %110 : vector<16x32xf32>
    %cst_41 = arith.constant dense<0.000000e+00> : vector<16xf32>
    %112 = vector.multi_reduction <add>, %111, %cst_41 [1] : vector<16x32xf32> to vector<16xf32>
    %113 = vector.shape_cast %112 : vector<16xf32> to vector<16x1xf32>
    %cst_42 = arith.constant 3.200000e+01 : f32
    %114 = vector.broadcast %cst_42 : f32 to vector<16x1xf32>
    %115 = arith.divf %113, %114 : vector<16x1xf32>
    %116 = vector.broadcast %108 : vector<16x1xf32> to vector<16x32xf32>
    %117 = arith.subf %104, %116 : vector<16x32xf32>
    %cst_43 = arith.constant 9.99999974E-6 : f32
    %118 = vector.broadcast %cst_43 : f32 to vector<16x1xf32>
    %119 = arith.addf %115, %118 : vector<16x1xf32>
    %120 = math.rsqrt %119 : vector<16x1xf32>
    %121 = vector.broadcast %120 : vector<16x1xf32> to vector<16x32xf32>
    %122 = arith.mulf %117, %121 : vector<16x32xf32>
    %c408 = arith.constant 408 : index
    %c0_44 = arith.constant 0 : index
    %123 = vector.load %arg1[%c408, %c0_44] : memref<1624x32xf32, #tpu.memory_space<vmem>>, vector<1x32xf32>
    %124 = vector.broadcast %123 : vector<1x32xf32> to vector<16x32xf32>
    %125 = arith.mulf %122, %124 : vector<16x32xf32>
    %c416 = arith.constant 416 : index
    %c0_45 = arith.constant 0 : index
    %126 = vector.load %arg1[%c416, %c0_45] : memref<1624x32xf32, #tpu.memory_space<vmem>>, vector<1x32xf32>
    %127 = vector.broadcast %126 : vector<1x32xf32> to vector<16x32xf32>
    %128 = arith.addf %125, %127 : vector<16x32xf32>
    %c424 = arith.constant 424 : index
    %c0_46 = arith.constant 0 : index
    %129 = vector.load %arg1[%c424, %c0_46] : memref<1624x32xf32, #tpu.memory_space<vmem>>, vector<32x32xf32>
    %cst_47 = arith.constant dense<0.000000e+00> : vector<16x32xf32>
    %130 = tpu.matmul %128, %129, %cst_47 {dimension_numbers = #tpu.dot_dimension_numbers<[1], [0], [0], [1], [0, 0, 1, 1], [], []>} : vector<16x32xf32>, vector<32x32xf32>, vector<16x32xf32> -> vector<16x32xf32>
    %c456 = arith.constant 456 : index
    %c0_48 = arith.constant 0 : index
    %131 = vector.load %arg1[%c456, %c0_48] : memref<1624x32xf32, #tpu.memory_space<vmem>>, vector<1x32xf32>
    %132 = vector.broadcast %131 : vector<1x32xf32> to vector<16x32xf32>
    %133 = arith.addf %130, %132 : vector<16x32xf32>
    %cst_49 = arith.constant 0.353553385 : f32
    %134 = vector.broadcast %cst_49 : f32 to vector<16x32xf32>
    %135 = arith.mulf %133, %134 : vector<16x32xf32>
    %c464 = arith.constant 464 : index
    %c0_50 = arith.constant 0 : index
    %136 = vector.load %arg1[%c464, %c0_50] : memref<1624x32xf32, #tpu.memory_space<vmem>>, vector<32x32xf32>
    %cst_51 = arith.constant dense<0.000000e+00> : vector<16x32xf32>
    %137 = tpu.matmul %128, %136, %cst_51 {dimension_numbers = #tpu.dot_dimension_numbers<[1], [0], [0], [1], [0, 0, 1, 1], [], []>} : vector<16x32xf32>, vector<32x32xf32>, vector<16x32xf32> -> vector<16x32xf32>
    %c496 = arith.constant 496 : index
    %c0_52 = arith.constant 0 : index
    %138 = vector.load %arg1[%c496, %c0_52] : memref<1624x32xf32, #tpu.memory_space<vmem>>, vector<1x32xf32>
    %139 = vector.broadcast %138 : vector<1x32xf32> to vector<16x32xf32>
    %140 = arith.addf %137, %139 : vector<16x32xf32>
    %c504 = arith.constant 504 : index
    %c0_53 = arith.constant 0 : index
    %141 = vector.load %arg1[%c504, %c0_53] : memref<1624x32xf32, #tpu.memory_space<vmem>>, vector<32x32xf32>
    %cst_54 = arith.constant dense<0.000000e+00> : vector<16x32xf32>
    %142 = tpu.matmul %128, %141, %cst_54 {dimension_numbers = #tpu.dot_dimension_numbers<[1], [0], [0], [1], [0, 0, 1, 1], [], []>} : vector<16x32xf32>, vector<32x32xf32>, vector<16x32xf32> -> vector<16x32xf32>
    %c536 = arith.constant 536 : index
    %c0_55 = arith.constant 0 : index
    %143 = vector.load %arg1[%c536, %c0_55] : memref<1624x32xf32, #tpu.memory_space<vmem>>, vector<1x32xf32>
    %144 = vector.broadcast %143 : vector<1x32xf32> to vector<16x32xf32>
    %145 = arith.addf %142, %144 : vector<16x32xf32>
    %146 = vector.extract_strided_slice %135 {offsets = [0, 0], sizes = [8, 32], strides = [1, 1]} : vector<16x32xf32> to vector<8x32xf32>
    %147 = vector.extract_strided_slice %135 {offsets = [0, 0], sizes = [8, 32], strides = [1, 1]} : vector<16x32xf32> to vector<8x32xf32>
    %148 = vector.extract_strided_slice %135 {offsets = [8, 0], sizes = [8, 32], strides = [1, 1]} : vector<16x32xf32> to vector<8x32xf32>
    %149 = vector.extract_strided_slice %135 {offsets = [8, 0], sizes = [8, 32], strides = [1, 1]} : vector<16x32xf32> to vector<8x32xf32>
    %150 = tpu.concatenate %146, %147, %148, %149 in 0 : vector<8x32xf32>, vector<8x32xf32>, vector<8x32xf32>, vector<8x32xf32> -> vector<32x32xf32>
    %151 = tpu.concatenate %140, %140 in 0 : vector<16x32xf32>, vector<16x32xf32> -> vector<32x32xf32>
    %152 = tpu.concatenate %145, %145 in 0 : vector<16x32xf32>, vector<16x32xf32> -> vector<32x32xf32>
    %153 = arith.mulf %150, %151 : vector<32x32xf32>
    %cst_56 = arith.constant dense<0.000000e+00> : vector<32x32xf32>
    %154 = tpu.matmul %153, %0, %cst_56 {dimension_numbers = #tpu.dot_dimension_numbers<[1], [0], [0], [1], [0, 0, 1, 1], [], []>} : vector<32x32xf32>, vector<32x32xf32>, vector<32x32xf32> -> vector<32x32xf32>
    %155 = vector.extract_strided_slice %154 {offsets = [0, 0], sizes = [8, 32], strides = [1, 1]} : vector<32x32xf32> to vector<8x32xf32>
    %156 = vector.extract_strided_slice %154 {offsets = [8, 0], sizes = [8, 32], strides = [1, 1]} : vector<32x32xf32> to vector<8x32xf32>
    %157 = arith.maximumf %155, %156 : vector<8x32xf32>
    %158 = arith.subf %155, %157 : vector<8x32xf32>
    %159 = math.exp %158 : vector<8x32xf32>
    %160 = arith.subf %156, %157 : vector<8x32xf32>
    %161 = math.exp %160 : vector<8x32xf32>
    %162 = arith.addf %159, %161 : vector<8x32xf32>
    %cst_57 = arith.constant 1.000000e+00 : f32
    %163 = vector.broadcast %cst_57 : f32 to vector<8x32xf32>
    %164 = arith.divf %163, %162 : vector<8x32xf32>
    %165 = arith.mulf %159, %164 : vector<8x32xf32>
    %166 = arith.mulf %161, %164 : vector<8x32xf32>
    %167 = vector.extract_strided_slice %154 {offsets = [16, 0], sizes = [8, 32], strides = [1, 1]} : vector<32x32xf32> to vector<8x32xf32>
    %168 = vector.extract_strided_slice %154 {offsets = [24, 0], sizes = [8, 32], strides = [1, 1]} : vector<32x32xf32> to vector<8x32xf32>
    %169 = arith.maximumf %167, %168 : vector<8x32xf32>
    %170 = arith.subf %167, %169 : vector<8x32xf32>
    %171 = math.exp %170 : vector<8x32xf32>
    %172 = arith.subf %168, %169 : vector<8x32xf32>
    %173 = math.exp %172 : vector<8x32xf32>
    %174 = arith.addf %171, %173 : vector<8x32xf32>
    %cst_58 = arith.constant 1.000000e+00 : f32
    %175 = vector.broadcast %cst_58 : f32 to vector<8x32xf32>
    %176 = arith.divf %175, %174 : vector<8x32xf32>
    %177 = arith.mulf %171, %176 : vector<8x32xf32>
    %178 = arith.mulf %173, %176 : vector<8x32xf32>
    %179 = tpu.concatenate %165, %166, %177, %178 in 0 : vector<8x32xf32>, vector<8x32xf32>, vector<8x32xf32>, vector<8x32xf32> -> vector<32x32xf32>
    %cst_59 = arith.constant dense<0.000000e+00> : vector<32x32xf32>
    %180 = tpu.matmul %179, %1, %cst_59 {dimension_numbers = #tpu.dot_dimension_numbers<[1], [0], [0], [1], [0, 0, 1, 1], [], []>} : vector<32x32xf32>, vector<32x32xf32>, vector<32x32xf32> -> vector<32x32xf32>
    %181 = arith.mulf %180, %152 : vector<32x32xf32>
    %cst_60 = arith.constant dense<0.000000e+00> : vector<16x32xf32>
    %182 = tpu.matmul %2, %181, %cst_60 {dimension_numbers = #tpu.dot_dimension_numbers<[1], [0], [0], [1], [0, 0, 1, 1], [], []>} : vector<16x32xf32>, vector<32x32xf32>, vector<16x32xf32> -> vector<16x32xf32>
    %c544 = arith.constant 544 : index
    %c0_61 = arith.constant 0 : index
    %183 = vector.load %arg1[%c544, %c0_61] : memref<1624x32xf32, #tpu.memory_space<vmem>>, vector<32x32xf32>
    %cst_62 = arith.constant dense<0.000000e+00> : vector<16x32xf32>
    %184 = tpu.matmul %182, %183, %cst_62 {dimension_numbers = #tpu.dot_dimension_numbers<[1], [0], [0], [1], [0, 0, 1, 1], [], []>} : vector<16x32xf32>, vector<32x32xf32>, vector<16x32xf32> -> vector<16x32xf32>
    %c576 = arith.constant 576 : index
    %c0_63 = arith.constant 0 : index
    %185 = vector.load %arg1[%c576, %c0_63] : memref<1624x32xf32, #tpu.memory_space<vmem>>, vector<1x32xf32>
    %186 = vector.broadcast %185 : vector<1x32xf32> to vector<16x32xf32>
    %187 = arith.addf %184, %186 : vector<16x32xf32>
    %188 = arith.addf %128, %187 : vector<16x32xf32>
    %cst_64 = arith.constant dense<0.000000e+00> : vector<16xf32>
    %189 = vector.multi_reduction <add>, %188, %cst_64 [1] : vector<16x32xf32> to vector<16xf32>
    %190 = vector.shape_cast %189 : vector<16xf32> to vector<16x1xf32>
    %cst_65 = arith.constant 3.200000e+01 : f32
    %191 = vector.broadcast %cst_65 : f32 to vector<16x1xf32>
    %192 = arith.divf %190, %191 : vector<16x1xf32>
    %193 = vector.broadcast %192 : vector<16x1xf32> to vector<16x32xf32>
    %194 = arith.subf %188, %193 : vector<16x32xf32>
    %195 = arith.mulf %194, %194 : vector<16x32xf32>
    %cst_66 = arith.constant dense<0.000000e+00> : vector<16xf32>
    %196 = vector.multi_reduction <add>, %195, %cst_66 [1] : vector<16x32xf32> to vector<16xf32>
    %197 = vector.shape_cast %196 : vector<16xf32> to vector<16x1xf32>
    %cst_67 = arith.constant 3.200000e+01 : f32
    %198 = vector.broadcast %cst_67 : f32 to vector<16x1xf32>
    %199 = arith.divf %197, %198 : vector<16x1xf32>
    %200 = vector.broadcast %192 : vector<16x1xf32> to vector<16x32xf32>
    %201 = arith.subf %188, %200 : vector<16x32xf32>
    %cst_68 = arith.constant 9.99999974E-6 : f32
    %202 = vector.broadcast %cst_68 : f32 to vector<16x1xf32>
    %203 = arith.addf %199, %202 : vector<16x1xf32>
    %204 = math.rsqrt %203 : vector<16x1xf32>
    %205 = vector.broadcast %204 : vector<16x1xf32> to vector<16x32xf32>
    %206 = arith.mulf %201, %205 : vector<16x32xf32>
    %c664 = arith.constant 664 : index
    %c0_69 = arith.constant 0 : index
    %207 = vector.load %arg1[%c664, %c0_69] : memref<1624x32xf32, #tpu.memory_space<vmem>>, vector<1x32xf32>
    %208 = vector.broadcast %207 : vector<1x32xf32> to vector<16x32xf32>
    %209 = arith.mulf %206, %208 : vector<16x32xf32>
    %c672 = arith.constant 672 : index
    %c0_70 = arith.constant 0 : index
    %210 = vector.load %arg1[%c672, %c0_70] : memref<1624x32xf32, #tpu.memory_space<vmem>>, vector<1x32xf32>
    %211 = vector.broadcast %210 : vector<1x32xf32> to vector<16x32xf32>
    %212 = arith.addf %209, %211 : vector<16x32xf32>
    %c584 = arith.constant 584 : index
    %c0_71 = arith.constant 0 : index
    %213 = vector.load %arg1[%c584, %c0_71] : memref<1624x32xf32, #tpu.memory_space<vmem>>, vector<32x32xf32>
    %cst_72 = arith.constant dense<0.000000e+00> : vector<16x32xf32>
    %214 = tpu.matmul %212, %213, %cst_72 {dimension_numbers = #tpu.dot_dimension_numbers<[1], [0], [0], [1], [0, 0, 1, 1], [], []>} : vector<16x32xf32>, vector<32x32xf32>, vector<16x32xf32> -> vector<16x32xf32>
    %c616 = arith.constant 616 : index
    %c0_73 = arith.constant 0 : index
    %215 = vector.load %arg1[%c616, %c0_73] : memref<1624x32xf32, #tpu.memory_space<vmem>>, vector<1x32xf32>
    %216 = vector.broadcast %215 : vector<1x32xf32> to vector<16x32xf32>
    %217 = arith.addf %214, %216 : vector<16x32xf32>
    %cst_74 = arith.constant 0.000000e+00 : f32
    %218 = vector.broadcast %cst_74 : f32 to vector<16x32xf32>
    %219 = arith.maximumf %217, %218 : vector<16x32xf32>
    %c624 = arith.constant 624 : index
    %c0_75 = arith.constant 0 : index
    %220 = vector.load %arg1[%c624, %c0_75] : memref<1624x32xf32, #tpu.memory_space<vmem>>, vector<32x32xf32>
    %cst_76 = arith.constant dense<0.000000e+00> : vector<16x32xf32>
    %221 = tpu.matmul %219, %220, %cst_76 {dimension_numbers = #tpu.dot_dimension_numbers<[1], [0], [0], [1], [0, 0, 1, 1], [], []>} : vector<16x32xf32>, vector<32x32xf32>, vector<16x32xf32> -> vector<16x32xf32>
    %c656 = arith.constant 656 : index
    %c0_77 = arith.constant 0 : index
    %222 = vector.load %arg1[%c656, %c0_77] : memref<1624x32xf32, #tpu.memory_space<vmem>>, vector<1x32xf32>
    %223 = vector.broadcast %222 : vector<1x32xf32> to vector<16x32xf32>
    %224 = arith.addf %221, %223 : vector<16x32xf32>
    %225 = arith.addf %212, %224 : vector<16x32xf32>
    %cst_78 = arith.constant dense<0.000000e+00> : vector<16xf32>
    %226 = vector.multi_reduction <add>, %225, %cst_78 [1] : vector<16x32xf32> to vector<16xf32>
    %227 = vector.shape_cast %226 : vector<16xf32> to vector<16x1xf32>
    %cst_79 = arith.constant 3.200000e+01 : f32
    %228 = vector.broadcast %cst_79 : f32 to vector<16x1xf32>
    %229 = arith.divf %227, %228 : vector<16x1xf32>
    %230 = vector.broadcast %229 : vector<16x1xf32> to vector<16x32xf32>
    %231 = arith.subf %225, %230 : vector<16x32xf32>
    %232 = arith.mulf %231, %231 : vector<16x32xf32>
    %cst_80 = arith.constant dense<0.000000e+00> : vector<16xf32>
    %233 = vector.multi_reduction <add>, %232, %cst_80 [1] : vector<16x32xf32> to vector<16xf32>
    %234 = vector.shape_cast %233 : vector<16xf32> to vector<16x1xf32>
    %cst_81 = arith.constant 3.200000e+01 : f32
    %235 = vector.broadcast %cst_81 : f32 to vector<16x1xf32>
    %236 = arith.divf %234, %235 : vector<16x1xf32>
    %237 = vector.broadcast %229 : vector<16x1xf32> to vector<16x32xf32>
    %238 = arith.subf %225, %237 : vector<16x32xf32>
    %cst_82 = arith.constant 9.99999974E-6 : f32
    %239 = vector.broadcast %cst_82 : f32 to vector<16x1xf32>
    %240 = arith.addf %236, %239 : vector<16x1xf32>
    %241 = math.rsqrt %240 : vector<16x1xf32>
    %242 = vector.broadcast %241 : vector<16x1xf32> to vector<16x32xf32>
    %243 = arith.mulf %238, %242 : vector<16x32xf32>
    %c680 = arith.constant 680 : index
    %c0_83 = arith.constant 0 : index
    %244 = vector.load %arg1[%c680, %c0_83] : memref<1624x32xf32, #tpu.memory_space<vmem>>, vector<1x32xf32>
    %245 = vector.broadcast %244 : vector<1x32xf32> to vector<16x32xf32>
    %246 = arith.mulf %243, %245 : vector<16x32xf32>
    %c688 = arith.constant 688 : index
    %c0_84 = arith.constant 0 : index
    %247 = vector.load %arg1[%c688, %c0_84] : memref<1624x32xf32, #tpu.memory_space<vmem>>, vector<1x32xf32>
    %248 = vector.broadcast %247 : vector<1x32xf32> to vector<16x32xf32>
    %249 = arith.addf %246, %248 : vector<16x32xf32>
    %cst_85 = arith.constant dense<0.000000e+00> : vector<16xf32>
    %250 = vector.multi_reduction <add>, %249, %cst_85 [1] : vector<16x32xf32> to vector<16xf32>
    %251 = vector.shape_cast %250 : vector<16xf32> to vector<16x1xf32>
    %cst_86 = arith.constant 3.200000e+01 : f32
    %252 = vector.broadcast %cst_86 : f32 to vector<16x1xf32>
    %253 = arith.divf %251, %252 : vector<16x1xf32>
    %254 = vector.broadcast %253 : vector<16x1xf32> to vector<16x32xf32>
    %255 = arith.subf %249, %254 : vector<16x32xf32>
    %256 = arith.mulf %255, %255 : vector<16x32xf32>
    %cst_87 = arith.constant dense<0.000000e+00> : vector<16xf32>
    %257 = vector.multi_reduction <add>, %256, %cst_87 [1] : vector<16x32xf32> to vector<16xf32>
    %258 = vector.shape_cast %257 : vector<16xf32> to vector<16x1xf32>
    %cst_88 = arith.constant 3.200000e+01 : f32
    %259 = vector.broadcast %cst_88 : f32 to vector<16x1xf32>
    %260 = arith.divf %258, %259 : vector<16x1xf32>
    %261 = vector.broadcast %253 : vector<16x1xf32> to vector<16x32xf32>
    %262 = arith.subf %249, %261 : vector<16x32xf32>
    %cst_89 = arith.constant 9.99999974E-6 : f32
    %263 = vector.broadcast %cst_89 : f32 to vector<16x1xf32>
    %264 = arith.addf %260, %263 : vector<16x1xf32>
    %265 = math.rsqrt %264 : vector<16x1xf32>
    %266 = vector.broadcast %265 : vector<16x1xf32> to vector<16x32xf32>
    %267 = arith.mulf %262, %266 : vector<16x32xf32>
    %c696 = arith.constant 696 : index
    %c0_90 = arith.constant 0 : index
    %268 = vector.load %arg1[%c696, %c0_90] : memref<1624x32xf32, #tpu.memory_space<vmem>>, vector<1x32xf32>
    %269 = vector.broadcast %268 : vector<1x32xf32> to vector<16x32xf32>
    %270 = arith.mulf %267, %269 : vector<16x32xf32>
    %c704 = arith.constant 704 : index
    %c0_91 = arith.constant 0 : index
    %271 = vector.load %arg1[%c704, %c0_91] : memref<1624x32xf32, #tpu.memory_space<vmem>>, vector<1x32xf32>
    %272 = vector.broadcast %271 : vector<1x32xf32> to vector<16x32xf32>
    %273 = arith.addf %270, %272 : vector<16x32xf32>
    %c712 = arith.constant 712 : index
    %c0_92 = arith.constant 0 : index
    %274 = vector.load %arg1[%c712, %c0_92] : memref<1624x32xf32, #tpu.memory_space<vmem>>, vector<32x32xf32>
    %cst_93 = arith.constant dense<0.000000e+00> : vector<16x32xf32>
    %275 = tpu.matmul %7, %274, %cst_93 {dimension_numbers = #tpu.dot_dimension_numbers<[1], [0], [0], [1], [0, 0, 1, 1], [], []>} : vector<16x32xf32>, vector<32x32xf32>, vector<16x32xf32> -> vector<16x32xf32>
    %c744 = arith.constant 744 : index
    %c0_94 = arith.constant 0 : index
    %276 = vector.load %arg1[%c744, %c0_94] : memref<1624x32xf32, #tpu.memory_space<vmem>>, vector<1x32xf32>
    %277 = vector.broadcast %276 : vector<1x32xf32> to vector<16x32xf32>
    %278 = arith.addf %275, %277 : vector<16x32xf32>
    %cst_95 = arith.constant 0.353553385 : f32
    %279 = vector.broadcast %cst_95 : f32 to vector<16x32xf32>
    %280 = arith.mulf %278, %279 : vector<16x32xf32>
    %c752 = arith.constant 752 : index
    %c0_96 = arith.constant 0 : index
    %281 = vector.load %arg1[%c752, %c0_96] : memref<1624x32xf32, #tpu.memory_space<vmem>>, vector<32x32xf32>
    %cst_97 = arith.constant dense<0.000000e+00> : vector<16x32xf32>
    %282 = tpu.matmul %7, %281, %cst_97 {dimension_numbers = #tpu.dot_dimension_numbers<[1], [0], [0], [1], [0, 0, 1, 1], [], []>} : vector<16x32xf32>, vector<32x32xf32>, vector<16x32xf32> -> vector<16x32xf32>
    %c784 = arith.constant 784 : index
    %c0_98 = arith.constant 0 : index
    %283 = vector.load %arg1[%c784, %c0_98] : memref<1624x32xf32, #tpu.memory_space<vmem>>, vector<1x32xf32>
    %284 = vector.broadcast %283 : vector<1x32xf32> to vector<16x32xf32>
    %285 = arith.addf %282, %284 : vector<16x32xf32>
    %c792 = arith.constant 792 : index
    %c0_99 = arith.constant 0 : index
    %286 = vector.load %arg1[%c792, %c0_99] : memref<1624x32xf32, #tpu.memory_space<vmem>>, vector<32x32xf32>
    %cst_100 = arith.constant dense<0.000000e+00> : vector<16x32xf32>
    %287 = tpu.matmul %7, %286, %cst_100 {dimension_numbers = #tpu.dot_dimension_numbers<[1], [0], [0], [1], [0, 0, 1, 1], [], []>} : vector<16x32xf32>, vector<32x32xf32>, vector<16x32xf32> -> vector<16x32xf32>
    %c824 = arith.constant 824 : index
    %c0_101 = arith.constant 0 : index
    %288 = vector.load %arg1[%c824, %c0_101] : memref<1624x32xf32, #tpu.memory_space<vmem>>, vector<1x32xf32>
    %289 = vector.broadcast %288 : vector<1x32xf32> to vector<16x32xf32>
    %290 = arith.addf %287, %289 : vector<16x32xf32>
    %291 = vector.extract_strided_slice %280 {offsets = [0, 0], sizes = [8, 32], strides = [1, 1]} : vector<16x32xf32> to vector<8x32xf32>
    %292 = vector.extract_strided_slice %280 {offsets = [0, 0], sizes = [8, 32], strides = [1, 1]} : vector<16x32xf32> to vector<8x32xf32>
    %293 = vector.extract_strided_slice %280 {offsets = [8, 0], sizes = [8, 32], strides = [1, 1]} : vector<16x32xf32> to vector<8x32xf32>
    %294 = vector.extract_strided_slice %280 {offsets = [8, 0], sizes = [8, 32], strides = [1, 1]} : vector<16x32xf32> to vector<8x32xf32>
    %295 = tpu.concatenate %291, %292, %293, %294 in 0 : vector<8x32xf32>, vector<8x32xf32>, vector<8x32xf32>, vector<8x32xf32> -> vector<32x32xf32>
    %296 = tpu.concatenate %285, %285 in 0 : vector<16x32xf32>, vector<16x32xf32> -> vector<32x32xf32>
    %297 = tpu.concatenate %290, %290 in 0 : vector<16x32xf32>, vector<16x32xf32> -> vector<32x32xf32>
    %298 = arith.mulf %295, %296 : vector<32x32xf32>
    %cst_102 = arith.constant dense<0.000000e+00> : vector<32x32xf32>
    %299 = tpu.matmul %298, %0, %cst_102 {dimension_numbers = #tpu.dot_dimension_numbers<[1], [0], [0], [1], [0, 0, 1, 1], [], []>} : vector<32x32xf32>, vector<32x32xf32>, vector<32x32xf32> -> vector<32x32xf32>
    %300 = vector.extract_strided_slice %299 {offsets = [0, 0], sizes = [8, 32], strides = [1, 1]} : vector<32x32xf32> to vector<8x32xf32>
    %301 = vector.extract_strided_slice %299 {offsets = [8, 0], sizes = [8, 32], strides = [1, 1]} : vector<32x32xf32> to vector<8x32xf32>
    %302 = arith.maximumf %300, %301 : vector<8x32xf32>
    %303 = arith.subf %300, %302 : vector<8x32xf32>
    %304 = math.exp %303 : vector<8x32xf32>
    %305 = arith.subf %301, %302 : vector<8x32xf32>
    %306 = math.exp %305 : vector<8x32xf32>
    %307 = arith.addf %304, %306 : vector<8x32xf32>
    %cst_103 = arith.constant 1.000000e+00 : f32
    %308 = vector.broadcast %cst_103 : f32 to vector<8x32xf32>
    %309 = arith.divf %308, %307 : vector<8x32xf32>
    %310 = arith.mulf %304, %309 : vector<8x32xf32>
    %311 = arith.mulf %306, %309 : vector<8x32xf32>
    %312 = vector.extract_strided_slice %299 {offsets = [16, 0], sizes = [8, 32], strides = [1, 1]} : vector<32x32xf32> to vector<8x32xf32>
    %313 = vector.extract_strided_slice %299 {offsets = [24, 0], sizes = [8, 32], strides = [1, 1]} : vector<32x32xf32> to vector<8x32xf32>
    %314 = arith.maximumf %312, %313 : vector<8x32xf32>
    %315 = arith.subf %312, %314 : vector<8x32xf32>
    %316 = math.exp %315 : vector<8x32xf32>
    %317 = arith.subf %313, %314 : vector<8x32xf32>
    %318 = math.exp %317 : vector<8x32xf32>
    %319 = arith.addf %316, %318 : vector<8x32xf32>
    %cst_104 = arith.constant 1.000000e+00 : f32
    %320 = vector.broadcast %cst_104 : f32 to vector<8x32xf32>
    %321 = arith.divf %320, %319 : vector<8x32xf32>
    %322 = arith.mulf %316, %321 : vector<8x32xf32>
    %323 = arith.mulf %318, %321 : vector<8x32xf32>
    %324 = tpu.concatenate %310, %311, %322, %323 in 0 : vector<8x32xf32>, vector<8x32xf32>, vector<8x32xf32>, vector<8x32xf32> -> vector<32x32xf32>
    %cst_105 = arith.constant dense<0.000000e+00> : vector<32x32xf32>
    %325 = tpu.matmul %324, %1, %cst_105 {dimension_numbers = #tpu.dot_dimension_numbers<[1], [0], [0], [1], [0, 0, 1, 1], [], []>} : vector<32x32xf32>, vector<32x32xf32>, vector<32x32xf32> -> vector<32x32xf32>
    %326 = arith.mulf %325, %297 : vector<32x32xf32>
    %cst_106 = arith.constant dense<0.000000e+00> : vector<16x32xf32>
    %327 = tpu.matmul %2, %326, %cst_106 {dimension_numbers = #tpu.dot_dimension_numbers<[1], [0], [0], [1], [0, 0, 1, 1], [], []>} : vector<16x32xf32>, vector<32x32xf32>, vector<16x32xf32> -> vector<16x32xf32>
    %c832 = arith.constant 832 : index
    %c0_107 = arith.constant 0 : index
    %328 = vector.load %arg1[%c832, %c0_107] : memref<1624x32xf32, #tpu.memory_space<vmem>>, vector<32x32xf32>
    %cst_108 = arith.constant dense<0.000000e+00> : vector<16x32xf32>
    %329 = tpu.matmul %327, %328, %cst_108 {dimension_numbers = #tpu.dot_dimension_numbers<[1], [0], [0], [1], [0, 0, 1, 1], [], []>} : vector<16x32xf32>, vector<32x32xf32>, vector<16x32xf32> -> vector<16x32xf32>
    %c864 = arith.constant 864 : index
    %c0_109 = arith.constant 0 : index
    %330 = vector.load %arg1[%c864, %c0_109] : memref<1624x32xf32, #tpu.memory_space<vmem>>, vector<1x32xf32>
    %331 = vector.broadcast %330 : vector<1x32xf32> to vector<16x32xf32>
    %332 = arith.addf %329, %331 : vector<16x32xf32>
    %333 = arith.addf %7, %332 : vector<16x32xf32>
    %cst_110 = arith.constant dense<0.000000e+00> : vector<16xf32>
    %334 = vector.multi_reduction <add>, %333, %cst_110 [1] : vector<16x32xf32> to vector<16xf32>
    %335 = vector.shape_cast %334 : vector<16xf32> to vector<16x1xf32>
    %cst_111 = arith.constant 3.200000e+01 : f32
    %336 = vector.broadcast %cst_111 : f32 to vector<16x1xf32>
    %337 = arith.divf %335, %336 : vector<16x1xf32>
    %338 = vector.broadcast %337 : vector<16x1xf32> to vector<16x32xf32>
    %339 = arith.subf %333, %338 : vector<16x32xf32>
    %340 = arith.mulf %339, %339 : vector<16x32xf32>
    %cst_112 = arith.constant dense<0.000000e+00> : vector<16xf32>
    %341 = vector.multi_reduction <add>, %340, %cst_112 [1] : vector<16x32xf32> to vector<16xf32>
    %342 = vector.shape_cast %341 : vector<16xf32> to vector<16x1xf32>
    %cst_113 = arith.constant 3.200000e+01 : f32
    %343 = vector.broadcast %cst_113 : f32 to vector<16x1xf32>
    %344 = arith.divf %342, %343 : vector<16x1xf32>
    %345 = vector.broadcast %337 : vector<16x1xf32> to vector<16x32xf32>
    %346 = arith.subf %333, %345 : vector<16x32xf32>
    %cst_114 = arith.constant 9.99999974E-6 : f32
    %347 = vector.broadcast %cst_114 : f32 to vector<16x1xf32>
    %348 = arith.addf %344, %347 : vector<16x1xf32>
    %349 = math.rsqrt %348 : vector<16x1xf32>
    %350 = vector.broadcast %349 : vector<16x1xf32> to vector<16x32xf32>
    %351 = arith.mulf %346, %350 : vector<16x32xf32>
    %c1112 = arith.constant 1112 : index
    %c0_115 = arith.constant 0 : index
    %352 = vector.load %arg1[%c1112, %c0_115] : memref<1624x32xf32, #tpu.memory_space<vmem>>, vector<1x32xf32>
    %353 = vector.broadcast %352 : vector<1x32xf32> to vector<16x32xf32>
    %354 = arith.mulf %351, %353 : vector<16x32xf32>
    %c1120 = arith.constant 1120 : index
    %c0_116 = arith.constant 0 : index
    %355 = vector.load %arg1[%c1120, %c0_116] : memref<1624x32xf32, #tpu.memory_space<vmem>>, vector<1x32xf32>
    %356 = vector.broadcast %355 : vector<1x32xf32> to vector<16x32xf32>
    %357 = arith.addf %354, %356 : vector<16x32xf32>
    %c872 = arith.constant 872 : index
    %c0_117 = arith.constant 0 : index
    %358 = vector.load %arg1[%c872, %c0_117] : memref<1624x32xf32, #tpu.memory_space<vmem>>, vector<32x32xf32>
    %cst_118 = arith.constant dense<0.000000e+00> : vector<16x32xf32>
    %359 = tpu.matmul %357, %358, %cst_118 {dimension_numbers = #tpu.dot_dimension_numbers<[1], [0], [0], [1], [0, 0, 1, 1], [], []>} : vector<16x32xf32>, vector<32x32xf32>, vector<16x32xf32> -> vector<16x32xf32>
    %c904 = arith.constant 904 : index
    %c0_119 = arith.constant 0 : index
    %360 = vector.load %arg1[%c904, %c0_119] : memref<1624x32xf32, #tpu.memory_space<vmem>>, vector<1x32xf32>
    %361 = vector.broadcast %360 : vector<1x32xf32> to vector<16x32xf32>
    %362 = arith.addf %359, %361 : vector<16x32xf32>
    %cst_120 = arith.constant 0.353553385 : f32
    %363 = vector.broadcast %cst_120 : f32 to vector<16x32xf32>
    %364 = arith.mulf %362, %363 : vector<16x32xf32>
    %c912 = arith.constant 912 : index
    %c0_121 = arith.constant 0 : index
    %365 = vector.load %arg1[%c912, %c0_121] : memref<1624x32xf32, #tpu.memory_space<vmem>>, vector<32x32xf32>
    %cst_122 = arith.constant dense<0.000000e+00> : vector<16x32xf32>
    %366 = tpu.matmul %273, %365, %cst_122 {dimension_numbers = #tpu.dot_dimension_numbers<[1], [0], [0], [1], [0, 0, 1, 1], [], []>} : vector<16x32xf32>, vector<32x32xf32>, vector<16x32xf32> -> vector<16x32xf32>
    %c944 = arith.constant 944 : index
    %c0_123 = arith.constant 0 : index
    %367 = vector.load %arg1[%c944, %c0_123] : memref<1624x32xf32, #tpu.memory_space<vmem>>, vector<1x32xf32>
    %368 = vector.broadcast %367 : vector<1x32xf32> to vector<16x32xf32>
    %369 = arith.addf %366, %368 : vector<16x32xf32>
    %c952 = arith.constant 952 : index
    %c0_124 = arith.constant 0 : index
    %370 = vector.load %arg1[%c952, %c0_124] : memref<1624x32xf32, #tpu.memory_space<vmem>>, vector<32x32xf32>
    %cst_125 = arith.constant dense<0.000000e+00> : vector<16x32xf32>
    %371 = tpu.matmul %273, %370, %cst_125 {dimension_numbers = #tpu.dot_dimension_numbers<[1], [0], [0], [1], [0, 0, 1, 1], [], []>} : vector<16x32xf32>, vector<32x32xf32>, vector<16x32xf32> -> vector<16x32xf32>
    %c984 = arith.constant 984 : index
    %c0_126 = arith.constant 0 : index
    %372 = vector.load %arg1[%c984, %c0_126] : memref<1624x32xf32, #tpu.memory_space<vmem>>, vector<1x32xf32>
    %373 = vector.broadcast %372 : vector<1x32xf32> to vector<16x32xf32>
    %374 = arith.addf %371, %373 : vector<16x32xf32>
    %375 = vector.extract_strided_slice %364 {offsets = [0, 0], sizes = [8, 32], strides = [1, 1]} : vector<16x32xf32> to vector<8x32xf32>
    %376 = vector.extract_strided_slice %364 {offsets = [0, 0], sizes = [8, 32], strides = [1, 1]} : vector<16x32xf32> to vector<8x32xf32>
    %377 = vector.extract_strided_slice %364 {offsets = [8, 0], sizes = [8, 32], strides = [1, 1]} : vector<16x32xf32> to vector<8x32xf32>
    %378 = vector.extract_strided_slice %364 {offsets = [8, 0], sizes = [8, 32], strides = [1, 1]} : vector<16x32xf32> to vector<8x32xf32>
    %379 = tpu.concatenate %375, %376, %377, %378 in 0 : vector<8x32xf32>, vector<8x32xf32>, vector<8x32xf32>, vector<8x32xf32> -> vector<32x32xf32>
    %380 = tpu.concatenate %369, %369 in 0 : vector<16x32xf32>, vector<16x32xf32> -> vector<32x32xf32>
    %381 = tpu.concatenate %374, %374 in 0 : vector<16x32xf32>, vector<16x32xf32> -> vector<32x32xf32>
    %382 = arith.mulf %379, %380 : vector<32x32xf32>
    %cst_127 = arith.constant dense<0.000000e+00> : vector<32x32xf32>
    %383 = tpu.matmul %382, %0, %cst_127 {dimension_numbers = #tpu.dot_dimension_numbers<[1], [0], [0], [1], [0, 0, 1, 1], [], []>} : vector<32x32xf32>, vector<32x32xf32>, vector<32x32xf32> -> vector<32x32xf32>
    %384 = vector.extract_strided_slice %383 {offsets = [0, 0], sizes = [8, 32], strides = [1, 1]} : vector<32x32xf32> to vector<8x32xf32>
    %385 = vector.extract_strided_slice %383 {offsets = [8, 0], sizes = [8, 32], strides = [1, 1]} : vector<32x32xf32> to vector<8x32xf32>
    %386 = arith.maximumf %384, %385 : vector<8x32xf32>
    %387 = arith.subf %384, %386 : vector<8x32xf32>
    %388 = math.exp %387 : vector<8x32xf32>
    %389 = arith.subf %385, %386 : vector<8x32xf32>
    %390 = math.exp %389 : vector<8x32xf32>
    %391 = arith.addf %388, %390 : vector<8x32xf32>
    %cst_128 = arith.constant 1.000000e+00 : f32
    %392 = vector.broadcast %cst_128 : f32 to vector<8x32xf32>
    %393 = arith.divf %392, %391 : vector<8x32xf32>
    %394 = arith.mulf %388, %393 : vector<8x32xf32>
    %395 = arith.mulf %390, %393 : vector<8x32xf32>
    %396 = vector.extract_strided_slice %383 {offsets = [16, 0], sizes = [8, 32], strides = [1, 1]} : vector<32x32xf32> to vector<8x32xf32>
    %397 = vector.extract_strided_slice %383 {offsets = [24, 0], sizes = [8, 32], strides = [1, 1]} : vector<32x32xf32> to vector<8x32xf32>
    %398 = arith.maximumf %396, %397 : vector<8x32xf32>
    %399 = arith.subf %396, %398 : vector<8x32xf32>
    %400 = math.exp %399 : vector<8x32xf32>
    %401 = arith.subf %397, %398 : vector<8x32xf32>
    %402 = math.exp %401 : vector<8x32xf32>
    %403 = arith.addf %400, %402 : vector<8x32xf32>
    %cst_129 = arith.constant 1.000000e+00 : f32
    %404 = vector.broadcast %cst_129 : f32 to vector<8x32xf32>
    %405 = arith.divf %404, %403 : vector<8x32xf32>
    %406 = arith.mulf %400, %405 : vector<8x32xf32>
    %407 = arith.mulf %402, %405 : vector<8x32xf32>
    %408 = tpu.concatenate %394, %395, %406, %407 in 0 : vector<8x32xf32>, vector<8x32xf32>, vector<8x32xf32>, vector<8x32xf32> -> vector<32x32xf32>
    %cst_130 = arith.constant dense<0.000000e+00> : vector<32x32xf32>
    %409 = tpu.matmul %408, %1, %cst_130 {dimension_numbers = #tpu.dot_dimension_numbers<[1], [0], [0], [1], [0, 0, 1, 1], [], []>} : vector<32x32xf32>, vector<32x32xf32>, vector<32x32xf32> -> vector<32x32xf32>
    %410 = arith.mulf %409, %381 : vector<32x32xf32>
    %cst_131 = arith.constant dense<0.000000e+00> : vector<16x32xf32>
    %411 = tpu.matmul %2, %410, %cst_131 {dimension_numbers = #tpu.dot_dimension_numbers<[1], [0], [0], [1], [0, 0, 1, 1], [], []>} : vector<16x32xf32>, vector<32x32xf32>, vector<16x32xf32> -> vector<16x32xf32>
    %c992 = arith.constant 992 : index
    %c0_132 = arith.constant 0 : index
    %412 = vector.load %arg1[%c992, %c0_132] : memref<1624x32xf32, #tpu.memory_space<vmem>>, vector<32x32xf32>
    %cst_133 = arith.constant dense<0.000000e+00> : vector<16x32xf32>
    %413 = tpu.matmul %411, %412, %cst_133 {dimension_numbers = #tpu.dot_dimension_numbers<[1], [0], [0], [1], [0, 0, 1, 1], [], []>} : vector<16x32xf32>, vector<32x32xf32>, vector<16x32xf32> -> vector<16x32xf32>
    %c1024 = arith.constant 1024 : index
    %c0_134 = arith.constant 0 : index
    %414 = vector.load %arg1[%c1024, %c0_134] : memref<1624x32xf32, #tpu.memory_space<vmem>>, vector<1x32xf32>
    %415 = vector.broadcast %414 : vector<1x32xf32> to vector<16x32xf32>
    %416 = arith.addf %413, %415 : vector<16x32xf32>
    %417 = arith.addf %357, %416 : vector<16x32xf32>
    %cst_135 = arith.constant dense<0.000000e+00> : vector<16xf32>
    %418 = vector.multi_reduction <add>, %417, %cst_135 [1] : vector<16x32xf32> to vector<16xf32>
    %419 = vector.shape_cast %418 : vector<16xf32> to vector<16x1xf32>
    %cst_136 = arith.constant 3.200000e+01 : f32
    %420 = vector.broadcast %cst_136 : f32 to vector<16x1xf32>
    %421 = arith.divf %419, %420 : vector<16x1xf32>
    %422 = vector.broadcast %421 : vector<16x1xf32> to vector<16x32xf32>
    %423 = arith.subf %417, %422 : vector<16x32xf32>
    %424 = arith.mulf %423, %423 : vector<16x32xf32>
    %cst_137 = arith.constant dense<0.000000e+00> : vector<16xf32>
    %425 = vector.multi_reduction <add>, %424, %cst_137 [1] : vector<16x32xf32> to vector<16xf32>
    %426 = vector.shape_cast %425 : vector<16xf32> to vector<16x1xf32>
    %cst_138 = arith.constant 3.200000e+01 : f32
    %427 = vector.broadcast %cst_138 : f32 to vector<16x1xf32>
    %428 = arith.divf %426, %427 : vector<16x1xf32>
    %429 = vector.broadcast %421 : vector<16x1xf32> to vector<16x32xf32>
    %430 = arith.subf %417, %429 : vector<16x32xf32>
    %cst_139 = arith.constant 9.99999974E-6 : f32
    %431 = vector.broadcast %cst_139 : f32 to vector<16x1xf32>
    %432 = arith.addf %428, %431 : vector<16x1xf32>
    %433 = math.rsqrt %432 : vector<16x1xf32>
    %434 = vector.broadcast %433 : vector<16x1xf32> to vector<16x32xf32>
    %435 = arith.mulf %430, %434 : vector<16x32xf32>
    %c1128 = arith.constant 1128 : index
    %c0_140 = arith.constant 0 : index
    %436 = vector.load %arg1[%c1128, %c0_140] : memref<1624x32xf32, #tpu.memory_space<vmem>>, vector<1x32xf32>
    %437 = vector.broadcast %436 : vector<1x32xf32> to vector<16x32xf32>
    %438 = arith.mulf %435, %437 : vector<16x32xf32>
    %c1136 = arith.constant 1136 : index
    %c0_141 = arith.constant 0 : index
    %439 = vector.load %arg1[%c1136, %c0_141] : memref<1624x32xf32, #tpu.memory_space<vmem>>, vector<1x32xf32>
    %440 = vector.broadcast %439 : vector<1x32xf32> to vector<16x32xf32>
    %441 = arith.addf %438, %440 : vector<16x32xf32>
    %c1032 = arith.constant 1032 : index
    %c0_142 = arith.constant 0 : index
    %442 = vector.load %arg1[%c1032, %c0_142] : memref<1624x32xf32, #tpu.memory_space<vmem>>, vector<32x32xf32>
    %cst_143 = arith.constant dense<0.000000e+00> : vector<16x32xf32>
    %443 = tpu.matmul %441, %442, %cst_143 {dimension_numbers = #tpu.dot_dimension_numbers<[1], [0], [0], [1], [0, 0, 1, 1], [], []>} : vector<16x32xf32>, vector<32x32xf32>, vector<16x32xf32> -> vector<16x32xf32>
    %c1064 = arith.constant 1064 : index
    %c0_144 = arith.constant 0 : index
    %444 = vector.load %arg1[%c1064, %c0_144] : memref<1624x32xf32, #tpu.memory_space<vmem>>, vector<1x32xf32>
    %445 = vector.broadcast %444 : vector<1x32xf32> to vector<16x32xf32>
    %446 = arith.addf %443, %445 : vector<16x32xf32>
    %cst_145 = arith.constant 0.000000e+00 : f32
    %447 = vector.broadcast %cst_145 : f32 to vector<16x32xf32>
    %448 = arith.maximumf %446, %447 : vector<16x32xf32>
    %c1072 = arith.constant 1072 : index
    %c0_146 = arith.constant 0 : index
    %449 = vector.load %arg1[%c1072, %c0_146] : memref<1624x32xf32, #tpu.memory_space<vmem>>, vector<32x32xf32>
    %cst_147 = arith.constant dense<0.000000e+00> : vector<16x32xf32>
    %450 = tpu.matmul %448, %449, %cst_147 {dimension_numbers = #tpu.dot_dimension_numbers<[1], [0], [0], [1], [0, 0, 1, 1], [], []>} : vector<16x32xf32>, vector<32x32xf32>, vector<16x32xf32> -> vector<16x32xf32>
    %c1104 = arith.constant 1104 : index
    %c0_148 = arith.constant 0 : index
    %451 = vector.load %arg1[%c1104, %c0_148] : memref<1624x32xf32, #tpu.memory_space<vmem>>, vector<1x32xf32>
    %452 = vector.broadcast %451 : vector<1x32xf32> to vector<16x32xf32>
    %453 = arith.addf %450, %452 : vector<16x32xf32>
    %454 = arith.addf %441, %453 : vector<16x32xf32>
    %cst_149 = arith.constant dense<0.000000e+00> : vector<16xf32>
    %455 = vector.multi_reduction <add>, %454, %cst_149 [1] : vector<16x32xf32> to vector<16xf32>
    %456 = vector.shape_cast %455 : vector<16xf32> to vector<16x1xf32>
    %cst_150 = arith.constant 3.200000e+01 : f32
    %457 = vector.broadcast %cst_150 : f32 to vector<16x1xf32>
    %458 = arith.divf %456, %457 : vector<16x1xf32>
    %459 = vector.broadcast %458 : vector<16x1xf32> to vector<16x32xf32>
    %460 = arith.subf %454, %459 : vector<16x32xf32>
    %461 = arith.mulf %460, %460 : vector<16x32xf32>
    %cst_151 = arith.constant dense<0.000000e+00> : vector<16xf32>
    %462 = vector.multi_reduction <add>, %461, %cst_151 [1] : vector<16x32xf32> to vector<16xf32>
    %463 = vector.shape_cast %462 : vector<16xf32> to vector<16x1xf32>
    %cst_152 = arith.constant 3.200000e+01 : f32
    %464 = vector.broadcast %cst_152 : f32 to vector<16x1xf32>
    %465 = arith.divf %463, %464 : vector<16x1xf32>
    %466 = vector.broadcast %458 : vector<16x1xf32> to vector<16x32xf32>
    %467 = arith.subf %454, %466 : vector<16x32xf32>
    %cst_153 = arith.constant 9.99999974E-6 : f32
    %468 = vector.broadcast %cst_153 : f32 to vector<16x1xf32>
    %469 = arith.addf %465, %468 : vector<16x1xf32>
    %470 = math.rsqrt %469 : vector<16x1xf32>
    %471 = vector.broadcast %470 : vector<16x1xf32> to vector<16x32xf32>
    %472 = arith.mulf %467, %471 : vector<16x32xf32>
    %c1144 = arith.constant 1144 : index
    %c0_154 = arith.constant 0 : index
    %473 = vector.load %arg1[%c1144, %c0_154] : memref<1624x32xf32, #tpu.memory_space<vmem>>, vector<1x32xf32>
    %474 = vector.broadcast %473 : vector<1x32xf32> to vector<16x32xf32>
    %475 = arith.mulf %472, %474 : vector<16x32xf32>
    %c1152 = arith.constant 1152 : index
    %c0_155 = arith.constant 0 : index
    %476 = vector.load %arg1[%c1152, %c0_155] : memref<1624x32xf32, #tpu.memory_space<vmem>>, vector<1x32xf32>
    %477 = vector.broadcast %476 : vector<1x32xf32> to vector<16x32xf32>
    %478 = arith.addf %475, %477 : vector<16x32xf32>
    %c1160 = arith.constant 1160 : index
    %c0_156 = arith.constant 0 : index
    %479 = vector.load %arg1[%c1160, %c0_156] : memref<1624x32xf32, #tpu.memory_space<vmem>>, vector<32x32xf32>
    %cst_157 = arith.constant dense<0.000000e+00> : vector<16x32xf32>
    %480 = tpu.matmul %478, %479, %cst_157 {dimension_numbers = #tpu.dot_dimension_numbers<[1], [0], [0], [1], [0, 0, 1, 1], [], []>} : vector<16x32xf32>, vector<32x32xf32>, vector<16x32xf32> -> vector<16x32xf32>
    %c1192 = arith.constant 1192 : index
    %c0_158 = arith.constant 0 : index
    %481 = vector.load %arg1[%c1192, %c0_158] : memref<1624x32xf32, #tpu.memory_space<vmem>>, vector<1x32xf32>
    %482 = vector.broadcast %481 : vector<1x32xf32> to vector<16x32xf32>
    %483 = arith.addf %480, %482 : vector<16x32xf32>
    %cst_159 = arith.constant 0.353553385 : f32
    %484 = vector.broadcast %cst_159 : f32 to vector<16x32xf32>
    %485 = arith.mulf %483, %484 : vector<16x32xf32>
    %c1200 = arith.constant 1200 : index
    %c0_160 = arith.constant 0 : index
    %486 = vector.load %arg1[%c1200, %c0_160] : memref<1624x32xf32, #tpu.memory_space<vmem>>, vector<32x32xf32>
    %cst_161 = arith.constant dense<0.000000e+00> : vector<16x32xf32>
    %487 = tpu.matmul %478, %486, %cst_161 {dimension_numbers = #tpu.dot_dimension_numbers<[1], [0], [0], [1], [0, 0, 1, 1], [], []>} : vector<16x32xf32>, vector<32x32xf32>, vector<16x32xf32> -> vector<16x32xf32>
    %c1232 = arith.constant 1232 : index
    %c0_162 = arith.constant 0 : index
    %488 = vector.load %arg1[%c1232, %c0_162] : memref<1624x32xf32, #tpu.memory_space<vmem>>, vector<1x32xf32>
    %489 = vector.broadcast %488 : vector<1x32xf32> to vector<16x32xf32>
    %490 = arith.addf %487, %489 : vector<16x32xf32>
    %c1240 = arith.constant 1240 : index
    %c0_163 = arith.constant 0 : index
    %491 = vector.load %arg1[%c1240, %c0_163] : memref<1624x32xf32, #tpu.memory_space<vmem>>, vector<32x32xf32>
    %cst_164 = arith.constant dense<0.000000e+00> : vector<16x32xf32>
    %492 = tpu.matmul %478, %491, %cst_164 {dimension_numbers = #tpu.dot_dimension_numbers<[1], [0], [0], [1], [0, 0, 1, 1], [], []>} : vector<16x32xf32>, vector<32x32xf32>, vector<16x32xf32> -> vector<16x32xf32>
    %c1272 = arith.constant 1272 : index
    %c0_165 = arith.constant 0 : index
    %493 = vector.load %arg1[%c1272, %c0_165] : memref<1624x32xf32, #tpu.memory_space<vmem>>, vector<1x32xf32>
    %494 = vector.broadcast %493 : vector<1x32xf32> to vector<16x32xf32>
    %495 = arith.addf %492, %494 : vector<16x32xf32>
    %496 = vector.extract_strided_slice %485 {offsets = [0, 0], sizes = [8, 32], strides = [1, 1]} : vector<16x32xf32> to vector<8x32xf32>
    %497 = vector.extract_strided_slice %485 {offsets = [0, 0], sizes = [8, 32], strides = [1, 1]} : vector<16x32xf32> to vector<8x32xf32>
    %498 = vector.extract_strided_slice %485 {offsets = [8, 0], sizes = [8, 32], strides = [1, 1]} : vector<16x32xf32> to vector<8x32xf32>
    %499 = vector.extract_strided_slice %485 {offsets = [8, 0], sizes = [8, 32], strides = [1, 1]} : vector<16x32xf32> to vector<8x32xf32>
    %500 = tpu.concatenate %496, %497, %498, %499 in 0 : vector<8x32xf32>, vector<8x32xf32>, vector<8x32xf32>, vector<8x32xf32> -> vector<32x32xf32>
    %501 = tpu.concatenate %490, %490 in 0 : vector<16x32xf32>, vector<16x32xf32> -> vector<32x32xf32>
    %502 = tpu.concatenate %495, %495 in 0 : vector<16x32xf32>, vector<16x32xf32> -> vector<32x32xf32>
    %503 = arith.mulf %500, %501 : vector<32x32xf32>
    %cst_166 = arith.constant dense<0.000000e+00> : vector<32x32xf32>
    %504 = tpu.matmul %503, %0, %cst_166 {dimension_numbers = #tpu.dot_dimension_numbers<[1], [0], [0], [1], [0, 0, 1, 1], [], []>} : vector<32x32xf32>, vector<32x32xf32>, vector<32x32xf32> -> vector<32x32xf32>
    %505 = vector.extract_strided_slice %504 {offsets = [0, 0], sizes = [8, 32], strides = [1, 1]} : vector<32x32xf32> to vector<8x32xf32>
    %506 = vector.extract_strided_slice %504 {offsets = [8, 0], sizes = [8, 32], strides = [1, 1]} : vector<32x32xf32> to vector<8x32xf32>
    %507 = arith.maximumf %505, %506 : vector<8x32xf32>
    %508 = arith.subf %505, %507 : vector<8x32xf32>
    %509 = math.exp %508 : vector<8x32xf32>
    %510 = arith.subf %506, %507 : vector<8x32xf32>
    %511 = math.exp %510 : vector<8x32xf32>
    %512 = arith.addf %509, %511 : vector<8x32xf32>
    %cst_167 = arith.constant 1.000000e+00 : f32
    %513 = vector.broadcast %cst_167 : f32 to vector<8x32xf32>
    %514 = arith.divf %513, %512 : vector<8x32xf32>
    %515 = arith.mulf %509, %514 : vector<8x32xf32>
    %516 = arith.mulf %511, %514 : vector<8x32xf32>
    %517 = vector.extract_strided_slice %504 {offsets = [16, 0], sizes = [8, 32], strides = [1, 1]} : vector<32x32xf32> to vector<8x32xf32>
    %518 = vector.extract_strided_slice %504 {offsets = [24, 0], sizes = [8, 32], strides = [1, 1]} : vector<32x32xf32> to vector<8x32xf32>
    %519 = arith.maximumf %517, %518 : vector<8x32xf32>
    %520 = arith.subf %517, %519 : vector<8x32xf32>
    %521 = math.exp %520 : vector<8x32xf32>
    %522 = arith.subf %518, %519 : vector<8x32xf32>
    %523 = math.exp %522 : vector<8x32xf32>
    %524 = arith.addf %521, %523 : vector<8x32xf32>
    %cst_168 = arith.constant 1.000000e+00 : f32
    %525 = vector.broadcast %cst_168 : f32 to vector<8x32xf32>
    %526 = arith.divf %525, %524 : vector<8x32xf32>
    %527 = arith.mulf %521, %526 : vector<8x32xf32>
    %528 = arith.mulf %523, %526 : vector<8x32xf32>
    %529 = tpu.concatenate %515, %516, %527, %528 in 0 : vector<8x32xf32>, vector<8x32xf32>, vector<8x32xf32>, vector<8x32xf32> -> vector<32x32xf32>
    %cst_169 = arith.constant dense<0.000000e+00> : vector<32x32xf32>
    %530 = tpu.matmul %529, %1, %cst_169 {dimension_numbers = #tpu.dot_dimension_numbers<[1], [0], [0], [1], [0, 0, 1, 1], [], []>} : vector<32x32xf32>, vector<32x32xf32>, vector<32x32xf32> -> vector<32x32xf32>
    %531 = arith.mulf %530, %502 : vector<32x32xf32>
    %cst_170 = arith.constant dense<0.000000e+00> : vector<16x32xf32>
    %532 = tpu.matmul %2, %531, %cst_170 {dimension_numbers = #tpu.dot_dimension_numbers<[1], [0], [0], [1], [0, 0, 1, 1], [], []>} : vector<16x32xf32>, vector<32x32xf32>, vector<16x32xf32> -> vector<16x32xf32>
    %c1280 = arith.constant 1280 : index
    %c0_171 = arith.constant 0 : index
    %533 = vector.load %arg1[%c1280, %c0_171] : memref<1624x32xf32, #tpu.memory_space<vmem>>, vector<32x32xf32>
    %cst_172 = arith.constant dense<0.000000e+00> : vector<16x32xf32>
    %534 = tpu.matmul %532, %533, %cst_172 {dimension_numbers = #tpu.dot_dimension_numbers<[1], [0], [0], [1], [0, 0, 1, 1], [], []>} : vector<16x32xf32>, vector<32x32xf32>, vector<16x32xf32> -> vector<16x32xf32>
    %c1312 = arith.constant 1312 : index
    %c0_173 = arith.constant 0 : index
    %535 = vector.load %arg1[%c1312, %c0_173] : memref<1624x32xf32, #tpu.memory_space<vmem>>, vector<1x32xf32>
    %536 = vector.broadcast %535 : vector<1x32xf32> to vector<16x32xf32>
    %537 = arith.addf %534, %536 : vector<16x32xf32>
    %538 = arith.addf %478, %537 : vector<16x32xf32>
    %cst_174 = arith.constant dense<0.000000e+00> : vector<16xf32>
    %539 = vector.multi_reduction <add>, %538, %cst_174 [1] : vector<16x32xf32> to vector<16xf32>
    %540 = vector.shape_cast %539 : vector<16xf32> to vector<16x1xf32>
    %cst_175 = arith.constant 3.200000e+01 : f32
    %541 = vector.broadcast %cst_175 : f32 to vector<16x1xf32>
    %542 = arith.divf %540, %541 : vector<16x1xf32>
    %543 = vector.broadcast %542 : vector<16x1xf32> to vector<16x32xf32>
    %544 = arith.subf %538, %543 : vector<16x32xf32>
    %545 = arith.mulf %544, %544 : vector<16x32xf32>
    %cst_176 = arith.constant dense<0.000000e+00> : vector<16xf32>
    %546 = vector.multi_reduction <add>, %545, %cst_176 [1] : vector<16x32xf32> to vector<16xf32>
    %547 = vector.shape_cast %546 : vector<16xf32> to vector<16x1xf32>
    %cst_177 = arith.constant 3.200000e+01 : f32
    %548 = vector.broadcast %cst_177 : f32 to vector<16x1xf32>
    %549 = arith.divf %547, %548 : vector<16x1xf32>
    %550 = vector.broadcast %542 : vector<16x1xf32> to vector<16x32xf32>
    %551 = arith.subf %538, %550 : vector<16x32xf32>
    %cst_178 = arith.constant 9.99999974E-6 : f32
    %552 = vector.broadcast %cst_178 : f32 to vector<16x1xf32>
    %553 = arith.addf %549, %552 : vector<16x1xf32>
    %554 = math.rsqrt %553 : vector<16x1xf32>
    %555 = vector.broadcast %554 : vector<16x1xf32> to vector<16x32xf32>
    %556 = arith.mulf %551, %555 : vector<16x32xf32>
    %c1560 = arith.constant 1560 : index
    %c0_179 = arith.constant 0 : index
    %557 = vector.load %arg1[%c1560, %c0_179] : memref<1624x32xf32, #tpu.memory_space<vmem>>, vector<1x32xf32>
    %558 = vector.broadcast %557 : vector<1x32xf32> to vector<16x32xf32>
    %559 = arith.mulf %556, %558 : vector<16x32xf32>
    %c1568 = arith.constant 1568 : index
    %c0_180 = arith.constant 0 : index
    %560 = vector.load %arg1[%c1568, %c0_180] : memref<1624x32xf32, #tpu.memory_space<vmem>>, vector<1x32xf32>
    %561 = vector.broadcast %560 : vector<1x32xf32> to vector<16x32xf32>
    %562 = arith.addf %559, %561 : vector<16x32xf32>
    %c1320 = arith.constant 1320 : index
    %c0_181 = arith.constant 0 : index
    %563 = vector.load %arg1[%c1320, %c0_181] : memref<1624x32xf32, #tpu.memory_space<vmem>>, vector<32x32xf32>
    %cst_182 = arith.constant dense<0.000000e+00> : vector<16x32xf32>
    %564 = tpu.matmul %562, %563, %cst_182 {dimension_numbers = #tpu.dot_dimension_numbers<[1], [0], [0], [1], [0, 0, 1, 1], [], []>} : vector<16x32xf32>, vector<32x32xf32>, vector<16x32xf32> -> vector<16x32xf32>
    %c1352 = arith.constant 1352 : index
    %c0_183 = arith.constant 0 : index
    %565 = vector.load %arg1[%c1352, %c0_183] : memref<1624x32xf32, #tpu.memory_space<vmem>>, vector<1x32xf32>
    %566 = vector.broadcast %565 : vector<1x32xf32> to vector<16x32xf32>
    %567 = arith.addf %564, %566 : vector<16x32xf32>
    %cst_184 = arith.constant 0.353553385 : f32
    %568 = vector.broadcast %cst_184 : f32 to vector<16x32xf32>
    %569 = arith.mulf %567, %568 : vector<16x32xf32>
    %c1360 = arith.constant 1360 : index
    %c0_185 = arith.constant 0 : index
    %570 = vector.load %arg1[%c1360, %c0_185] : memref<1624x32xf32, #tpu.memory_space<vmem>>, vector<32x32xf32>
    %cst_186 = arith.constant dense<0.000000e+00> : vector<16x32xf32>
    %571 = tpu.matmul %273, %570, %cst_186 {dimension_numbers = #tpu.dot_dimension_numbers<[1], [0], [0], [1], [0, 0, 1, 1], [], []>} : vector<16x32xf32>, vector<32x32xf32>, vector<16x32xf32> -> vector<16x32xf32>
    %c1392 = arith.constant 1392 : index
    %c0_187 = arith.constant 0 : index
    %572 = vector.load %arg1[%c1392, %c0_187] : memref<1624x32xf32, #tpu.memory_space<vmem>>, vector<1x32xf32>
    %573 = vector.broadcast %572 : vector<1x32xf32> to vector<16x32xf32>
    %574 = arith.addf %571, %573 : vector<16x32xf32>
    %c1400 = arith.constant 1400 : index
    %c0_188 = arith.constant 0 : index
    %575 = vector.load %arg1[%c1400, %c0_188] : memref<1624x32xf32, #tpu.memory_space<vmem>>, vector<32x32xf32>
    %cst_189 = arith.constant dense<0.000000e+00> : vector<16x32xf32>
    %576 = tpu.matmul %273, %575, %cst_189 {dimension_numbers = #tpu.dot_dimension_numbers<[1], [0], [0], [1], [0, 0, 1, 1], [], []>} : vector<16x32xf32>, vector<32x32xf32>, vector<16x32xf32> -> vector<16x32xf32>
    %c1432 = arith.constant 1432 : index
    %c0_190 = arith.constant 0 : index
    %577 = vector.load %arg1[%c1432, %c0_190] : memref<1624x32xf32, #tpu.memory_space<vmem>>, vector<1x32xf32>
    %578 = vector.broadcast %577 : vector<1x32xf32> to vector<16x32xf32>
    %579 = arith.addf %576, %578 : vector<16x32xf32>
    %580 = vector.extract_strided_slice %569 {offsets = [0, 0], sizes = [8, 32], strides = [1, 1]} : vector<16x32xf32> to vector<8x32xf32>
    %581 = vector.extract_strided_slice %569 {offsets = [0, 0], sizes = [8, 32], strides = [1, 1]} : vector<16x32xf32> to vector<8x32xf32>
    %582 = vector.extract_strided_slice %569 {offsets = [8, 0], sizes = [8, 32], strides = [1, 1]} : vector<16x32xf32> to vector<8x32xf32>
    %583 = vector.extract_strided_slice %569 {offsets = [8, 0], sizes = [8, 32], strides = [1, 1]} : vector<16x32xf32> to vector<8x32xf32>
    %584 = tpu.concatenate %580, %581, %582, %583 in 0 : vector<8x32xf32>, vector<8x32xf32>, vector<8x32xf32>, vector<8x32xf32> -> vector<32x32xf32>
    %585 = tpu.concatenate %574, %574 in 0 : vector<16x32xf32>, vector<16x32xf32> -> vector<32x32xf32>
    %586 = tpu.concatenate %579, %579 in 0 : vector<16x32xf32>, vector<16x32xf32> -> vector<32x32xf32>
    %587 = arith.mulf %584, %585 : vector<32x32xf32>
    %cst_191 = arith.constant dense<0.000000e+00> : vector<32x32xf32>
    %588 = tpu.matmul %587, %0, %cst_191 {dimension_numbers = #tpu.dot_dimension_numbers<[1], [0], [0], [1], [0, 0, 1, 1], [], []>} : vector<32x32xf32>, vector<32x32xf32>, vector<32x32xf32> -> vector<32x32xf32>
    %589 = vector.extract_strided_slice %588 {offsets = [0, 0], sizes = [8, 32], strides = [1, 1]} : vector<32x32xf32> to vector<8x32xf32>
    %590 = vector.extract_strided_slice %588 {offsets = [8, 0], sizes = [8, 32], strides = [1, 1]} : vector<32x32xf32> to vector<8x32xf32>
    %591 = arith.maximumf %589, %590 : vector<8x32xf32>
    %592 = arith.subf %589, %591 : vector<8x32xf32>
    %593 = math.exp %592 : vector<8x32xf32>
    %594 = arith.subf %590, %591 : vector<8x32xf32>
    %595 = math.exp %594 : vector<8x32xf32>
    %596 = arith.addf %593, %595 : vector<8x32xf32>
    %cst_192 = arith.constant 1.000000e+00 : f32
    %597 = vector.broadcast %cst_192 : f32 to vector<8x32xf32>
    %598 = arith.divf %597, %596 : vector<8x32xf32>
    %599 = arith.mulf %593, %598 : vector<8x32xf32>
    %600 = arith.mulf %595, %598 : vector<8x32xf32>
    %601 = vector.extract_strided_slice %588 {offsets = [16, 0], sizes = [8, 32], strides = [1, 1]} : vector<32x32xf32> to vector<8x32xf32>
    %602 = vector.extract_strided_slice %588 {offsets = [24, 0], sizes = [8, 32], strides = [1, 1]} : vector<32x32xf32> to vector<8x32xf32>
    %603 = arith.maximumf %601, %602 : vector<8x32xf32>
    %604 = arith.subf %601, %603 : vector<8x32xf32>
    %605 = math.exp %604 : vector<8x32xf32>
    %606 = arith.subf %602, %603 : vector<8x32xf32>
    %607 = math.exp %606 : vector<8x32xf32>
    %608 = arith.addf %605, %607 : vector<8x32xf32>
    %cst_193 = arith.constant 1.000000e+00 : f32
    %609 = vector.broadcast %cst_193 : f32 to vector<8x32xf32>
    %610 = arith.divf %609, %608 : vector<8x32xf32>
    %611 = arith.mulf %605, %610 : vector<8x32xf32>
    %612 = arith.mulf %607, %610 : vector<8x32xf32>
    %613 = tpu.concatenate %599, %600, %611, %612 in 0 : vector<8x32xf32>, vector<8x32xf32>, vector<8x32xf32>, vector<8x32xf32> -> vector<32x32xf32>
    %cst_194 = arith.constant dense<0.000000e+00> : vector<32x32xf32>
    %614 = tpu.matmul %613, %1, %cst_194 {dimension_numbers = #tpu.dot_dimension_numbers<[1], [0], [0], [1], [0, 0, 1, 1], [], []>} : vector<32x32xf32>, vector<32x32xf32>, vector<32x32xf32> -> vector<32x32xf32>
    %615 = arith.mulf %614, %586 : vector<32x32xf32>
    %cst_195 = arith.constant dense<0.000000e+00> : vector<16x32xf32>
    %616 = tpu.matmul %2, %615, %cst_195 {dimension_numbers = #tpu.dot_dimension_numbers<[1], [0], [0], [1], [0, 0, 1, 1], [], []>} : vector<16x32xf32>, vector<32x32xf32>, vector<16x32xf32> -> vector<16x32xf32>
    %c1440 = arith.constant 1440 : index
    %c0_196 = arith.constant 0 : index
    %617 = vector.load %arg1[%c1440, %c0_196] : memref<1624x32xf32, #tpu.memory_space<vmem>>, vector<32x32xf32>
    %cst_197 = arith.constant dense<0.000000e+00> : vector<16x32xf32>
    %618 = tpu.matmul %616, %617, %cst_197 {dimension_numbers = #tpu.dot_dimension_numbers<[1], [0], [0], [1], [0, 0, 1, 1], [], []>} : vector<16x32xf32>, vector<32x32xf32>, vector<16x32xf32> -> vector<16x32xf32>
    %c1472 = arith.constant 1472 : index
    %c0_198 = arith.constant 0 : index
    %619 = vector.load %arg1[%c1472, %c0_198] : memref<1624x32xf32, #tpu.memory_space<vmem>>, vector<1x32xf32>
    %620 = vector.broadcast %619 : vector<1x32xf32> to vector<16x32xf32>
    %621 = arith.addf %618, %620 : vector<16x32xf32>
    %622 = arith.addf %562, %621 : vector<16x32xf32>
    %cst_199 = arith.constant dense<0.000000e+00> : vector<16xf32>
    %623 = vector.multi_reduction <add>, %622, %cst_199 [1] : vector<16x32xf32> to vector<16xf32>
    %624 = vector.shape_cast %623 : vector<16xf32> to vector<16x1xf32>
    %cst_200 = arith.constant 3.200000e+01 : f32
    %625 = vector.broadcast %cst_200 : f32 to vector<16x1xf32>
    %626 = arith.divf %624, %625 : vector<16x1xf32>
    %627 = vector.broadcast %626 : vector<16x1xf32> to vector<16x32xf32>
    %628 = arith.subf %622, %627 : vector<16x32xf32>
    %629 = arith.mulf %628, %628 : vector<16x32xf32>
    %cst_201 = arith.constant dense<0.000000e+00> : vector<16xf32>
    %630 = vector.multi_reduction <add>, %629, %cst_201 [1] : vector<16x32xf32> to vector<16xf32>
    %631 = vector.shape_cast %630 : vector<16xf32> to vector<16x1xf32>
    %cst_202 = arith.constant 3.200000e+01 : f32
    %632 = vector.broadcast %cst_202 : f32 to vector<16x1xf32>
    %633 = arith.divf %631, %632 : vector<16x1xf32>
    %634 = vector.broadcast %626 : vector<16x1xf32> to vector<16x32xf32>
    %635 = arith.subf %622, %634 : vector<16x32xf32>
    %cst_203 = arith.constant 9.99999974E-6 : f32
    %636 = vector.broadcast %cst_203 : f32 to vector<16x1xf32>
    %637 = arith.addf %633, %636 : vector<16x1xf32>
    %638 = math.rsqrt %637 : vector<16x1xf32>
    %639 = vector.broadcast %638 : vector<16x1xf32> to vector<16x32xf32>
    %640 = arith.mulf %635, %639 : vector<16x32xf32>
    %c1576 = arith.constant 1576 : index
    %c0_204 = arith.constant 0 : index
    %641 = vector.load %arg1[%c1576, %c0_204] : memref<1624x32xf32, #tpu.memory_space<vmem>>, vector<1x32xf32>
    %642 = vector.broadcast %641 : vector<1x32xf32> to vector<16x32xf32>
    %643 = arith.mulf %640, %642 : vector<16x32xf32>
    %c1584 = arith.constant 1584 : index
    %c0_205 = arith.constant 0 : index
    %644 = vector.load %arg1[%c1584, %c0_205] : memref<1624x32xf32, #tpu.memory_space<vmem>>, vector<1x32xf32>
    %645 = vector.broadcast %644 : vector<1x32xf32> to vector<16x32xf32>
    %646 = arith.addf %643, %645 : vector<16x32xf32>
    %c1480 = arith.constant 1480 : index
    %c0_206 = arith.constant 0 : index
    %647 = vector.load %arg1[%c1480, %c0_206] : memref<1624x32xf32, #tpu.memory_space<vmem>>, vector<32x32xf32>
    %cst_207 = arith.constant dense<0.000000e+00> : vector<16x32xf32>
    %648 = tpu.matmul %646, %647, %cst_207 {dimension_numbers = #tpu.dot_dimension_numbers<[1], [0], [0], [1], [0, 0, 1, 1], [], []>} : vector<16x32xf32>, vector<32x32xf32>, vector<16x32xf32> -> vector<16x32xf32>
    %c1512 = arith.constant 1512 : index
    %c0_208 = arith.constant 0 : index
    %649 = vector.load %arg1[%c1512, %c0_208] : memref<1624x32xf32, #tpu.memory_space<vmem>>, vector<1x32xf32>
    %650 = vector.broadcast %649 : vector<1x32xf32> to vector<16x32xf32>
    %651 = arith.addf %648, %650 : vector<16x32xf32>
    %cst_209 = arith.constant 0.000000e+00 : f32
    %652 = vector.broadcast %cst_209 : f32 to vector<16x32xf32>
    %653 = arith.maximumf %651, %652 : vector<16x32xf32>
    %c1520 = arith.constant 1520 : index
    %c0_210 = arith.constant 0 : index
    %654 = vector.load %arg1[%c1520, %c0_210] : memref<1624x32xf32, #tpu.memory_space<vmem>>, vector<32x32xf32>
    %cst_211 = arith.constant dense<0.000000e+00> : vector<16x32xf32>
    %655 = tpu.matmul %653, %654, %cst_211 {dimension_numbers = #tpu.dot_dimension_numbers<[1], [0], [0], [1], [0, 0, 1, 1], [], []>} : vector<16x32xf32>, vector<32x32xf32>, vector<16x32xf32> -> vector<16x32xf32>
    %c1552 = arith.constant 1552 : index
    %c0_212 = arith.constant 0 : index
    %656 = vector.load %arg1[%c1552, %c0_212] : memref<1624x32xf32, #tpu.memory_space<vmem>>, vector<1x32xf32>
    %657 = vector.broadcast %656 : vector<1x32xf32> to vector<16x32xf32>
    %658 = arith.addf %655, %657 : vector<16x32xf32>
    %659 = arith.addf %646, %658 : vector<16x32xf32>
    %cst_213 = arith.constant dense<0.000000e+00> : vector<16xf32>
    %660 = vector.multi_reduction <add>, %659, %cst_213 [1] : vector<16x32xf32> to vector<16xf32>
    %661 = vector.shape_cast %660 : vector<16xf32> to vector<16x1xf32>
    %cst_214 = arith.constant 3.200000e+01 : f32
    %662 = vector.broadcast %cst_214 : f32 to vector<16x1xf32>
    %663 = arith.divf %661, %662 : vector<16x1xf32>
    %664 = vector.broadcast %663 : vector<16x1xf32> to vector<16x32xf32>
    %665 = arith.subf %659, %664 : vector<16x32xf32>
    %666 = arith.mulf %665, %665 : vector<16x32xf32>
    %cst_215 = arith.constant dense<0.000000e+00> : vector<16xf32>
    %667 = vector.multi_reduction <add>, %666, %cst_215 [1] : vector<16x32xf32> to vector<16xf32>
    %668 = vector.shape_cast %667 : vector<16xf32> to vector<16x1xf32>
    %cst_216 = arith.constant 3.200000e+01 : f32
    %669 = vector.broadcast %cst_216 : f32 to vector<16x1xf32>
    %670 = arith.divf %668, %669 : vector<16x1xf32>
    %671 = vector.broadcast %663 : vector<16x1xf32> to vector<16x32xf32>
    %672 = arith.subf %659, %671 : vector<16x32xf32>
    %cst_217 = arith.constant 9.99999974E-6 : f32
    %673 = vector.broadcast %cst_217 : f32 to vector<16x1xf32>
    %674 = arith.addf %670, %673 : vector<16x1xf32>
    %675 = math.rsqrt %674 : vector<16x1xf32>
    %676 = vector.broadcast %675 : vector<16x1xf32> to vector<16x32xf32>
    %677 = arith.mulf %672, %676 : vector<16x32xf32>
    %c1592 = arith.constant 1592 : index
    %c0_218 = arith.constant 0 : index
    %678 = vector.load %arg1[%c1592, %c0_218] : memref<1624x32xf32, #tpu.memory_space<vmem>>, vector<1x32xf32>
    %679 = vector.broadcast %678 : vector<1x32xf32> to vector<16x32xf32>
    %680 = arith.mulf %677, %679 : vector<16x32xf32>
    %c1600 = arith.constant 1600 : index
    %c0_219 = arith.constant 0 : index
    %681 = vector.load %arg1[%c1600, %c0_219] : memref<1624x32xf32, #tpu.memory_space<vmem>>, vector<1x32xf32>
    %682 = vector.broadcast %681 : vector<1x32xf32> to vector<16x32xf32>
    %683 = arith.addf %680, %682 : vector<16x32xf32>
    %cst_220 = arith.constant dense<0.000000e+00> : vector<16xf32>
    %684 = vector.multi_reduction <add>, %683, %cst_220 [1] : vector<16x32xf32> to vector<16xf32>
    %685 = vector.shape_cast %684 : vector<16xf32> to vector<16x1xf32>
    %cst_221 = arith.constant 3.200000e+01 : f32
    %686 = vector.broadcast %cst_221 : f32 to vector<16x1xf32>
    %687 = arith.divf %685, %686 : vector<16x1xf32>
    %688 = vector.broadcast %687 : vector<16x1xf32> to vector<16x32xf32>
    %689 = arith.subf %683, %688 : vector<16x32xf32>
    %690 = arith.mulf %689, %689 : vector<16x32xf32>
    %cst_222 = arith.constant dense<0.000000e+00> : vector<16xf32>
    %691 = vector.multi_reduction <add>, %690, %cst_222 [1] : vector<16x32xf32> to vector<16xf32>
    %692 = vector.shape_cast %691 : vector<16xf32> to vector<16x1xf32>
    %cst_223 = arith.constant 3.200000e+01 : f32
    %693 = vector.broadcast %cst_223 : f32 to vector<16x1xf32>
    %694 = arith.divf %692, %693 : vector<16x1xf32>
    %695 = vector.broadcast %687 : vector<16x1xf32> to vector<16x32xf32>
    %696 = arith.subf %683, %695 : vector<16x32xf32>
    %cst_224 = arith.constant 9.99999974E-6 : f32
    %697 = vector.broadcast %cst_224 : f32 to vector<16x1xf32>
    %698 = arith.addf %694, %697 : vector<16x1xf32>
    %699 = math.rsqrt %698 : vector<16x1xf32>
    %700 = vector.broadcast %699 : vector<16x1xf32> to vector<16x32xf32>
    %701 = arith.mulf %696, %700 : vector<16x32xf32>
    %c1608 = arith.constant 1608 : index
    %c0_225 = arith.constant 0 : index
    %702 = vector.load %arg1[%c1608, %c0_225] : memref<1624x32xf32, #tpu.memory_space<vmem>>, vector<1x32xf32>
    %703 = vector.broadcast %702 : vector<1x32xf32> to vector<16x32xf32>
    %704 = arith.mulf %701, %703 : vector<16x32xf32>
    %c1616 = arith.constant 1616 : index
    %c0_226 = arith.constant 0 : index
    %705 = vector.load %arg1[%c1616, %c0_226] : memref<1624x32xf32, #tpu.memory_space<vmem>>, vector<1x32xf32>
    %706 = vector.broadcast %705 : vector<1x32xf32> to vector<16x32xf32>
    %707 = arith.addf %704, %706 : vector<16x32xf32>
    %c104 = arith.constant 104 : index
    %c0_227 = arith.constant 0 : index
    %708 = vector.load %arg1[%c104, %c0_227] : memref<1624x32xf32, #tpu.memory_space<vmem>>, vector<2x16xf32>
    %cst_228 = arith.constant dense<0.000000e+00> : vector<2x32xf32>
    %709 = tpu.matmul %708, %707, %cst_228 {dimension_numbers = #tpu.dot_dimension_numbers<[1], [0], [0], [1], [0, 0, 1, 1], [], []>} : vector<2x16xf32>, vector<16x32xf32>, vector<2x32xf32> -> vector<2x32xf32>
    %c112 = arith.constant 112 : index
    %c0_229 = arith.constant 0 : index
    %710 = vector.load %arg1[%c112, %c0_229] : memref<1624x32xf32, #tpu.memory_space<vmem>>, vector<32x4xf32>
    %cst_230 = arith.constant dense<0.000000e+00> : vector<2x4xf32>
    %711 = tpu.matmul %709, %710, %cst_230 {dimension_numbers = #tpu.dot_dimension_numbers<[1], [0], [0], [1], [0, 0, 1, 1], [], []>} : vector<2x32xf32>, vector<32x4xf32>, vector<2x4xf32> -> vector<2x4xf32>
    %c144 = arith.constant 144 : index
    %c0_231 = arith.constant 0 : index
    %712 = vector.load %arg1[%c144, %c0_231] : memref<1624x32xf32, #tpu.memory_space<vmem>>, vector<1x4xf32>
    %713 = vector.broadcast %712 : vector<1x4xf32> to vector<2x4xf32>
    %714 = arith.addf %711, %713 : vector<2x4xf32>
    %c0_232 = arith.constant 0 : index
    %c0_233 = arith.constant 0 : index
    %715 = vector.load %arg2[%c0_232, %c0_233] : memref<2x4xf32, #tpu.memory_space<vmem>>, vector<2x4xf32>
    tpu.vector_store %arg2[%c0_232, %c0_233], %714 {strides = array<i32>} : memref<2x4xf32, #tpu.memory_space<vmem>>, vector<2x4xf32>,
    return
  }
}

</mosaic_0001>

<llo_original>
// kernel: text_transformer_forward.1
$region0: #{text_transformer_forward.1}
  #allocation0 [shape = 'u32[]', space=smem, size = 0x4, offset = 0x4, fixed_abs, tag = 'smem constant byte address 0x4 - core index']
  #allocation1 [shape = 'u32[72,128]{1,0:T(1,128)}', space=vmem, size = 0x9000, scoped, tag = 'internal scratch']
  %s0 = inlined_call_operand.vmem [shape: f32[16,8], index: 0, kind: input, shape index: {}]
  %s1 = inlined_call_operand.vmem [shape: f32[1624,32], index: 1, kind: input, shape index: {}]
  %s2 = inlined_call_operand.hbm [shape: f32[2,4], index: 2, kind: output, shape index: {}]
  %s3 = sld [smem:[#allocation0]]
  $region18: #{text_transformer_forward.1} parent=0
    _
  %s5 = ssub.s32 1, %s3
  %s6 = scalar_select 0, %s5, %s3
  $region1: #{text_transformer_forward.1} parent=0
    #allocation2 [shape = 'u8[1024]{0}', space=vmem, size = 0x400, scoped, tag = 'output window, operand 0, single buffered']
    #allocation3 [shape = 's32[1]{0}', space=sflag, size = 0x4, scoped, tag = 'scoped memory for text_transformer_forward.1']
    %7 = vsyncpa [#allocation3], 0
    // Predicated region
    $region2: #{text_transformer_forward.1} parent=1 // pred_check
      _
    $region3: #{text_transformer_forward.1} parent=1 // pred_check_branch
      %9 = sbr.rel (0) target = $region5
    $region4: #{text_transformer_forward.1} parent=1 // pred_region
      _
    $region5: #{text_transformer_forward.1} parent=1 // pred_fallthru
      _
    // Predicated region
    $region6: #{text_transformer_forward.1} parent=1 // pred_check
      _
    $region7: #{text_transformer_forward.1} parent=1 // pred_check_branch
      %11 = sbr.rel (0) target = $region9
    $region8: #{text_transformer_forward.1} parent=1 // pred_region
      _
    $region9: #{text_transformer_forward.1} parent=1 // pred_fallthru
      _
    %v12 = vld [vmem:[%s1 + $0x18] sm:$0xff]
    %v13 = vld [vmem:[%s1 + $0x20] sm:$0xff]
    %v14 = vld [vmem:[%s1 + $0x28] sm:$0xff]
    %v15 = vld [vmem:[%s1 + $0x30] sm:$0xff]
    %v16 = vld [vmem:[%s1 + $0x38] sm:$0xff]
    %v17 = vld [vmem:[%s1 + $0x40] sm:$0xff]
    %v18 = vld [vmem:[%s1 + $0x48] sm:$0xff]
    %v19 = vld [vmem:[%s1 + $0x50] sm:$0xff]
    %v20 = vld [vmem:[%s1 + $0x58] sm:$0xff]
    %v21 = vld [vmem:[%s1 + $0x60] sm:$0xff]
    %v22 = vld [vmem:[%s0] sm:$0xff]
    %v23 = vld [vmem:[%s0 + $0x8] sm:$0xff]
    %v24 = vld [vmem:[%s1] sm:$0xff]
    %v25 = vld [vmem:[%s1 + $0x8] sm:$0xff]
    %v26 = vld [vmem:[%s1 + $0x10] sm:$0xff]
    %vm27 = vcmask 64512
    %v29 = vsel %vm27, %v22, 0
    %v32 = vsel %vm27, %v23, 0
    %34 = vmatpush.msra.mxu0 0.0
    %35 = vmatpush.msra.mxu0 0.0
    %36 = vmatpush.msra.mxu0 0.0
    %37 = vmatpush.msra.mxu0 0.0
    %38 = vmatpush.msra.mxu0 0.0
    %39 = vmatpush.msra.mxu0 0.0
    %40 = vmatpush.msra.mxu0 0.0
    %41 = vmatpush.msra.mxu0 0.0
    %42 = vmatpush.msra.mxu0 0.0
    %43 = vmatpush.msra.mxu0 0.0
    %44 = vmatpush.msra.mxu0 0.0
    %45 = vmatpush.msra.mxu0 0.0
    %46 = vmatpush.msra.mxu0 0.0
    %47 = vmatpush.msra.mxu0 0.0
    %48 = vmatpush.msra.mxu0 0.0
    %49 = vmatpush.msra.mxu0 %v24
    %50 = vmatmul.f32.gmra.mxu0 %v29
    %v51 = vpop.f32.mrf.mxu0
    %v52 = vadd.f32 %v25, %v51
    %53 = vmatmul.f32.gmra.mxu0 %v32
    %v54 = vpop.f32.mrf.mxu0
    %v55 = vadd.f32 %v26, %v54
    %56 = vdwg.mxu0
    %v57 = vld [vmem:[%s1 + $0x98] sm:$0xff]
    %v58 = vld [vmem:[%s1 + $0xa0] sm:$0xff]
    %v59 = vld [vmem:[%s1 + $0xa8] sm:$0xff]
    %v60 = vld [vmem:[%s1 + $0xb0] sm:$0xff]
    %v61 = vld [vmem:[%s1 + $0xb8] sm:$0x1]
    %v62 = vperm.slane %v61, 0
    %vm63 = vcmask 261120
    %v65 = vsel %vm63, %v52, 0
    %v68 = vsel %vm63, %v55, 0
    %70 = vmatpush.msra.mxu0 0.0
    %71 = vmatpush.msra.mxu0 0.0
    %72 = vmatpush.msra.mxu0 0.0
    %73 = vmatpush.msra.mxu0 0.0
    %74 = vmatpush.msra.mxu0 0.0
    %75 = vmatpush.msra.mxu0 0.0
    %76 = vmatpush.msra.mxu0 0.0
    %77 = vmatpush.msra.mxu0 0.0
    %78 = vmatpush.msra.mxu0 0.0
    %79 = vmatpush.msra.mxu0 0.0
    %80 = vmatpush.msra.mxu0 0.0
    %81 = vmatpush.msra.mxu0 0.0
    %82 = vmatpush.msra.mxu0 %v60
    %83 = vmatpush.msra.mxu0 %v59
    %84 = vmatpush.msra.mxu0 %v58
    %85 = vmatpush.msra.mxu0 %v57
    %86 = vmatmul.f32.gmra.mxu0 %v65
    %v87 = vpop.f32.mrf.mxu0
    %v88 = vadd.f32 %v62, %v87
    %89 = vmatmul.f32.gmra.mxu0 %v68
    %v90 = vpop.f32.mrf.mxu0
    %v91 = vadd.f32 %v62, %v90
    %92 = vdwg.mxu0
    %v93 = vmul.f32 %v88, 0.35355338
    %v94 = vmul.f32 %v91, 0.35355338
    %v95 = vld [vmem:[%s1 + $0xc0] sm:$0xff]
    %v96 = vld [vmem:[%s1 + $0xc8] sm:$0xff]
    %v97 = vld [vmem:[%s1 + $0xd0] sm:$0xff]
    %v98 = vld [vmem:[%s1 + $0xd8] sm:$0xff]
    %v99 = vld [vmem:[%s1 + $0xe0] sm:$0x1]
    %v100 = vperm.slane %v99, 0
    %101 = vmatpush.msra.mxu0 0.0
    %102 = vmatpush.msra.mxu0 0.0
    %103 = vmatpush.msra.mxu0 0.0
    %104 = vmatpush.msra.mxu0 0.0
    %105 = vmatpush.msra.mxu0 0.0
    %106 = vmatpush.msra.mxu0 0.0
    %107 = vmatpush.msra.mxu0 0.0
    %108 = vmatpush.msra.mxu0 0.0
    %109 = vmatpush.msra.mxu0 0.0
    %110 = vmatpush.msra.mxu0 0.0
    %111 = vmatpush.msra.mxu0 0.0
    %112 = vmatpush.msra.mxu0 0.0
    %113 = vmatpush.msra.mxu0 %v98
    %114 = vmatpush.msra.mxu0 %v97
    %115 = vmatpush.msra.mxu0 %v96
    %116 = vmatpush.msra.mxu0 %v95
    %117 = vmatmul.f32.gmra.mxu0 %v65
    %v118 = vpop.f32.mrf.mxu0
    %v119 = vadd.f32 %v100, %v118
    %120 = vmatmul.f32.gmra.mxu0 %v68
    %v121 = vpop.f32.mrf.mxu0
    %v122 = vadd.f32 %v100, %v121
    %123 = vdwg.mxu0
    %v124 = vld [vmem:[%s1 + $0xe8] sm:$0xff]
    %v125 = vld [vmem:[%s1 + $0xf0] sm:$0xff]
    %v126 = vld [vmem:[%s1 + $0xf8] sm:$0xff]
    %v127 = vld [vmem:[%s1 + $0x100] sm:$0xff]
    %v128 = vld [vmem:[%s1 + $0x108] sm:$0x1]
    %v129 = vperm.slane %v128, 0
    %130 = vmatpush.msra.mxu0 0.0
    %131 = vmatpush.msra.mxu0 0.0
    %132 = vmatpush.msra.mxu0 0.0
    %133 = vmatpush.msra.mxu0 0.0
    %134 = vmatpush.msra.mxu0 0.0
    %135 = vmatpush.msra.mxu0 0.0
    %136 = vmatpush.msra.mxu0 0.0
    %137 = vmatpush.msra.mxu0 0.0
    %138 = vmatpush.msra.mxu0 0.0
    %139 = vmatpush.msra.mxu0 0.0
    %140 = vmatpush.msra.mxu0 0.0
    %141 = vmatpush.msra.mxu0 0.0
    %142 = vmatpush.msra.mxu0 %v127
    %143 = vmatpush.msra.mxu0 %v126
    %144 = vmatpush.msra.mxu0 %v125
    %145 = vmatpush.msra.mxu0 %v124
    %146 = vmatmul.f32.gmra.mxu0 %v65
    %v147 = vpop.f32.mrf.mxu0
    %v148 = vadd.f32 %v129, %v147
    %149 = vmatmul.f32.gmra.mxu0 %v68
    %v150 = vpop.f32.mrf.mxu0
    %v151 = vadd.f32 %v129, %v150
    %152 = vdwg.mxu0
    %v153 = vmul.f32 %v93, %v119
    %v154 = vmul.f32 %v93, %v122
    %v155 = vmul.f32 %v94, %v119
    %v156 = vmul.f32 %v94, %v122
    %v158 = vsel %vm63, %v153, 0
    %v161 = vsel %vm63, %v154, 0
    %v164 = vsel %vm63, %v155, 0
    %v167 = vsel %vm63, %v156, 0
    %169 = vmatpush.msra.mxu0 0.0
    %170 = vmatpush.msra.mxu0 0.0
    %171 = vmatpush.msra.mxu0 0.0
    %172 = vmatpush.msra.mxu0 0.0
    %173 = vmatpush.msra.mxu0 0.0
    %174 = vmatpush.msra.mxu0 0.0
    %175 = vmatpush.msra.mxu0 0.0
    %176 = vmatpush.msra.mxu0 0.0
    %177 = vmatpush.msra.mxu0 0.0
    %178 = vmatpush.msra.mxu0 0.0
    %179 = vmatpush.msra.mxu0 0.0
    %180 = vmatpush.msra.mxu0 0.0
    %181 = vmatpush.msra.mxu0 %v15
    %182 = vmatpush.msra.mxu0 %v14
    %183 = vmatpush.msra.mxu0 %v13
    %184 = vmatpush.msra.mxu0 %v12
    %185 = vmatmul.f32.gmra.mxu0 %v158
    %v186 = vpop.f32.mrf.mxu0
    %v187 = vadd.f32 0.0, %v186
    %188 = vmatmul.f32.gmra.mxu0 %v161
    %v189 = vpop.f32.mrf.mxu0
    %v190 = vadd.f32 0.0, %v189
    %191 = vmatmul.f32.gmra.mxu0 %v164
    %v192 = vpop.f32.mrf.mxu0
    %v193 = vadd.f32 0.0, %v192
    %194 = vmatmul.f32.gmra.mxu0 %v167
    %v195 = vpop.f32.mrf.mxu0
    %v196 = vadd.f32 0.0, %v195
    %197 = vdwg.mxu0
    %v198 = vmax.f32 %v187, %v190
    %v199 = vsub.f32 %v187, %v198
    %v200 = vmul.f32 %v199, 1.442695
    %v201 = vpow.pop %v200
    %v202 = vsub.f32 %v190, %v198
    %v203 = vmul.f32 %v202, 1.442695
    %v204 = vpow.pop %v203
    %v205 = vadd.f32 %v201, %v204
    %v206 = vrcp.pop %v205
    %v207 = vmul.f32 %v205, %v206
    %v208 = vsub.f32 1.0, %v207
    %v209 = vmul.f32 %v206, %v208
    %v210 = vadd.f32 %v206, %v209
    %vm211 = vweird.f32 %v205
    %vm212 = vweird.f32 %v206
    %vm213 = vmor %vm211, %vm212
    %v214 = vsel %vm213, %v206, %v210
    %v215 = vand.u32 2147483647, %v205
    %vm216 = vcmp.eq.f32.partialorder %v215, 8.507059e+37
    %v217 = vand.u32 %v205, 2147483648
    %v218 = vor.u32 1.1754944e-38, %v217
    %v219 = vsel %vm216, %v218, %v214
    %v220 = vmul.f32 1.0, %v219
    %v221 = vmul.f32 %v201, %v220
    %v222 = vmul.f32 %v204, %v220
    %v223 = vmax.f32 %v193, %v196
    %v224 = vsub.f32 %v193, %v223
    %v225 = vmul.f32 %v224, 1.442695
    %v226 = vpow.pop %v225
    %v227 = vsub.f32 %v196, %v223
    %v228 = vmul.f32 %v227, 1.442695
    %v229 = vpow.pop %v228
    %v230 = vadd.f32 %v226, %v229
    %v231 = vrcp.pop %v230
    %v232 = vmul.f32 %v230, %v231
    %v233 = vsub.f32 1.0, %v232
    %v234 = vmul.f32 %v231, %v233
    %v235 = vadd.f32 %v231, %v234
    %vm236 = vweird.f32 %v230
    %vm237 = vweird.f32 %v231
    %vm238 = vmor %vm236, %vm237
    %v239 = vsel %vm238, %v231, %v235
    %v240 = vand.u32 2147483647, %v230
    %vm241 = vcmp.eq.f32.partialorder %v240, 8.507059e+37
    %v242 = vand.u32 %v230, 2147483648
    %v243 = vor.u32 1.1754944e-38, %v242
    %v244 = vsel %vm241, %v243, %v239
    %v245 = vmul.f32 1.0, %v244
    %v246 = vmul.f32 %v226, %v245
    %v247 = vmul.f32 %v229, %v245
    %v249 = vsel %vm63, %v221, 0
    %v252 = vsel %vm63, %v222, 0
    %v255 = vsel %vm63, %v246, 0
    %v258 = vsel %vm63, %v247, 0
    %260 = vmatpush.msra.mxu0 0.0
    %261 = vmatpush.msra.mxu0 0.0
    %262 = vmatpush.msra.mxu0 0.0
    %263 = vmatpush.msra.mxu0 0.0
    %264 = vmatpush.msra.mxu0 0.0
    %265 = vmatpush.msra.mxu0 0.0
    %266 = vmatpush.msra.mxu0 0.0
    %267 = vmatpush.msra.mxu0 0.0
    %268 = vmatpush.msra.mxu0 0.0
    %269 = vmatpush.msra.mxu0 0.0
    %270 = vmatpush.msra.mxu0 0.0
    %271 = vmatpush.msra.mxu0 0.0
    %272 = vmatpush.msra.mxu0 %v19
    %273 = vmatpush.msra.mxu0 %v18
    %274 = vmatpush.msra.mxu0 %v17
    %275 = vmatpush.msra.mxu0 %v16
    %276 = vmatmul.f32.gmra.mxu0 %v249
    %v277 = vpop.f32.mrf.mxu0
    %v278 = vadd.f32 0.0, %v277
    %279 = vmatmul.f32.gmra.mxu0 %v252
    %v280 = vpop.f32.mrf.mxu0
    %v281 = vadd.f32 0.0, %v280
    %282 = vmatmul.f32.gmra.mxu0 %v255
    %v283 = vpop.f32.mrf.mxu0
    %v284 = vadd.f32 0.0, %v283
    %285 = vmatmul.f32.gmra.mxu0 %v258
    %v286 = vpop.f32.mrf.mxu0
    %v287 = vadd.f32 0.0, %v286
    %288 = vdwg.mxu0
    %v289 = vmul.f32 %v278, %v148
    %v290 = vmul.f32 %v281, %v151
    %v291 = vmul.f32 %v284, %v148
    %v292 = vmul.f32 %v287, %v151
    %v294 = vsel %vm63, %v20, 0
    %v297 = vsel %vm63, %v21, 0
    %299 = vmatpush.msra.mxu0 0.0
    %300 = vmatpush.msra.mxu0 0.0
    %301 = vmatpush.msra.mxu0 0.0
    %302 = vmatpush.msra.mxu0 0.0
    %303 = vmatpush.msra.mxu0 0.0
    %304 = vmatpush.msra.mxu0 0.0
    %305 = vmatpush.msra.mxu0 0.0
    %306 = vmatpush.msra.mxu0 0.0
    %307 = vmatpush.msra.mxu0 0.0
    %308 = vmatpush.msra.mxu0 0.0
    %309 = vmatpush.msra.mxu0 0.0
    %310 = vmatpush.msra.mxu0 0.0
    %311 = vmatpush.msra.mxu0 %v292
    %312 = vmatpush.msra.mxu0 %v291
    %313 = vmatpush.msra.mxu0 %v290
    %314 = vmatpush.msra.mxu0 %v289
    %315 = vmatmul.f32.gmra.mxu0 %v294
    %v316 = vpop.f32.mrf.mxu0
    %v317 = vadd.f32 0.0, %v316
    %318 = vmatmul.f32.gmra.mxu0 %v297
    %v319 = vpop.f32.mrf.mxu0
    %v320 = vadd.f32 0.0, %v319
    %321 = vdwg.mxu0
    %v322 = vld [vmem:[%s1 + $0x110] sm:$0xff]
    %v323 = vld [vmem:[%s1 + $0x118] sm:$0xff]
    %v324 = vld [vmem:[%s1 + $0x120] sm:$0xff]
    %v325 = vld [vmem:[%s1 + $0x128] sm:$0xff]
    %v326 = vld [vmem:[%s1 + $0x130] sm:$0x1]
    %v327 = vperm.slane %v326, 0
    %v329 = vsel %vm63, %v317, 0
    %v332 = vsel %vm63, %v320, 0
    %334 = vmatpush.msra.mxu0 0.0
    %335 = vmatpush.msra.mxu0 0.0
    %336 = vmatpush.msra.mxu0 0.0
    %337 = vmatpush.msra.mxu0 0.0
    %338 = vmatpush.msra.mxu0 0.0
    %339 = vmatpush.msra.mxu0 0.0
    %340 = vmatpush.msra.mxu0 0.0
    %341 = vmatpush.msra.mxu0 0.0
    %342 = vmatpush.msra.mxu0 0.0
    %343 = vmatpush.msra.mxu0 0.0
    %344 = vmatpush.msra.mxu0 0.0
    %345 = vmatpush.msra.mxu0 0.0
    %346 = vmatpush.msra.mxu0 %v325
    %347 = vmatpush.msra.mxu0 %v324
    %348 = vmatpush.msra.mxu0 %v323
    %349 = vmatpush.msra.mxu0 %v322
    %350 = vmatmul.f32.gmra.mxu0 %v329
    %v351 = vpop.f32.mrf.mxu0
    %v352 = vadd.f32 %v327, %v351
    %353 = vmatmul.f32.gmra.mxu0 %v332
    %v354 = vpop.f32.mrf.mxu0
    %v355 = vadd.f32 %v327, %v354
    %356 = vdwg.mxu0
    %v357 = vadd.f32 %v52, %v352
    %v358 = vadd.f32 %v55, %v355
    %v359 = vsel %vm63, %v357, 0.0
    %360 = vadd.xlane.f32.xlu0 %v359
    %v361 = vpop.xlane.xlu0 %360
    %v362 = vsel %vm63, %v358, 0.0
    %363 = vadd.xlane.f32.xlu0 %v362
    %v364 = vpop.xlane.xlu0 %363
    %v365 = vrcp.pop 32.0
    %v366 = vmul.f32 32.0, %v365
    %v367 = vsub.f32 1.0, %v366
    %v368 = vmul.f32 %v365, %v367
    %v369 = vadd.f32 %v365, %v368
    %vm370 = vweird.f32 %v365
    %v371 = vsel %vm370, %v365, %v369
    %v372 = vmul.f32 %v361, %v371
    %v373 = vmul.f32 %v364, %v371
    %v374 = vsub.f32 %v357, %v372
    %v375 = vsub.f32 %v358, %v373
    %v376 = vmul.f32 %v374, %v374
    %v377 = vmul.f32 %v375, %v375
    %v378 = vsel %vm63, %v376, 0.0
    %379 = vadd.xlane.f32.xlu0 %v378
    %v380 = vpop.xlane.xlu0 %379
    %v381 = vsel %vm63, %v377, 0.0
    %382 = vadd.xlane.f32.xlu0 %v381
    %v383 = vpop.xlane.xlu0 %382
    %v384 = vmul.f32 %v380, %v371
    %v385 = vmul.f32 %v383, %v371
    %v386 = vadd.f32 %v384, 1e-05
    %v387 = vadd.f32 %v385, 1e-05
    %v388 = vrsqrt.pop %v386
    %v389 = vmul.f32 %v388, %v386
    %v390 = vmul.f32 %v389, %v388
    %v391 = vmul.f32 0.5, %v390
    %v392 = vsub.f32 1.5, %v391
    %v393 = vmul.f32 %v388, %v392
    %vm394 = vweird.f32 %v386
    %vm395 = vweird.f32 %v388
    %vm396 = vmor %vm394, %vm395
    %v397 = vsel %vm396, %v388, %v393
    %v398 = vrsqrt.pop %v387
    %v399 = vmul.f32 %v398, %v387
    %v400 = vmul.f32 %v399, %v398
    %v401 = vmul.f32 0.5, %v400
    %v402 = vsub.f32 1.5, %v401
    %v403 = vmul.f32 %v398, %v402
    %vm404 = vweird.f32 %v387
    %vm405 = vweird.f32 %v398
    %vm406 = vmor %vm404, %vm405
    %v407 = vsel %vm406, %v398, %v403
    %v408 = vmul.f32 %v374, %v397
    %v409 = vmul.f32 %v375, %v407
    %v410 = vld [vmem:[%s1 + $0x188] sm:$0x1]
    %v411 = vperm.slane %v410, 0
    %v412 = vmul.f32 %v408, %v411
    %v413 = vmul.f32 %v409, %v411
    %v414 = vld [vmem:[%s1 + $0x190] sm:$0x1]
    %v415 = vperm.slane %v414, 0
    %v416 = vadd.f32 %v412, %v415
    %v417 = vadd.f32 %v413, %v415
    %v418 = vld [vmem:[%s1 + $0x138] sm:$0xff]
    %v419 = vld [vmem:[%s1 + $0x140] sm:$0xff]
    %v420 = vld [vmem:[%s1 + $0x148] sm:$0xff]
    %v421 = vld [vmem:[%s1 + $0x150] sm:$0xff]
    %v422 = vld [vmem:[%s1 + $0x158] sm:$0x1]
    %v423 = vperm.slane %v422, 0
    %v425 = vsel %vm63, %v416, 0
    %v428 = vsel %vm63, %v417, 0
    %430 = vmatpush.msra.mxu0 0.0
    %431 = vmatpush.msra.mxu0 0.0
    %432 = vmatpush.msra.mxu0 0.0
    %433 = vmatpush.msra.mxu0 0.0
    %434 = vmatpush.msra.mxu0 0.0
    %435 = vmatpush.msra.mxu0 0.0
    %436 = vmatpush.msra.mxu0 0.0
    %437 = vmatpush.msra.mxu0 0.0
    %438 = vmatpush.msra.mxu0 0.0
    %439 = vmatpush.msra.mxu0 0.0
    %440 = vmatpush.msra.mxu0 0.0
    %441 = vmatpush.msra.mxu0 0.0
    %442 = vmatpush.msra.mxu0 %v421
    %443 = vmatpush.msra.mxu0 %v420
    %444 = vmatpush.msra.mxu0 %v419
    %445 = vmatpush.msra.mxu0 %v418
    %446 = vmatmul.f32.gmra.mxu0 %v425
    %v447 = vpop.f32.mrf.mxu0
    %v448 = vadd.f32 %v423, %v447
    %449 = vmatmul.f32.gmra.mxu0 %v428
    %v450 = vpop.f32.mrf.mxu0
    %v451 = vadd.f32 %v423, %v450
    %452 = vdwg.mxu0
    %v453 = vmax.f32 %v448, 0.0
    %v454 = vmax.f32 %v451, 0.0
    %v455 = vld [vmem:[%s1 + $0x160] sm:$0xff]
    %v456 = vld [vmem:[%s1 + $0x168] sm:$0xff]
    %v457 = vld [vmem:[%s1 + $0x170] sm:$0xff]
    %v458 = vld [vmem:[%s1 + $0x178] sm:$0xff]
    %v459 = vld [vmem:[%s1 + $0x180] sm:$0x1]
    %v460 = vperm.slane %v459, 0
    %v462 = vsel %vm63, %v453, 0
    %v465 = vsel %vm63, %v454, 0
    %467 = vmatpush.msra.mxu0 0.0
    %468 = vmatpush.msra.mxu0 0.0
    %469 = vmatpush.msra.mxu0 0.0
    %470 = vmatpush.msra.mxu0 0.0
    %471 = vmatpush.msra.mxu0 0.0
    %472 = vmatpush.msra.mxu0 0.0
    %473 = vmatpush.msra.mxu0 0.0
    %474 = vmatpush.msra.mxu0 0.0
    %475 = vmatpush.msra.mxu0 0.0
    %476 = vmatpush.msra.mxu0 0.0
    %477 = vmatpush.msra.mxu0 0.0
    %478 = vmatpush.msra.mxu0 0.0
    %479 = vmatpush.msra.mxu0 %v458
    %480 = vmatpush.msra.mxu0 %v457
    %481 = vmatpush.msra.mxu0 %v456
    %482 = vmatpush.msra.mxu0 %v455
    %483 = vmatmul.f32.gmra.mxu0 %v462
    %v484 = vpop.f32.mrf.mxu0
    %v485 = vadd.f32 %v460, %v484
    %486 = vmatmul.f32.gmra.mxu0 %v465
    %v487 = vpop.f32.mrf.mxu0
    %v488 = vadd.f32 %v460, %v487
    %489 = vdwg.mxu0
    %v490 = vadd.f32 %v416, %v485
    %v491 = vadd.f32 %v417, %v488
    %v492 = vsel %vm63, %v490, 0.0
    %493 = vadd.xlane.f32.xlu0 %v492
    %v494 = vpop.xlane.xlu0 %493
    %v495 = vsel %vm63, %v491, 0.0
    %496 = vadd.xlane.f32.xlu0 %v495
    %v497 = vpop.xlane.xlu0 %496
    %v498 = vmul.f32 %v494, %v371
    %v499 = vmul.f32 %v497, %v371
    %v500 = vsub.f32 %v490, %v498
    %v501 = vsub.f32 %v491, %v499
    %v502 = vmul.f32 %v500, %v500
    %v503 = vmul.f32 %v501, %v501
    %v504 = vsel %vm63, %v502, 0.0
    %505 = vadd.xlane.f32.xlu0 %v504
    %v506 = vpop.xlane.xlu0 %505
    %v507 = vsel %vm63, %v503, 0.0
    %508 = vadd.xlane.f32.xlu0 %v507
    %v509 = vpop.xlane.xlu0 %508
    %v510 = vmul.f32 %v506, %v371
    %v511 = vmul.f32 %v509, %v371
    %v512 = vadd.f32 %v510, 1e-05
    %v513 = vadd.f32 %v511, 1e-05
    %v514 = vrsqrt.pop %v512
    %v515 = vmul.f32 %v514, %v512
    %v516 = vmul.f32 %v515, %v514
    %v517 = vmul.f32 0.5, %v516
    %v518 = vsub.f32 1.5, %v517
    %v519 = vmul.f32 %v514, %v518
    %vm520 = vweird.f32 %v512
    %vm521 = vweird.f32 %v514
    %vm522 = vmor %vm520, %vm521
    %v523 = vsel %vm522, %v514, %v519
    %v524 = vrsqrt.pop %v513
    %v525 = vmul.f32 %v524, %v513
    %v526 = vmul.f32 %v525, %v524
    %v527 = vmul.f32 0.5, %v526
    %v528 = vsub.f32 1.5, %v527
    %v529 = vmul.f32 %v524, %v528
    %vm530 = vweird.f32 %v513
    %vm531 = vweird.f32 %v524
    %vm532 = vmor %vm530, %vm531
    %v533 = vsel %vm532, %v524, %v529
    %v534 = vmul.f32 %v500, %v523
    %v535 = vmul.f32 %v501, %v533
    %v536 = vld [vmem:[%s1 + $0x198] sm:$0x1]
    %v537 = vperm.slane %v536, 0
    %v538 = vmul.f32 %v534, %v537
    %v539 = vmul.f32 %v535, %v537
    %v540 = vld [vmem:[%s1 + $0x1a0] sm:$0x1]
    %v541 = vperm.slane %v540, 0
    %v542 = vadd.f32 %v538, %v541
    %v543 = vadd.f32 %v539, %v541
    %v544 = vld [vmem:[%s1 + $0x1a8] sm:$0xff]
    %v545 = vld [vmem:[%s1 + $0x1b0] sm:$0xff]
    %v546 = vld [vmem:[%s1 + $0x1b8] sm:$0xff]
    %v547 = vld [vmem:[%s1 + $0x1c0] sm:$0xff]
    %v548 = vld [vmem:[%s1 + $0x1c8] sm:$0x1]
    %v549 = vperm.slane %v548, 0
    %v551 = vsel %vm63, %v542, 0
    %v554 = vsel %vm63, %v543, 0
    %556 = vmatpush.msra.mxu0 0.0
    %557 = vmatpush.msra.mxu0 0.0
    %558 = vmatpush.msra.mxu0 0.0
    %559 = vmatpush.msra.mxu0 0.0
    %560 = vmatpush.msra.mxu0 0.0
    %561 = vmatpush.msra.mxu0 0.0
    %562 = vmatpush.msra.mxu0 0.0
    %563 = vmatpush.msra.mxu0 0.0
    %564 = vmatpush.msra.mxu0 0.0
    %565 = vmatpush.msra.mxu0 0.0
    %566 = vmatpush.msra.mxu0 0.0
    %567 = vmatpush.msra.mxu0 0.0
    %568 = vmatpush.msra.mxu0 %v547
    %569 = vmatpush.msra.mxu0 %v546
    %570 = vmatpush.msra.mxu0 %v545
    %571 = vmatpush.msra.mxu0 %v544
    %572 = vmatmul.f32.gmra.mxu0 %v551
    %v573 = vpop.f32.mrf.mxu0
    %v574 = vadd.f32 %v549, %v573
    %575 = vmatmul.f32.gmra.mxu0 %v554
    %v576 = vpop.f32.mrf.mxu0
    %v577 = vadd.f32 %v549, %v576
    %578 = vdwg.mxu0
    %v579 = vmul.f32 %v574, 0.35355338
    %v580 = vmul.f32 %v577, 0.35355338
    %v581 = vld [vmem:[%s1 + $0x1d0] sm:$0xff]
    %v582 = vld [vmem:[%s1 + $0x1d8] sm:$0xff]
    %v583 = vld [vmem:[%s1 + $0x1e0] sm:$0xff]
    %v584 = vld [vmem:[%s1 + $0x1e8] sm:$0xff]
    %v585 = vld [vmem:[%s1 + $0x1f0] sm:$0x1]
    %v586 = vperm.slane %v585, 0
    %587 = vmatpush.msra.mxu0 0.0
    %588 = vmatpush.msra.mxu0 0.0
    %589 = vmatpush.msra.mxu0 0.0
    %590 = vmatpush.msra.mxu0 0.0
    %591 = vmatpush.msra.mxu0 0.0
    %592 = vmatpush.msra.mxu0 0.0
    %593 = vmatpush.msra.mxu0 0.0
    %594 = vmatpush.msra.mxu0 0.0
    %595 = vmatpush.msra.mxu0 0.0
    %596 = vmatpush.msra.mxu0 0.0
    %597 = vmatpush.msra.mxu0 0.0
    %598 = vmatpush.msra.mxu0 0.0
    %599 = vmatpush.msra.mxu0 %v584
    %600 = vmatpush.msra.mxu0 %v583
    %601 = vmatpush.msra.mxu0 %v582
    %602 = vmatpush.msra.mxu0 %v581
    %603 = vmatmul.f32.gmra.mxu0 %v551
    %v604 = vpop.f32.mrf.mxu0
    %v605 = vadd.f32 %v586, %v604
    %606 = vmatmul.f32.gmra.mxu0 %v554
    %v607 = vpop.f32.mrf.mxu0
    %v608 = vadd.f32 %v586, %v607
    %609 = vdwg.mxu0
    %v610 = vld [vmem:[%s1 + $0x1f8] sm:$0xff]
    %v611 = vld [vmem:[%s1 + $0x200] sm:$0xff]
    %v612 = vld [vmem:[%s1 + $0x208] sm:$0xff]
    %v613 = vld [vmem:[%s1 + $0x210] sm:$0xff]
    %v614 = vld [vmem:[%s1 + $0x218] sm:$0x1]
    %v615 = vperm.slane %v614, 0
    %616 = vmatpush.msra.mxu0 0.0
    %617 = vmatpush.msra.mxu0 0.0
    %618 = vmatpush.msra.mxu0 0.0
    %619 = vmatpush.msra.mxu0 0.0
    %620 = vmatpush.msra.mxu0 0.0
    %621 = vmatpush.msra.mxu0 0.0
    %622 = vmatpush.msra.mxu0 0.0
    %623 = vmatpush.msra.mxu0 0.0
    %624 = vmatpush.msra.mxu0 0.0
    %625 = vmatpush.msra.mxu0 0.0
    %626 = vmatpush.msra.mxu0 0.0
    %627 = vmatpush.msra.mxu0 0.0
    %628 = vmatpush.msra.mxu0 %v613
    %629 = vmatpush.msra.mxu0 %v612
    %630 = vmatpush.msra.mxu0 %v611
    %631 = vmatpush.msra.mxu0 %v610
    %632 = vmatmul.f32.gmra.mxu0 %v551
    %v633 = vpop.f32.mrf.mxu0
    %v634 = vadd.f32 %v615, %v633
    %635 = vmatmul.f32.gmra.mxu0 %v554
    %v636 = vpop.f32.mrf.mxu0
    %v637 = vadd.f32 %v615, %v636
    %638 = vdwg.mxu0
    %v639 = vmul.f32 %v579, %v605
    %v640 = vmul.f32 %v579, %v608
    %v641 = vmul.f32 %v580, %v605
    %v642 = vmul.f32 %v580, %v608
    %v644 = vsel %vm63, %v639, 0
    %v647 = vsel %vm63, %v640, 0
    %v650 = vsel %vm63, %v641, 0
    %v653 = vsel %vm63, %v642, 0
    %655 = vmatpush.msra.mxu0 0.0
    %656 = vmatpush.msra.mxu0 0.0
    %657 = vmatpush.msra.mxu0 0.0
    %658 = vmatpush.msra.mxu0 0.0
    %659 = vmatpush.msra.mxu0 0.0
    %660 = vmatpush.msra.mxu0 0.0
    %661 = vmatpush.msra.mxu0 0.0
    %662 = vmatpush.msra.mxu0 0.0
    %663 = vmatpush.msra.mxu0 0.0
    %664 = vmatpush.msra.mxu0 0.0
    %665 = vmatpush.msra.mxu0 0.0
    %666 = vmatpush.msra.mxu0 0.0
    %667 = vmatpush.msra.mxu0 %v15
    %668 = vmatpush.msra.mxu0 %v14
    %669 = vmatpush.msra.mxu0 %v13
    %670 = vmatpush.msra.mxu0 %v12
    %671 = vmatmul.f32.gmra.mxu0 %v644
    %v672 = vpop.f32.mrf.mxu0
    %v673 = vadd.f32 0.0, %v672
    %674 = vmatmul.f32.gmra.mxu0 %v647
    %v675 = vpop.f32.mrf.mxu0
    %v676 = vadd.f32 0.0, %v675
    %677 = vmatmul.f32.gmra.mxu0 %v650
    %v678 = vpop.f32.mrf.mxu0
    %v679 = vadd.f32 0.0, %v678
    %680 = vmatmul.f32.gmra.mxu0 %v653
    %v681 = vpop.f32.mrf.mxu0
    %v682 = vadd.f32 0.0, %v681
    %683 = vdwg.mxu0
    %v684 = vmax.f32 %v673, %v676
    %v685 = vsub.f32 %v673, %v684
    %v686 = vmul.f32 %v685, 1.442695
    %v687 = vpow.pop %v686
    %v688 = vsub.f32 %v676, %v684
    %v689 = vmul.f32 %v688, 1.442695
    %v690 = vpow.pop %v689
    %v691 = vadd.f32 %v687, %v690
    %v692 = vrcp.pop %v691
    %v693 = vmul.f32 %v691, %v692
    %v694 = vsub.f32 1.0, %v693
    %v695 = vmul.f32 %v692, %v694
    %v696 = vadd.f32 %v692, %v695
    %vm697 = vweird.f32 %v691
    %vm698 = vweird.f32 %v692
    %vm699 = vmor %vm697, %vm698
    %v700 = vsel %vm699, %v692, %v696
    %v701 = vand.u32 2147483647, %v691
    %vm702 = vcmp.eq.f32.partialorder %v701, 8.507059e+37
    %v703 = vand.u32 %v691, 2147483648
    %v704 = vor.u32 1.1754944e-38, %v703
    %v705 = vsel %vm702, %v704, %v700
    %v706 = vmul.f32 1.0, %v705
    %v707 = vmul.f32 %v687, %v706
    %v708 = vmul.f32 %v690, %v706
    %v709 = vmax.f32 %v679, %v682
    %v710 = vsub.f32 %v679, %v709
    %v711 = vmul.f32 %v710, 1.442695
    %v712 = vpow.pop %v711
    %v713 = vsub.f32 %v682, %v709
    %v714 = vmul.f32 %v713, 1.442695
    %v715 = vpow.pop %v714
    %v716 = vadd.f32 %v712, %v715
    %v717 = vrcp.pop %v716
    %v718 = vmul.f32 %v716, %v717
    %v719 = vsub.f32 1.0, %v718
    %v720 = vmul.f32 %v717, %v719
    %v721 = vadd.f32 %v717, %v720
    %vm722 = vweird.f32 %v716
    %vm723 = vweird.f32 %v717
    %vm724 = vmor %vm722, %vm723
    %v725 = vsel %vm724, %v717, %v721
    %v726 = vand.u32 2147483647, %v716
    %vm727 = vcmp.eq.f32.partialorder %v726, 8.507059e+37
    %v728 = vand.u32 %v716, 2147483648
    %v729 = vor.u32 1.1754944e-38, %v728
    %v730 = vsel %vm727, %v729, %v725
    %v731 = vmul.f32 1.0, %v730
    %v732 = vmul.f32 %v712, %v731
    %v733 = vmul.f32 %v715, %v731
    %v735 = vsel %vm63, %v707, 0
    %v738 = vsel %vm63, %v708, 0
    %v741 = vsel %vm63, %v732, 0
    %v744 = vsel %vm63, %v733, 0
    %746 = vmatpush.msra.mxu0 0.0
    %747 = vmatpush.msra.mxu0 0.0
    %748 = vmatpush.msra.mxu0 0.0
    %749 = vmatpush.msra.mxu0 0.0
    %750 = vmatpush.msra.mxu0 0.0
    %751 = vmatpush.msra.mxu0 0.0
    %752 = vmatpush.msra.mxu0 0.0
    %753 = vmatpush.msra.mxu0 0.0
    %754 = vmatpush.msra.mxu0 0.0
    %755 = vmatpush.msra.mxu0 0.0
    %756 = vmatpush.msra.mxu0 0.0
    %757 = vmatpush.msra.mxu0 0.0
    %758 = vmatpush.msra.mxu0 %v19
    %759 = vmatpush.msra.mxu0 %v18
    %760 = vmatpush.msra.mxu0 %v17
    %761 = vmatpush.msra.mxu0 %v16
    %762 = vmatmul.f32.gmra.mxu0 %v735
    %v763 = vpop.f32.mrf.mxu0
    %v764 = vadd.f32 0.0, %v763
    %765 = vmatmul.f32.gmra.mxu0 %v738
    %v766 = vpop.f32.mrf.mxu0
    %v767 = vadd.f32 0.0, %v766
    %768 = vmatmul.f32.gmra.mxu0 %v741
    %v769 = vpop.f32.mrf.mxu0
    %v770 = vadd.f32 0.0, %v769
    %771 = vmatmul.f32.gmra.mxu0 %v744
    %v772 = vpop.f32.mrf.mxu0
    %v773 = vadd.f32 0.0, %v772
    %774 = vdwg.mxu0
    %v775 = vmul.f32 %v764, %v634
    %v776 = vmul.f32 %v767, %v637
    %v777 = vmul.f32 %v770, %v634
    %v778 = vmul.f32 %v773, %v637
    %779 = vmatpush.msra.mxu0 0.0
    %780 = vmatpush.msra.mxu0 0.0
    %781 = vmatpush.msra.mxu0 0.0
    %782 = vmatpush.msra.mxu0 0.0
    %783 = vmatpush.msra.mxu0 0.0
    %784 = vmatpush.msra.mxu0 0.0
    %785 = vmatpush.msra.mxu0 0.0
    %786 = vmatpush.msra.mxu0 0.0
    %787 = vmatpush.msra.mxu0 0.0
    %788 = vmatpush.msra.mxu0 0.0
    %789 = vmatpush.msra.mxu0 0.0
    %790 = vmatpush.msra.mxu0 0.0
    %791 = vmatpush.msra.mxu0 %v778
    %792 = vmatpush.msra.mxu0 %v777
    %793 = vmatpush.msra.mxu0 %v776
    %794 = vmatpush.msra.mxu0 %v775
    %795 = vmatmul.f32.gmra.mxu0 %v294
    %v796 = vpop.f32.mrf.mxu0
    %v797 = vadd.f32 0.0, %v796
    %798 = vmatmul.f32.gmra.mxu0 %v297
    %v799 = vpop.f32.mrf.mxu0
    %v800 = vadd.f32 0.0, %v799
    %801 = vdwg.mxu0
    %v802 = vld [vmem:[%s1 + $0x220] sm:$0xff]
    %v803 = vld [vmem:[%s1 + $0x228] sm:$0xff]
    %v804 = vld [vmem:[%s1 + $0x230] sm:$0xff]
    %v805 = vld [vmem:[%s1 + $0x238] sm:$0xff]
    %v806 = vld [vmem:[%s1 + $0x240] sm:$0x1]
    %v807 = vperm.slane %v806, 0
    %v809 = vsel %vm63, %v797, 0
    %v812 = vsel %vm63, %v800, 0
    %814 = vmatpush.msra.mxu0 0.0
    %815 = vmatpush.msra.mxu0 0.0
    %816 = vmatpush.msra.mxu0 0.0
    %817 = vmatpush.msra.mxu0 0.0
    %818 = vmatpush.msra.mxu0 0.0
    %819 = vmatpush.msra.mxu0 0.0
    %820 = vmatpush.msra.mxu0 0.0
    %821 = vmatpush.msra.mxu0 0.0
    %822 = vmatpush.msra.mxu0 0.0
    %823 = vmatpush.msra.mxu0 0.0
    %824 = vmatpush.msra.mxu0 0.0
    %825 = vmatpush.msra.mxu0 0.0
    %826 = vmatpush.msra.mxu0 %v805
    %827 = vmatpush.msra.mxu0 %v804
    %828 = vmatpush.msra.mxu0 %v803
    %829 = vmatpush.msra.mxu0 %v802
    %830 = vmatmul.f32.gmra.mxu0 %v809
    %v831 = vpop.f32.mrf.mxu0
    %v832 = vadd.f32 %v807, %v831
    %833 = vmatmul.f32.gmra.mxu0 %v812
    %v834 = vpop.f32.mrf.mxu0
    %v835 = vadd.f32 %v807, %v834
    %836 = vdwg.mxu0
    %v837 = vadd.f32 %v542, %v832
    %v838 = vadd.f32 %v543, %v835
    %v839 = vsel %vm63, %v837, 0.0
    %840 = vadd.xlane.f32.xlu0 %v839
    %v841 = vpop.xlane.xlu0 %840
    %v842 = vsel %vm63, %v838, 0.0
    %843 = vadd.xlane.f32.xlu0 %v842
    %v844 = vpop.xlane.xlu0 %843
    %v845 = vmul.f32 %v841, %v371
    %v846 = vmul.f32 %v844, %v371
    %v847 = vsub.f32 %v837, %v845
    %v848 = vsub.f32 %v838, %v846
    %v849 = vmul.f32 %v847, %v847
    %v850 = vmul.f32 %v848, %v848
    %v851 = vsel %vm63, %v849, 0.0
    %852 = vadd.xlane.f32.xlu0 %v851
    %v853 = vpop.xlane.xlu0 %852
    %v854 = vsel %vm63, %v850, 0.0
    %855 = vadd.xlane.f32.xlu0 %v854
    %v856 = vpop.xlane.xlu0 %855
    %v857 = vmul.f32 %v853, %v371
    %v858 = vmul.f32 %v856, %v371
    %v859 = vadd.f32 %v857, 1e-05
    %v860 = vadd.f32 %v858, 1e-05
    %v861 = vrsqrt.pop %v859
    %v862 = vmul.f32 %v861, %v859
    %v863 = vmul.f32 %v862, %v861
    %v864 = vmul.f32 0.5, %v863
    %v865 = vsub.f32 1.5, %v864
    %v866 = vmul.f32 %v861, %v865
    %vm867 = vweird.f32 %v859
    %vm868 = vweird.f32 %v861
    %vm869 = vmor %vm867, %vm868
    %v870 = vsel %vm869, %v861, %v866
    %v871 = vrsqrt.pop %v860
    %v872 = vmul.f32 %v871, %v860
    %v873 = vmul.f32 %v872, %v871
    %v874 = vmul.f32 0.5, %v873
    %v875 = vsub.f32 1.5, %v874
    %v876 = vmul.f32 %v871, %v875
    %vm877 = vweird.f32 %v860
    %vm878 = vweird.f32 %v871
    %vm879 = vmor %vm877, %vm878
    %v880 = vsel %vm879, %v871, %v876
    %v881 = vmul.f32 %v847, %v870
    %v882 = vmul.f32 %v848, %v880
    %v883 = vld [vmem:[%s1 + $0x298] sm:$0x1]
    %v884 = vperm.slane %v883, 0
    %v885 = vmul.f32 %v881, %v884
    %v886 = vmul.f32 %v882, %v884
    %v887 = vld [vmem:[%s1 + $0x2a0] sm:$0x1]
    %v888 = vperm.slane %v887, 0
    %v889 = vadd.f32 %v885, %v888
    %v890 = vadd.f32 %v886, %v888
    %v891 = vld [vmem:[%s1 + $0x248] sm:$0xff]
    %v892 = vld [vmem:[%s1 + $0x250] sm:$0xff]
    %v893 = vld [vmem:[%s1 + $0x258] sm:$0xff]
    %v894 = vld [vmem:[%s1 + $0x260] sm:$0xff]
    %v895 = vld [vmem:[%s1 + $0x268] sm:$0x1]
    %v896 = vperm.slane %v895, 0
    %v898 = vsel %vm63, %v889, 0
    %v901 = vsel %vm63, %v890, 0
    %903 = vmatpush.msra.mxu0 0.0
    %904 = vmatpush.msra.mxu0 0.0
    %905 = vmatpush.msra.mxu0 0.0
    %906 = vmatpush.msra.mxu0 0.0
    %907 = vmatpush.msra.mxu0 0.0
    %908 = vmatpush.msra.mxu0 0.0
    %909 = vmatpush.msra.mxu0 0.0
    %910 = vmatpush.msra.mxu0 0.0
    %911 = vmatpush.msra.mxu0 0.0
    %912 = vmatpush.msra.mxu0 0.0
    %913 = vmatpush.msra.mxu0 0.0
    %914 = vmatpush.msra.mxu0 0.0
    %915 = vmatpush.msra.mxu0 %v894
    %916 = vmatpush.msra.mxu0 %v893
    %917 = vmatpush.msra.mxu0 %v892
    %918 = vmatpush.msra.mxu0 %v891
    %919 = vmatmul.f32.gmra.mxu0 %v898
    %v920 = vpop.f32.mrf.mxu0
    %v921 = vadd.f32 %v896, %v920
    %922 = vmatmul.f32.gmra.mxu0 %v901
    %v923 = vpop.f32.mrf.mxu0
    %v924 = vadd.f32 %v896, %v923
    %925 = vdwg.mxu0
    %v926 = vmax.f32 %v921, 0.0
    %v927 = vmax.f32 %v924, 0.0
    %v928 = vld [vmem:[%s1 + $0x270] sm:$0xff]
    %v929 = vld [vmem:[%s1 + $0x278] sm:$0xff]
    %v930 = vld [vmem:[%s1 + $0x280] sm:$0xff]
    %v931 = vld [vmem:[%s1 + $0x288] sm:$0xff]
    %v932 = vld [vmem:[%s1 + $0x290] sm:$0x1]
    %v933 = vperm.slane %v932, 0
    %v935 = vsel %vm63, %v926, 0
    %v938 = vsel %vm63, %v927, 0
    %940 = vmatpush.msra.mxu0 0.0
    %941 = vmatpush.msra.mxu0 0.0
    %942 = vmatpush.msra.mxu0 0.0
    %943 = vmatpush.msra.mxu0 0.0
    %944 = vmatpush.msra.mxu0 0.0
    %945 = vmatpush.msra.mxu0 0.0
    %946 = vmatpush.msra.mxu0 0.0
    %947 = vmatpush.msra.mxu0 0.0
    %948 = vmatpush.msra.mxu0 0.0
    %949 = vmatpush.msra.mxu0 0.0
    %950 = vmatpush.msra.mxu0 0.0
    %951 = vmatpush.msra.mxu0 0.0
    %952 = vmatpush.msra.mxu0 %v931
    %953 = vmatpush.msra.mxu0 %v930
    %954 = vmatpush.msra.mxu0 %v929
    %955 = vmatpush.msra.mxu0 %v928
    %956 = vmatmul.f32.gmra.mxu0 %v935
    %v957 = vpop.f32.mrf.mxu0
    %v958 = vadd.f32 %v933, %v957
    %959 = vmatmul.f32.gmra.mxu0 %v938
    %v960 = vpop.f32.mrf.mxu0
    %v961 = vadd.f32 %v933, %v960
    %962 = vdwg.mxu0
    %v963 = vadd.f32 %v889, %v958
    %v964 = vadd.f32 %v890, %v961
    %v965 = vsel %vm63, %v963, 0.0
    %966 = vadd.xlane.f32.xlu0 %v965
    %v967 = vpop.xlane.xlu0 %966
    %v968 = vsel %vm63, %v964, 0.0
    %969 = vadd.xlane.f32.xlu0 %v968
    %v970 = vpop.xlane.xlu0 %969
    %v971 = vmul.f32 %v967, %v371
    %v972 = vmul.f32 %v970, %v371
    %v973 = vsub.f32 %v963, %v971
    %v974 = vsub.f32 %v964, %v972
    %v975 = vmul.f32 %v973, %v973
    %v976 = vmul.f32 %v974, %v974
    %v977 = vsel %vm63, %v975, 0.0
    %978 = vadd.xlane.f32.xlu0 %v977
    %v979 = vpop.xlane.xlu0 %978
    %v980 = vsel %vm63, %v976, 0.0
    %981 = vadd.xlane.f32.xlu0 %v980
    %v982 = vpop.xlane.xlu0 %981
    %v983 = vmul.f32 %v979, %v371
    %v984 = vmul.f32 %v982, %v371
    %v985 = vadd.f32 %v983, 1e-05
    %v986 = vadd.f32 %v984, 1e-05
    %v987 = vrsqrt.pop %v985
    %v988 = vmul.f32 %v987, %v985
    %v989 = vmul.f32 %v988, %v987
    %v990 = vmul.f32 0.5, %v989
    %v991 = vsub.f32 1.5, %v990
    %v992 = vmul.f32 %v987, %v991
    %vm993 = vweird.f32 %v985
    %vm994 = vweird.f32 %v987
    %vm995 = vmor %vm993, %vm994
    %v996 = vsel %vm995, %v987, %v992
    %v997 = vrsqrt.pop %v986
    %v998 = vmul.f32 %v997, %v986
    %v999 = vmul.f32 %v998, %v997
    %v1000 = vmul.f32 0.5, %v999
    %v1001 = vsub.f32 1.5, %v1000
    %v1002 = vmul.f32 %v997, %v1001
    %vm1003 = vweird.f32 %v986
    %vm1004 = vweird.f32 %v997
    %vm1005 = vmor %vm1003, %vm1004
    %v1006 = vsel %vm1005, %v997, %v1002
    %v1007 = vmul.f32 %v973, %v996
    %v1008 = vmul.f32 %v974, %v1006
    %v1009 = vld [vmem:[%s1 + $0x2a8] sm:$0x1]
    %v1010 = vperm.slane %v1009, 0
    %v1011 = vmul.f32 %v1007, %v1010
    %v1012 = vmul.f32 %v1008, %v1010
    %v1013 = vld [vmem:[%s1 + $0x2b0] sm:$0x1]
    %v1014 = vperm.slane %v1013, 0
    %v1015 = vadd.f32 %v1011, %v1014
    %v1016 = vadd.f32 %v1012, %v1014
    %v1017 = vsel %vm63, %v1015, 0.0
    %1018 = vadd.xlane.f32.xlu0 %v1017
    %v1019 = vpop.xlane.xlu0 %1018
    %v1020 = vsel %vm63, %v1016, 0.0
    %1021 = vadd.xlane.f32.xlu0 %v1020
    %v1022 = vpop.xlane.xlu0 %1021
    %v1023 = vmul.f32 %v1019, %v371
    %v1024 = vmul.f32 %v1022, %v371
    %v1025 = vsub.f32 %v1015, %v1023
    %v1026 = vsub.f32 %v1016, %v1024
    %v1027 = vmul.f32 %v1025, %v1025
    %v1028 = vmul.f32 %v1026, %v1026
    %v1029 = vsel %vm63, %v1027, 0.0
    %1030 = vadd.xlane.f32.xlu0 %v1029
    %v1031 = vpop.xlane.xlu0 %1030
    %v1032 = vsel %vm63, %v1028, 0.0
    %1033 = vadd.xlane.f32.xlu0 %v1032
    %v1034 = vpop.xlane.xlu0 %1033
    %v1035 = vmul.f32 %v1031, %v371
    %v1036 = vmul.f32 %v1034, %v371
    %v1037 = vadd.f32 %v1035, 1e-05
    %v1038 = vadd.f32 %v1036, 1e-05
    %v1039 = vrsqrt.pop %v1037
    %v1040 = vmul.f32 %v1039, %v1037
    %v1041 = vmul.f32 %v1040, %v1039
    %v1042 = vmul.f32 0.5, %v1041
    %v1043 = vsub.f32 1.5, %v1042
    %v1044 = vmul.f32 %v1039, %v1043
    %vm1045 = vweird.f32 %v1037
    %vm1046 = vweird.f32 %v1039
    %vm1047 = vmor %vm1045, %vm1046
    %v1048 = vsel %vm1047, %v1039, %v1044
    %v1049 = vrsqrt.pop %v1038
    %v1050 = vmul.f32 %v1049, %v1038
    %v1051 = vmul.f32 %v1050, %v1049
    %v1052 = vmul.f32 0.5, %v1051
    %v1053 = vsub.f32 1.5, %v1052
    %v1054 = vmul.f32 %v1049, %v1053
    %vm1055 = vweird.f32 %v1038
    %vm1056 = vweird.f32 %v1049
    %vm1057 = vmor %vm1055, %vm1056
    %v1058 = vsel %vm1057, %v1049, %v1054
    %v1059 = vmul.f32 %v1025, %v1048
    %v1060 = vmul.f32 %v1026, %v1058
    %v1061 = vld [vmem:[%s1 + $0x2b8] sm:$0x1]
    %v1062 = vperm.slane %v1061, 0
    %v1063 = vmul.f32 %v1059, %v1062
    %v1064 = vmul.f32 %v1060, %v1062
    %v1065 = vld [vmem:[%s1 + $0x2c0] sm:$0x1]
    %v1066 = vperm.slane %v1065, 0
    %v1067 = vadd.f32 %v1063, %v1066
    %v1068 = vadd.f32 %v1064, %v1066
    %v1069 = vld [vmem:[%s1 + $0x2c8] sm:$0xff]
    %v1070 = vld [vmem:[%s1 + $0x2d0] sm:$0xff]
    %v1071 = vld [vmem:[%s1 + $0x2d8] sm:$0xff]
    %v1072 = vld [vmem:[%s1 + $0x2e0] sm:$0xff]
    %v1073 = vld [vmem:[%s1 + $0x2e8] sm:$0x1]
    %v1074 = vperm.slane %v1073, 0
    %1075 = vmatpush.msra.mxu0 0.0
    %1076 = vmatpush.msra.mxu0 0.0
    %1077 = vmatpush.msra.mxu0 0.0
    %1078 = vmatpush.msra.mxu0 0.0
    %1079 = vmatpush.msra.mxu0 0.0
    %1080 = vmatpush.msra.mxu0 0.0
    %1081 = vmatpush.msra.mxu0 0.0
    %1082 = vmatpush.msra.mxu0 0.0
    %1083 = vmatpush.msra.mxu0 0.0
    %1084 = vmatpush.msra.mxu0 0.0
    %1085 = vmatpush.msra.mxu0 0.0
    %1086 = vmatpush.msra.mxu0 0.0
    %1087 = vmatpush.msra.mxu0 %v1072
    %1088 = vmatpush.msra.mxu0 %v1071
    %1089 = vmatpush.msra.mxu0 %v1070
    %1090 = vmatpush.msra.mxu0 %v1069
    %1091 = vmatmul.f32.gmra.mxu0 %v65
    %v1092 = vpop.f32.mrf.mxu0
    %v1093 = vadd.f32 %v1074, %v1092
    %1094 = vmatmul.f32.gmra.mxu0 %v68
    %v1095 = vpop.f32.mrf.mxu0
    %v1096 = vadd.f32 %v1074, %v1095
    %1097 = vdwg.mxu0
    %v1098 = vmul.f32 %v1093, 0.35355338
    %v1099 = vmul.f32 %v1096, 0.35355338
    %v1100 = vld [vmem:[%s1 + $0x2f0] sm:$0xff]
    %v1101 = vld [vmem:[%s1 + $0x2f8] sm:$0xff]
    %v1102 = vld [vmem:[%s1 + $0x300] sm:$0xff]
    %v1103 = vld [vmem:[%s1 + $0x308] sm:$0xff]
    %v1104 = vld [vmem:[%s1 + $0x310] sm:$0x1]
    %v1105 = vperm.slane %v1104, 0
    %1106 = vmatpush.msra.mxu0 0.0
    %1107 = vmatpush.msra.mxu0 0.0
    %1108 = vmatpush.msra.mxu0 0.0
    %1109 = vmatpush.msra.mxu0 0.0
    %1110 = vmatpush.msra.mxu0 0.0
    %1111 = vmatpush.msra.mxu0 0.0
    %1112 = vmatpush.msra.mxu0 0.0
    %1113 = vmatpush.msra.mxu0 0.0
    %1114 = vmatpush.msra.mxu0 0.0
    %1115 = vmatpush.msra.mxu0 0.0
    %1116 = vmatpush.msra.mxu0 0.0
    %1117 = vmatpush.msra.mxu0 0.0
    %1118 = vmatpush.msra.mxu0 %v1103
    %1119 = vmatpush.msra.mxu0 %v1102
    %1120 = vmatpush.msra.mxu0 %v1101
    %1121 = vmatpush.msra.mxu0 %v1100
    %1122 = vmatmul.f32.gmra.mxu0 %v65
    %v1123 = vpop.f32.mrf.mxu0
    %v1124 = vadd.f32 %v1105, %v1123
    %1125 = vmatmul.f32.gmra.mxu0 %v68
    %v1126 = vpop.f32.mrf.mxu0
    %v1127 = vadd.f32 %v1105, %v1126
    %1128 = vdwg.mxu0
    %v1129 = vld [vmem:[%s1 + $0x318] sm:$0xff]
    %v1130 = vld [vmem:[%s1 + $0x320] sm:$0xff]
    %v1131 = vld [vmem:[%s1 + $0x328] sm:$0xff]
    %v1132 = vld [vmem:[%s1 + $0x330] sm:$0xff]
    %v1133 = vld [vmem:[%s1 + $0x338] sm:$0x1]
    %v1134 = vperm.slane %v1133, 0
    %1135 = vmatpush.msra.mxu0 0.0
    %1136 = vmatpush.msra.mxu0 0.0
    %1137 = vmatpush.msra.mxu0 0.0
    %1138 = vmatpush.msra.mxu0 0.0
    %1139 = vmatpush.msra.mxu0 0.0
    %1140 = vmatpush.msra.mxu0 0.0
    %1141 = vmatpush.msra.mxu0 0.0
    %1142 = vmatpush.msra.mxu0 0.0
    %1143 = vmatpush.msra.mxu0 0.0
    %1144 = vmatpush.msra.mxu0 0.0
    %1145 = vmatpush.msra.mxu0 0.0
    %1146 = vmatpush.msra.mxu0 0.0
    %1147 = vmatpush.msra.mxu0 %v1132
    %1148 = vmatpush.msra.mxu0 %v1131
    %1149 = vmatpush.msra.mxu0 %v1130
    %1150 = vmatpush.msra.mxu0 %v1129
    %1151 = vmatmul.f32.gmra.mxu0 %v65
    %v1152 = vpop.f32.mrf.mxu0
    %v1153 = vadd.f32 %v1134, %v1152
    %1154 = vmatmul.f32.gmra.mxu0 %v68
    %v1155 = vpop.f32.mrf.mxu0
    %v1156 = vadd.f32 %v1134, %v1155
    %1157 = vdwg.mxu0
    %v1158 = vmul.f32 %v1098, %v1124
    %v1159 = vmul.f32 %v1098, %v1127
    %v1160 = vmul.f32 %v1099, %v1124
    %v1161 = vmul.f32 %v1099, %v1127
    %v1163 = vsel %vm63, %v1158, 0
    %v1166 = vsel %vm63, %v1159, 0
    %v1169 = vsel %vm63, %v1160, 0
    %v1172 = vsel %vm63, %v1161, 0
    %1174 = vmatpush.msra.mxu0 0.0
    %1175 = vmatpush.msra.mxu0 0.0
    %1176 = vmatpush.msra.mxu0 0.0
    %1177 = vmatpush.msra.mxu0 0.0
    %1178 = vmatpush.msra.mxu0 0.0
    %1179 = vmatpush.msra.mxu0 0.0
    %1180 = vmatpush.msra.mxu0 0.0
    %1181 = vmatpush.msra.mxu0 0.0
    %1182 = vmatpush.msra.mxu0 0.0
    %1183 = vmatpush.msra.mxu0 0.0
    %1184 = vmatpush.msra.mxu0 0.0
    %1185 = vmatpush.msra.mxu0 0.0
    %1186 = vmatpush.msra.mxu0 %v15
    %1187 = vmatpush.msra.mxu0 %v14
    %1188 = vmatpush.msra.mxu0 %v13
    %1189 = vmatpush.msra.mxu0 %v12
    %1190 = vmatmul.f32.gmra.mxu0 %v1163
    %v1191 = vpop.f32.mrf.mxu0
    %v1192 = vadd.f32 0.0, %v1191
    %1193 = vmatmul.f32.gmra.mxu0 %v1166
    %v1194 = vpop.f32.mrf.mxu0
    %v1195 = vadd.f32 0.0, %v1194
    %1196 = vmatmul.f32.gmra.mxu0 %v1169
    %v1197 = vpop.f32.mrf.mxu0
    %v1198 = vadd.f32 0.0, %v1197
    %1199 = vmatmul.f32.gmra.mxu0 %v1172
    %v1200 = vpop.f32.mrf.mxu0
    %v1201 = vadd.f32 0.0, %v1200
    %1202 = vdwg.mxu0
    %v1203 = vmax.f32 %v1192, %v1195
    %v1204 = vsub.f32 %v1192, %v1203
    %v1205 = vmul.f32 %v1204, 1.442695
    %v1206 = vpow.pop %v1205
    %v1207 = vsub.f32 %v1195, %v1203
    %v1208 = vmul.f32 %v1207, 1.442695
    %v1209 = vpow.pop %v1208
    %v1210 = vadd.f32 %v1206, %v1209
    %v1211 = vrcp.pop %v1210
    %v1212 = vmul.f32 %v1210, %v1211
    %v1213 = vsub.f32 1.0, %v1212
    %v1214 = vmul.f32 %v1211, %v1213
    %v1215 = vadd.f32 %v1211, %v1214
    %vm1216 = vweird.f32 %v1210
    %vm1217 = vweird.f32 %v1211
    %vm1218 = vmor %vm1216, %vm1217
    %v1219 = vsel %vm1218, %v1211, %v1215
    %v1220 = vand.u32 2147483647, %v1210
    %vm1221 = vcmp.eq.f32.partialorder %v1220, 8.507059e+37
    %v1222 = vand.u32 %v1210, 2147483648
    %v1223 = vor.u32 1.1754944e-38, %v1222
    %v1224 = vsel %vm1221, %v1223, %v1219
    %v1225 = vmul.f32 1.0, %v1224
    %v1226 = vmul.f32 %v1206, %v1225
    %v1227 = vmul.f32 %v1209, %v1225
    %v1228 = vmax.f32 %v1198, %v1201
    %v1229 = vsub.f32 %v1198, %v1228
    %v1230 = vmul.f32 %v1229, 1.442695
    %v1231 = vpow.pop %v1230
    %v1232 = vsub.f32 %v1201, %v1228
    %v1233 = vmul.f32 %v1232, 1.442695
    %v1234 = vpow.pop %v1233
    %v1235 = vadd.f32 %v1231, %v1234
    %v1236 = vrcp.pop %v1235
    %v1237 = vmul.f32 %v1235, %v1236
    %v1238 = vsub.f32 1.0, %v1237
    %v1239 = vmul.f32 %v1236, %v1238
    %v1240 = vadd.f32 %v1236, %v1239
    %vm1241 = vweird.f32 %v1235
    %vm1242 = vweird.f32 %v1236
    %vm1243 = vmor %vm1241, %vm1242
    %v1244 = vsel %vm1243, %v1236, %v1240
    %v1245 = vand.u32 2147483647, %v1235
    %vm1246 = vcmp.eq.f32.partialorder %v1245, 8.507059e+37
    %v1247 = vand.u32 %v1235, 2147483648
    %v1248 = vor.u32 1.1754944e-38, %v1247
    %v1249 = vsel %vm1246, %v1248, %v1244
    %v1250 = vmul.f32 1.0, %v1249
    %v1251 = vmul.f32 %v1231, %v1250
    %v1252 = vmul.f32 %v1234, %v1250
    %v1254 = vsel %vm63, %v1226, 0
    %v1257 = vsel %vm63, %v1227, 0
    %v1260 = vsel %vm63, %v1251, 0
    %v1263 = vsel %vm63, %v1252, 0
    %1265 = vmatpush.msra.mxu0 0.0
    %1266 = vmatpush.msra.mxu0 0.0
    %1267 = vmatpush.msra.mxu0 0.0
    %1268 = vmatpush.msra.mxu0 0.0
    %1269 = vmatpush.msra.mxu0 0.0
    %1270 = vmatpush.msra.mxu0 0.0
    %1271 = vmatpush.msra.mxu0 0.0
    %1272 = vmatpush.msra.mxu0 0.0
    %1273 = vmatpush.msra.mxu0 0.0
    %1274 = vmatpush.msra.mxu0 0.0
    %1275 = vmatpush.msra.mxu0 0.0
    %1276 = vmatpush.msra.mxu0 0.0
    %1277 = vmatpush.msra.mxu0 %v19
    %1278 = vmatpush.msra.mxu0 %v18
    %1279 = vmatpush.msra.mxu0 %v17
    %1280 = vmatpush.msra.mxu0 %v16
    %1281 = vmatmul.f32.gmra.mxu0 %v1254
    %v1282 = vpop.f32.mrf.mxu0
    %v1283 = vadd.f32 0.0, %v1282
    %1284 = vmatmul.f32.gmra.mxu0 %v1257
    %v1285 = vpop.f32.mrf.mxu0
    %v1286 = vadd.f32 0.0, %v1285
    %1287 = vmatmul.f32.gmra.mxu0 %v1260
    %v1288 = vpop.f32.mrf.mxu0
    %v1289 = vadd.f32 0.0, %v1288
    %1290 = vmatmul.f32.gmra.mxu0 %v1263
    %v1291 = vpop.f32.mrf.mxu0
    %v1292 = vadd.f32 0.0, %v1291
    %1293 = vdwg.mxu0
    %v1294 = vmul.f32 %v1283, %v1153
    %v1295 = vmul.f32 %v1286, %v1156
    %v1296 = vmul.f32 %v1289, %v1153
    %v1297 = vmul.f32 %v1292, %v1156
    %1298 = vmatpush.msra.mxu0 0.0
    %1299 = vmatpush.msra.mxu0 0.0
    %1300 = vmatpush.msra.mxu0 0.0
    %1301 = vmatpush.msra.mxu0 0.0
    %1302 = vmatpush.msra.mxu0 0.0
    %1303 = vmatpush.msra.mxu0 0.0
    %1304 = vmatpush.msra.mxu0 0.0
    %1305 = vmatpush.msra.mxu0 0.0
    %1306 = vmatpush.msra.mxu0 0.0
    %1307 = vmatpush.msra.mxu0 0.0
    %1308 = vmatpush.msra.mxu0 0.0
    %1309 = vmatpush.msra.mxu0 0.0
    %1310 = vmatpush.msra.mxu0 %v1297
    %1311 = vmatpush.msra.mxu0 %v1296
    %1312 = vmatpush.msra.mxu0 %v1295
    %1313 = vmatpush.msra.mxu0 %v1294
    %1314 = vmatmul.f32.gmra.mxu0 %v294
    %v1315 = vpop.f32.mrf.mxu0
    %v1316 = vadd.f32 0.0, %v1315
    %1317 = vmatmul.f32.gmra.mxu0 %v297
    %v1318 = vpop.f32.mrf.mxu0
    %v1319 = vadd.f32 0.0, %v1318
    %1320 = vdwg.mxu0
    %v1321 = vld [vmem:[%s1 + $0x340] sm:$0xff]
    %v1322 = vld [vmem:[%s1 + $0x348] sm:$0xff]
    %v1323 = vld [vmem:[%s1 + $0x350] sm:$0xff]
    %v1324 = vld [vmem:[%s1 + $0x358] sm:$0xff]
    %v1325 = vld [vmem:[%s1 + $0x360] sm:$0x1]
    %v1326 = vperm.slane %v1325, 0
    %v1328 = vsel %vm63, %v1316, 0
    %v1331 = vsel %vm63, %v1319, 0
    %1333 = vmatpush.msra.mxu0 0.0
    %1334 = vmatpush.msra.mxu0 0.0
    %1335 = vmatpush.msra.mxu0 0.0
    %1336 = vmatpush.msra.mxu0 0.0
    %1337 = vmatpush.msra.mxu0 0.0
    %1338 = vmatpush.msra.mxu0 0.0
    %1339 = vmatpush.msra.mxu0 0.0
    %1340 = vmatpush.msra.mxu0 0.0
    %1341 = vmatpush.msra.mxu0 0.0
    %1342 = vmatpush.msra.mxu0 0.0
    %1343 = vmatpush.msra.mxu0 0.0
    %1344 = vmatpush.msra.mxu0 0.0
    %1345 = vmatpush.msra.mxu0 %v1324
    %1346 = vmatpush.msra.mxu0 %v1323
    %1347 = vmatpush.msra.mxu0 %v1322
    %1348 = vmatpush.msra.mxu0 %v1321
    %1349 = vmatmul.f32.gmra.mxu0 %v1328
    %v1350 = vpop.f32.mrf.mxu0
    %v1351 = vadd.f32 %v1326, %v1350
    %1352 = vmatmul.f32.gmra.mxu0 %v1331
    %v1353 = vpop.f32.mrf.mxu0
    %v1354 = vadd.f32 %v1326, %v1353
    %1355 = vdwg.mxu0
    %v1356 = vadd.f32 %v52, %v1351
    %v1357 = vadd.f32 %v55, %v1354
    %v1358 = vsel %vm63, %v1356, 0.0
    %1359 = vadd.xlane.f32.xlu0 %v1358
    %v1360 = vpop.xlane.xlu0 %1359
    %v1361 = vsel %vm63, %v1357, 0.0
    %1362 = vadd.xlane.f32.xlu0 %v1361
    %v1363 = vpop.xlane.xlu0 %1362
    %v1364 = vmul.f32 %v1360, %v371
    %v1365 = vmul.f32 %v1363, %v371
    %v1366 = vsub.f32 %v1356, %v1364
    %v1367 = vsub.f32 %v1357, %v1365
    %v1368 = vmul.f32 %v1366, %v1366
    %v1369 = vmul.f32 %v1367, %v1367
    %v1370 = vsel %vm63, %v1368, 0.0
    %1371 = vadd.xlane.f32.xlu0 %v1370
    %v1372 = vpop.xlane.xlu0 %1371
    %v1373 = vsel %vm63, %v1369, 0.0
    %1374 = vadd.xlane.f32.xlu0 %v1373
    %v1375 = vpop.xlane.xlu0 %1374
    %v1376 = vmul.f32 %v1372, %v371
    %v1377 = vmul.f32 %v1375, %v371
    %v1378 = vadd.f32 %v1376, 1e-05
    %v1379 = vadd.f32 %v1377, 1e-05
    %v1380 = vrsqrt.pop %v1378
    %v1381 = vmul.f32 %v1380, %v1378
    %v1382 = vmul.f32 %v1381, %v1380
    %v1383 = vmul.f32 0.5, %v1382
    %v1384 = vsub.f32 1.5, %v1383
    %v1385 = vmul.f32 %v1380, %v1384
    %vm1386 = vweird.f32 %v1378
    %vm1387 = vweird.f32 %v1380
    %vm1388 = vmor %vm1386, %vm1387
    %v1389 = vsel %vm1388, %v1380, %v1385
    %v1390 = vrsqrt.pop %v1379
    %v1391 = vmul.f32 %v1390, %v1379
    %v1392 = vmul.f32 %v1391, %v1390
    %v1393 = vmul.f32 0.5, %v1392
    %v1394 = vsub.f32 1.5, %v1393
    %v1395 = vmul.f32 %v1390, %v1394
    %vm1396 = vweird.f32 %v1379
    %vm1397 = vweird.f32 %v1390
    %vm1398 = vmor %vm1396, %vm1397
    %v1399 = vsel %vm1398, %v1390, %v1395
    %v1400 = vmul.f32 %v1366, %v1389
    %v1401 = vmul.f32 %v1367, %v1399
    %v1402 = vld [vmem:[%s1 + $0x458] sm:$0x1]
    %v1403 = vperm.slane %v1402, 0
    %v1404 = vmul.f32 %v1400, %v1403
    %v1405 = vmul.f32 %v1401, %v1403
    %v1406 = vld [vmem:[%s1 + $0x460] sm:$0x1]
    %v1407 = vperm.slane %v1406, 0
    %v1408 = vadd.f32 %v1404, %v1407
    %v1409 = vadd.f32 %v1405, %v1407
    %v1410 = vld [vmem:[%s1 + $0x368] sm:$0xff]
    %v1411 = vld [vmem:[%s1 + $0x370] sm:$0xff]
    %v1412 = vld [vmem:[%s1 + $0x378] sm:$0xff]
    %v1413 = vld [vmem:[%s1 + $0x380] sm:$0xff]
    %v1414 = vld [vmem:[%s1 + $0x388] sm:$0x1]
    %v1415 = vperm.slane %v1414, 0
    %v1417 = vsel %vm63, %v1408, 0
    %v1420 = vsel %vm63, %v1409, 0
    %1422 = vmatpush.msra.mxu0 0.0
    %1423 = vmatpush.msra.mxu0 0.0
    %1424 = vmatpush.msra.mxu0 0.0
    %1425 = vmatpush.msra.mxu0 0.0
    %1426 = vmatpush.msra.mxu0 0.0
    %1427 = vmatpush.msra.mxu0 0.0
    %1428 = vmatpush.msra.mxu0 0.0
    %1429 = vmatpush.msra.mxu0 0.0
    %1430 = vmatpush.msra.mxu0 0.0
    %1431 = vmatpush.msra.mxu0 0.0
    %1432 = vmatpush.msra.mxu0 0.0
    %1433 = vmatpush.msra.mxu0 0.0
    %1434 = vmatpush.msra.mxu0 %v1413
    %1435 = vmatpush.msra.mxu0 %v1412
    %1436 = vmatpush.msra.mxu0 %v1411
    %1437 = vmatpush.msra.mxu0 %v1410
    %1438 = vmatmul.f32.gmra.mxu0 %v1417
    %v1439 = vpop.f32.mrf.mxu0
    %v1440 = vadd.f32 %v1415, %v1439
    %1441 = vmatmul.f32.gmra.mxu0 %v1420
    %v1442 = vpop.f32.mrf.mxu0
    %v1443 = vadd.f32 %v1415, %v1442
    %1444 = vdwg.mxu0
    %v1445 = vmul.f32 %v1440, 0.35355338
    %v1446 = vmul.f32 %v1443, 0.35355338
    %v1447 = vld [vmem:[%s1 + $0x390] sm:$0xff]
    %v1448 = vld [vmem:[%s1 + $0x398] sm:$0xff]
    %v1449 = vld [vmem:[%s1 + $0x3a0] sm:$0xff]
    %v1450 = vld [vmem:[%s1 + $0x3a8] sm:$0xff]
    %v1451 = vld [vmem:[%s1 + $0x3b0] sm:$0x1]
    %v1452 = vperm.slane %v1451, 0
    %v1454 = vsel %vm63, %v1067, 0
    %v1457 = vsel %vm63, %v1068, 0
    %1459 = vmatpush.msra.mxu0 0.0
    %1460 = vmatpush.msra.mxu0 0.0
    %1461 = vmatpush.msra.mxu0 0.0
    %1462 = vmatpush.msra.mxu0 0.0
    %1463 = vmatpush.msra.mxu0 0.0
    %1464 = vmatpush.msra.mxu0 0.0
    %1465 = vmatpush.msra.mxu0 0.0
    %1466 = vmatpush.msra.mxu0 0.0
    %1467 = vmatpush.msra.mxu0 0.0
    %1468 = vmatpush.msra.mxu0 0.0
    %1469 = vmatpush.msra.mxu0 0.0
    %1470 = vmatpush.msra.mxu0 0.0
    %1471 = vmatpush.msra.mxu0 %v1450
    %1472 = vmatpush.msra.mxu0 %v1449
    %1473 = vmatpush.msra.mxu0 %v1448
    %1474 = vmatpush.msra.mxu0 %v1447
    %1475 = vmatmul.f32.gmra.mxu0 %v1454
    %v1476 = vpop.f32.mrf.mxu0
    %v1477 = vadd.f32 %v1452, %v1476
    %1478 = vmatmul.f32.gmra.mxu0 %v1457
    %v1479 = vpop.f32.mrf.mxu0
    %v1480 = vadd.f32 %v1452, %v1479
    %1481 = vdwg.mxu0
    %v1482 = vld [vmem:[%s1 + $0x3b8] sm:$0xff]
    %v1483 = vld [vmem:[%s1 + $0x3c0] sm:$0xff]
    %v1484 = vld [vmem:[%s1 + $0x3c8] sm:$0xff]
    %v1485 = vld [vmem:[%s1 + $0x3d0] sm:$0xff]
    %v1486 = vld [vmem:[%s1 + $0x3d8] sm:$0x1]
    %v1487 = vperm.slane %v1486, 0
    %1488 = vmatpush.msra.mxu0 0.0
    %1489 = vmatpush.msra.mxu0 0.0
    %1490 = vmatpush.msra.mxu0 0.0
    %1491 = vmatpush.msra.mxu0 0.0
    %1492 = vmatpush.msra.mxu0 0.0
    %1493 = vmatpush.msra.mxu0 0.0
    %1494 = vmatpush.msra.mxu0 0.0
    %1495 = vmatpush.msra.mxu0 0.0
    %1496 = vmatpush.msra.mxu0 0.0
    %1497 = vmatpush.msra.mxu0 0.0
    %1498 = vmatpush.msra.mxu0 0.0
    %1499 = vmatpush.msra.mxu0 0.0
    %1500 = vmatpush.msra.mxu0 %v1485
    %1501 = vmatpush.msra.mxu0 %v1484
    %1502 = vmatpush.msra.mxu0 %v1483
    %1503 = vmatpush.msra.mxu0 %v1482
    %1504 = vmatmul.f32.gmra.mxu0 %v1454
    %v1505 = vpop.f32.mrf.mxu0
    %v1506 = vadd.f32 %v1487, %v1505
    %1507 = vmatmul.f32.gmra.mxu0 %v1457
    %v1508 = vpop.f32.mrf.mxu0
    %v1509 = vadd.f32 %v1487, %v1508
    %1510 = vdwg.mxu0
    %v1511 = vmul.f32 %v1445, %v1477
    %v1512 = vmul.f32 %v1445, %v1480
    %v1513 = vmul.f32 %v1446, %v1477
    %v1514 = vmul.f32 %v1446, %v1480
    %v1516 = vsel %vm63, %v1511, 0
    %v1519 = vsel %vm63, %v1512, 0
    %v1522 = vsel %vm63, %v1513, 0
    %v1525 = vsel %vm63, %v1514, 0
    %1527 = vmatpush.msra.mxu0 0.0
    %1528 = vmatpush.msra.mxu0 0.0
    %1529 = vmatpush.msra.mxu0 0.0
    %1530 = vmatpush.msra.mxu0 0.0
    %1531 = vmatpush.msra.mxu0 0.0
    %1532 = vmatpush.msra.mxu0 0.0
    %1533 = vmatpush.msra.mxu0 0.0
    %1534 = vmatpush.msra.mxu0 0.0
    %1535 = vmatpush.msra.mxu0 0.0
    %1536 = vmatpush.msra.mxu0 0.0
    %1537 = vmatpush.msra.mxu0 0.0
    %1538 = vmatpush.msra.mxu0 0.0
    %1539 = vmatpush.msra.mxu0 %v15
    %1540 = vmatpush.msra.mxu0 %v14
    %1541 = vmatpush.msra.mxu0 %v13
    %1542 = vmatpush.msra.mxu0 %v12
    %1543 = vmatmul.f32.gmra.mxu0 %v1516
    %v1544 = vpop.f32.mrf.mxu0
    %v1545 = vadd.f32 0.0, %v1544
    %1546 = vmatmul.f32.gmra.mxu0 %v1519
    %v1547 = vpop.f32.mrf.mxu0
    %v1548 = vadd.f32 0.0, %v1547
    %1549 = vmatmul.f32.gmra.mxu0 %v1522
    %v1550 = vpop.f32.mrf.mxu0
    %v1551 = vadd.f32 0.0, %v1550
    %1552 = vmatmul.f32.gmra.mxu0 %v1525
    %v1553 = vpop.f32.mrf.mxu0
    %v1554 = vadd.f32 0.0, %v1553
    %1555 = vdwg.mxu0
    %v1556 = vmax.f32 %v1545, %v1548
    %v1557 = vsub.f32 %v1545, %v1556
    %v1558 = vmul.f32 %v1557, 1.442695
    %v1559 = vpow.pop %v1558
    %v1560 = vsub.f32 %v1548, %v1556
    %v1561 = vmul.f32 %v1560, 1.442695
    %v1562 = vpow.pop %v1561
    %v1563 = vadd.f32 %v1559, %v1562
    %v1564 = vrcp.pop %v1563
    %v1565 = vmul.f32 %v1563, %v1564
    %v1566 = vsub.f32 1.0, %v1565
    %v1567 = vmul.f32 %v1564, %v1566
    %v1568 = vadd.f32 %v1564, %v1567
    %vm1569 = vweird.f32 %v1563
    %vm1570 = vweird.f32 %v1564
    %vm1571 = vmor %vm1569, %vm1570
    %v1572 = vsel %vm1571, %v1564, %v1568
    %v1573 = vand.u32 2147483647, %v1563
    %vm1574 = vcmp.eq.f32.partialorder %v1573, 8.507059e+37
    %v1575 = vand.u32 %v1563, 2147483648
    %v1576 = vor.u32 1.1754944e-38, %v1575
    %v1577 = vsel %vm1574, %v1576, %v1572
    %v1578 = vmul.f32 1.0, %v1577
    %v1579 = vmul.f32 %v1559, %v1578
    %v1580 = vmul.f32 %v1562, %v1578
    %v1581 = vmax.f32 %v1551, %v1554
    %v1582 = vsub.f32 %v1551, %v1581
    %v1583 = vmul.f32 %v1582, 1.442695
    %v1584 = vpow.pop %v1583
    %v1585 = vsub.f32 %v1554, %v1581
    %v1586 = vmul.f32 %v1585, 1.442695
    %v1587 = vpow.pop %v1586
    %v1588 = vadd.f32 %v1584, %v1587
    %v1589 = vrcp.pop %v1588
    %v1590 = vmul.f32 %v1588, %v1589
    %v1591 = vsub.f32 1.0, %v1590
    %v1592 = vmul.f32 %v1589, %v1591
    %v1593 = vadd.f32 %v1589, %v1592
    %vm1594 = vweird.f32 %v1588
    %vm1595 = vweird.f32 %v1589
    %vm1596 = vmor %vm1594, %vm1595
    %v1597 = vsel %vm1596, %v1589, %v1593
    %v1598 = vand.u32 2147483647, %v1588
    %vm1599 = vcmp.eq.f32.partialorder %v1598, 8.507059e+37
    %v1600 = vand.u32 %v1588, 2147483648
    %v1601 = vor.u32 1.1754944e-38, %v1600
    %v1602 = vsel %vm1599, %v1601, %v1597
    %v1603 = vmul.f32 1.0, %v1602
    %v1604 = vmul.f32 %v1584, %v1603
    %v1605 = vmul.f32 %v1587, %v1603
    %v1607 = vsel %vm63, %v1579, 0
    %v1610 = vsel %vm63, %v1580, 0
    %v1613 = vsel %vm63, %v1604, 0
    %v1616 = vsel %vm63, %v1605, 0
    %1618 = vmatpush.msra.mxu0 0.0
    %1619 = vmatpush.msra.mxu0 0.0
    %1620 = vmatpush.msra.mxu0 0.0
    %1621 = vmatpush.msra.mxu0 0.0
    %1622 = vmatpush.msra.mxu0 0.0
    %1623 = vmatpush.msra.mxu0 0.0
    %1624 = vmatpush.msra.mxu0 0.0
    %1625 = vmatpush.msra.mxu0 0.0
    %1626 = vmatpush.msra.mxu0 0.0
    %1627 = vmatpush.msra.mxu0 0.0
    %1628 = vmatpush.msra.mxu0 0.0
    %1629 = vmatpush.msra.mxu0 0.0
    %1630 = vmatpush.msra.mxu0 %v19
    %1631 = vmatpush.msra.mxu0 %v18
    %1632 = vmatpush.msra.mxu0 %v17
    %1633 = vmatpush.msra.mxu0 %v16
    %1634 = vmatmul.f32.gmra.mxu0 %v1607
    %v1635 = vpop.f32.mrf.mxu0
    %v1636 = vadd.f32 0.0, %v1635
    %1637 = vmatmul.f32.gmra.mxu0 %v1610
    %v1638 = vpop.f32.mrf.mxu0
    %v1639 = vadd.f32 0.0, %v1638
    %1640 = vmatmul.f32.gmra.mxu0 %v1613
    %v1641 = vpop.f32.mrf.mxu0
    %v1642 = vadd.f32 0.0, %v1641
    %1643 = vmatmul.f32.gmra.mxu0 %v1616
    %v1644 = vpop.f32.mrf.mxu0
    %v1645 = vadd.f32 0.0, %v1644
    %1646 = vdwg.mxu0
    %v1647 = vmul.f32 %v1636, %v1506
    %v1648 = vmul.f32 %v1639, %v1509
    %v1649 = vmul.f32 %v1642, %v1506
    %v1650 = vmul.f32 %v1645, %v1509
    %1651 = vmatpush.msra.mxu0 0.0
    %1652 = vmatpush.msra.mxu0 0.0
    %1653 = vmatpush.msra.mxu0 0.0
    %1654 = vmatpush.msra.mxu0 0.0
    %1655 = vmatpush.msra.mxu0 0.0
    %1656 = vmatpush.msra.mxu0 0.0
    %1657 = vmatpush.msra.mxu0 0.0
    %1658 = vmatpush.msra.mxu0 0.0
    %1659 = vmatpush.msra.mxu0 0.0
    %1660 = vmatpush.msra.mxu0 0.0
    %1661 = vmatpush.msra.mxu0 0.0
    %1662 = vmatpush.msra.mxu0 0.0
    %1663 = vmatpush.msra.mxu0 %v1650
    %1664 = vmatpush.msra.mxu0 %v1649
    %1665 = vmatpush.msra.mxu0 %v1648
    %1666 = vmatpush.msra.mxu0 %v1647
    %1667 = vmatmul.f32.gmra.mxu0 %v294
    %v1668 = vpop.f32.mrf.mxu0
    %v1669 = vadd.f32 0.0, %v1668
    %1670 = vmatmul.f32.gmra.mxu0 %v297
    %v1671 = vpop.f32.mrf.mxu0
    %v1672 = vadd.f32 0.0, %v1671
    %1673 = vdwg.mxu0
    %v1674 = vld [vmem:[%s1 + $0x3e0] sm:$0xff]
    %v1675 = vld [vmem:[%s1 + $0x3e8] sm:$0xff]
    %v1676 = vld [vmem:[%s1 + $0x3f0] sm:$0xff]
    %v1677 = vld [vmem:[%s1 + $0x3f8] sm:$0xff]
    %v1678 = vld [vmem:[%s1 + $0x400] sm:$0x1]
    %v1679 = vperm.slane %v1678, 0
    %v1681 = vsel %vm63, %v1669, 0
    %v1684 = vsel %vm63, %v1672, 0
    %1686 = vmatpush.msra.mxu0 0.0
    %1687 = vmatpush.msra.mxu0 0.0
    %1688 = vmatpush.msra.mxu0 0.0
    %1689 = vmatpush.msra.mxu0 0.0
    %1690 = vmatpush.msra.mxu0 0.0
    %1691 = vmatpush.msra.mxu0 0.0
    %1692 = vmatpush.msra.mxu0 0.0
    %1693 = vmatpush.msra.mxu0 0.0
    %1694 = vmatpush.msra.mxu0 0.0
    %1695 = vmatpush.msra.mxu0 0.0
    %1696 = vmatpush.msra.mxu0 0.0
    %1697 = vmatpush.msra.mxu0 0.0
    %1698 = vmatpush.msra.mxu0 %v1677
    %1699 = vmatpush.msra.mxu0 %v1676
    %1700 = vmatpush.msra.mxu0 %v1675
    %1701 = vmatpush.msra.mxu0 %v1674
    %1702 = vmatmul.f32.gmra.mxu0 %v1681
    %v1703 = vpop.f32.mrf.mxu0
    %v1704 = vadd.f32 %v1679, %v1703
    %1705 = vmatmul.f32.gmra.mxu0 %v1684
    %v1706 = vpop.f32.mrf.mxu0
    %v1707 = vadd.f32 %v1679, %v1706
    %1708 = vdwg.mxu0
    %v1709 = vadd.f32 %v1408, %v1704
    %v1710 = vadd.f32 %v1409, %v1707
    %v1711 = vsel %vm63, %v1709, 0.0
    %1712 = vadd.xlane.f32.xlu0 %v1711
    %v1713 = vpop.xlane.xlu0 %1712
    %v1714 = vsel %vm63, %v1710, 0.0
    %1715 = vadd.xlane.f32.xlu0 %v1714
    %v1716 = vpop.xlane.xlu0 %1715
    %v1717 = vmul.f32 %v1713, %v371
    %v1718 = vmul.f32 %v1716, %v371
    %v1719 = vsub.f32 %v1709, %v1717
    %v1720 = vsub.f32 %v1710, %v1718
    %v1721 = vmul.f32 %v1719, %v1719
    %v1722 = vmul.f32 %v1720, %v1720
    %v1723 = vsel %vm63, %v1721, 0.0
    %1724 = vadd.xlane.f32.xlu0 %v1723
    %v1725 = vpop.xlane.xlu0 %1724
    %v1726 = vsel %vm63, %v1722, 0.0
    %1727 = vadd.xlane.f32.xlu0 %v1726
    %v1728 = vpop.xlane.xlu0 %1727
    %v1729 = vmul.f32 %v1725, %v371
    %v1730 = vmul.f32 %v1728, %v371
    %v1731 = vadd.f32 %v1729, 1e-05
    %v1732 = vadd.f32 %v1730, 1e-05
    %v1733 = vrsqrt.pop %v1731
    %v1734 = vmul.f32 %v1733, %v1731
    %v1735 = vmul.f32 %v1734, %v1733
    %v1736 = vmul.f32 0.5, %v1735
    %v1737 = vsub.f32 1.5, %v1736
    %v1738 = vmul.f32 %v1733, %v1737
    %vm1739 = vweird.f32 %v1731
    %vm1740 = vweird.f32 %v1733
    %vm1741 = vmor %vm1739, %vm1740
    %v1742 = vsel %vm1741, %v1733, %v1738
    %v1743 = vrsqrt.pop %v1732
    %v1744 = vmul.f32 %v1743, %v1732
    %v1745 = vmul.f32 %v1744, %v1743
    %v1746 = vmul.f32 0.5, %v1745
    %v1747 = vsub.f32 1.5, %v1746
    %v1748 = vmul.f32 %v1743, %v1747
    %vm1749 = vweird.f32 %v1732
    %vm1750 = vweird.f32 %v1743
    %vm1751 = vmor %vm1749, %vm1750
    %v1752 = vsel %vm1751, %v1743, %v1748
    %v1753 = vmul.f32 %v1719, %v1742
    %v1754 = vmul.f32 %v1720, %v1752
    %v1755 = vld [vmem:[%s1 + $0x468] sm:$0x1]
    %v1756 = vperm.slane %v1755, 0
    %v1757 = vmul.f32 %v1753, %v1756
    %v1758 = vmul.f32 %v1754, %v1756
    %v1759 = vld [vmem:[%s1 + $0x470] sm:$0x1]
    %v1760 = vperm.slane %v1759, 0
    %v1761 = vadd.f32 %v1757, %v1760
    %v1762 = vadd.f32 %v1758, %v1760
    %v1763 = vld [vmem:[%s1 + $0x408] sm:$0xff]
    %v1764 = vld [vmem:[%s1 + $0x410] sm:$0xff]
    %v1765 = vld [vmem:[%s1 + $0x418] sm:$0xff]
    %v1766 = vld [vmem:[%s1 + $0x420] sm:$0xff]
    %v1767 = vld [vmem:[%s1 + $0x428] sm:$0x1]
    %v1768 = vperm.slane %v1767, 0
    %v1770 = vsel %vm63, %v1761, 0
    %v1773 = vsel %vm63, %v1762, 0
    %1775 = vmatpush.msra.mxu0 0.0
    %1776 = vmatpush.msra.mxu0 0.0
    %1777 = vmatpush.msra.mxu0 0.0
    %1778 = vmatpush.msra.mxu0 0.0
    %1779 = vmatpush.msra.mxu0 0.0
    %1780 = vmatpush.msra.mxu0 0.0
    %1781 = vmatpush.msra.mxu0 0.0
    %1782 = vmatpush.msra.mxu0 0.0
    %1783 = vmatpush.msra.mxu0 0.0
    %1784 = vmatpush.msra.mxu0 0.0
    %1785 = vmatpush.msra.mxu0 0.0
    %1786 = vmatpush.msra.mxu0 0.0
    %1787 = vmatpush.msra.mxu0 %v1766
    %1788 = vmatpush.msra.mxu0 %v1765
    %1789 = vmatpush.msra.mxu0 %v1764
    %1790 = vmatpush.msra.mxu0 %v1763
    %1791 = vmatmul.f32.gmra.mxu0 %v1770
    %v1792 = vpop.f32.mrf.mxu0
    %v1793 = vadd.f32 %v1768, %v1792
    %1794 = vmatmul.f32.gmra.mxu0 %v1773
    %v1795 = vpop.f32.mrf.mxu0
    %v1796 = vadd.f32 %v1768, %v1795
    %1797 = vdwg.mxu0
    %v1798 = vmax.f32 %v1793, 0.0
    %v1799 = vmax.f32 %v1796, 0.0
    %v1800 = vld [vmem:[%s1 + $0x430] sm:$0xff]
    %v1801 = vld [vmem:[%s1 + $0x438] sm:$0xff]
    %v1802 = vld [vmem:[%s1 + $0x440] sm:$0xff]
    %v1803 = vld [vmem:[%s1 + $0x448] sm:$0xff]
    %v1804 = vld [vmem:[%s1 + $0x450] sm:$0x1]
    %v1805 = vperm.slane %v1804, 0
    %v1807 = vsel %vm63, %v1798, 0
    %v1810 = vsel %vm63, %v1799, 0
    %1812 = vmatpush.msra.mxu0 0.0
    %1813 = vmatpush.msra.mxu0 0.0
    %1814 = vmatpush.msra.mxu0 0.0
    %1815 = vmatpush.msra.mxu0 0.0
    %1816 = vmatpush.msra.mxu0 0.0
    %1817 = vmatpush.msra.mxu0 0.0
    %1818 = vmatpush.msra.mxu0 0.0
    %1819 = vmatpush.msra.mxu0 0.0
    %1820 = vmatpush.msra.mxu0 0.0
    %1821 = vmatpush.msra.mxu0 0.0
    %1822 = vmatpush.msra.mxu0 0.0
    %1823 = vmatpush.msra.mxu0 0.0
    %1824 = vmatpush.msra.mxu0 %v1803
    %1825 = vmatpush.msra.mxu0 %v1802
    %1826 = vmatpush.msra.mxu0 %v1801
    %1827 = vmatpush.msra.mxu0 %v1800
    %1828 = vmatmul.f32.gmra.mxu0 %v1807
    %v1829 = vpop.f32.mrf.mxu0
    %v1830 = vadd.f32 %v1805, %v1829
    %1831 = vmatmul.f32.gmra.mxu0 %v1810
    %v1832 = vpop.f32.mrf.mxu0
    %v1833 = vadd.f32 %v1805, %v1832
    %1834 = vdwg.mxu0
    %v1835 = vadd.f32 %v1761, %v1830
    %v1836 = vadd.f32 %v1762, %v1833
    %v1837 = vsel %vm63, %v1835, 0.0
    %1838 = vadd.xlane.f32.xlu0 %v1837
    %v1839 = vpop.xlane.xlu0 %1838
    %v1840 = vsel %vm63, %v1836, 0.0
    %1841 = vadd.xlane.f32.xlu0 %v1840
    %v1842 = vpop.xlane.xlu0 %1841
    %v1843 = vmul.f32 %v1839, %v371
    %v1844 = vmul.f32 %v1842, %v371
    %v1845 = vsub.f32 %v1835, %v1843
    %v1846 = vsub.f32 %v1836, %v1844
    %v1847 = vmul.f32 %v1845, %v1845
    %v1848 = vmul.f32 %v1846, %v1846
    %v1849 = vsel %vm63, %v1847, 0.0
    %1850 = vadd.xlane.f32.xlu0 %v1849
    %v1851 = vpop.xlane.xlu0 %1850
    %v1852 = vsel %vm63, %v1848, 0.0
    %1853 = vadd.xlane.f32.xlu0 %v1852
    %v1854 = vpop.xlane.xlu0 %1853
    %v1855 = vmul.f32 %v1851, %v371
    %v1856 = vmul.f32 %v1854, %v371
    %v1857 = vadd.f32 %v1855, 1e-05
    %v1858 = vadd.f32 %v1856, 1e-05
    %v1859 = vrsqrt.pop %v1857
    %v1860 = vmul.f32 %v1859, %v1857
    %v1861 = vmul.f32 %v1860, %v1859
    %v1862 = vmul.f32 0.5, %v1861
    %v1863 = vsub.f32 1.5, %v1862
    %v1864 = vmul.f32 %v1859, %v1863
    %vm1865 = vweird.f32 %v1857
    %vm1866 = vweird.f32 %v1859
    %vm1867 = vmor %vm1865, %vm1866
    %v1868 = vsel %vm1867, %v1859, %v1864
    %v1869 = vrsqrt.pop %v1858
    %v1870 = vmul.f32 %v1869, %v1858
    %v1871 = vmul.f32 %v1870, %v1869
    %v1872 = vmul.f32 0.5, %v1871
    %v1873 = vsub.f32 1.5, %v1872
    %v1874 = vmul.f32 %v1869, %v1873
    %vm1875 = vweird.f32 %v1858
    %vm1876 = vweird.f32 %v1869
    %vm1877 = vmor %vm1875, %vm1876
    %v1878 = vsel %vm1877, %v1869, %v1874
    %v1879 = vmul.f32 %v1845, %v1868
    %v1880 = vmul.f32 %v1846, %v1878
    %v1881 = vld [vmem:[%s1 + $0x478] sm:$0x1]
    %v1882 = vperm.slane %v1881, 0
    %v1883 = vmul.f32 %v1879, %v1882
    %v1884 = vmul.f32 %v1880, %v1882
    %v1885 = vld [vmem:[%s1 + $0x480] sm:$0x1]
    %v1886 = vperm.slane %v1885, 0
    %v1887 = vadd.f32 %v1883, %v1886
    %v1888 = vadd.f32 %v1884, %v1886
    %v1889 = vld [vmem:[%s1 + $0x488] sm:$0xff]
    %v1890 = vld [vmem:[%s1 + $0x490] sm:$0xff]
    %v1891 = vld [vmem:[%s1 + $0x498] sm:$0xff]
    %v1892 = vld [vmem:[%s1 + $0x4a0] sm:$0xff]
    %v1893 = vld [vmem:[%s1 + $0x4a8] sm:$0x1]
    %v1894 = vperm.slane %v1893, 0
    %v1896 = vsel %vm63, %v1887, 0
    %v1899 = vsel %vm63, %v1888, 0
    %1901 = vmatpush.msra.mxu0 0.0
    %1902 = vmatpush.msra.mxu0 0.0
    %1903 = vmatpush.msra.mxu0 0.0
    %1904 = vmatpush.msra.mxu0 0.0
    %1905 = vmatpush.msra.mxu0 0.0
    %1906 = vmatpush.msra.mxu0 0.0
    %1907 = vmatpush.msra.mxu0 0.0
    %1908 = vmatpush.msra.mxu0 0.0
    %1909 = vmatpush.msra.mxu0 0.0
    %1910 = vmatpush.msra.mxu0 0.0
    %1911 = vmatpush.msra.mxu0 0.0
    %1912 = vmatpush.msra.mxu0 0.0
    %1913 = vmatpush.msra.mxu0 %v1892
    %1914 = vmatpush.msra.mxu0 %v1891
    %1915 = vmatpush.msra.mxu0 %v1890
    %1916 = vmatpush.msra.mxu0 %v1889
    %1917 = vmatmul.f32.gmra.mxu0 %v1896
    %v1918 = vpop.f32.mrf.mxu0
    %v1919 = vadd.f32 %v1894, %v1918
    %1920 = vmatmul.f32.gmra.mxu0 %v1899
    %v1921 = vpop.f32.mrf.mxu0
    %v1922 = vadd.f32 %v1894, %v1921
    %1923 = vdwg.mxu0
    %v1924 = vmul.f32 %v1919, 0.35355338
    %v1925 = vmul.f32 %v1922, 0.35355338
    %v1926 = vld [vmem:[%s1 + $0x4b0] sm:$0xff]
    %v1927 = vld [vmem:[%s1 + $0x4b8] sm:$0xff]
    %v1928 = vld [vmem:[%s1 + $0x4c0] sm:$0xff]
    %v1929 = vld [vmem:[%s1 + $0x4c8] sm:$0xff]
    %v1930 = vld [vmem:[%s1 + $0x4d0] sm:$0x1]
    %v1931 = vperm.slane %v1930, 0
    %1932 = vmatpush.msra.mxu0 0.0
    %1933 = vmatpush.msra.mxu0 0.0
    %1934 = vmatpush.msra.mxu0 0.0
    %1935 = vmatpush.msra.mxu0 0.0
    %1936 = vmatpush.msra.mxu0 0.0
    %1937 = vmatpush.msra.mxu0 0.0
    %1938 = vmatpush.msra.mxu0 0.0
    %1939 = vmatpush.msra.mxu0 0.0
    %1940 = vmatpush.msra.mxu0 0.0
    %1941 = vmatpush.msra.mxu0 0.0
    %1942 = vmatpush.msra.mxu0 0.0
    %1943 = vmatpush.msra.mxu0 0.0
    %1944 = vmatpush.msra.mxu0 %v1929
    %1945 = vmatpush.msra.mxu0 %v1928
    %1946 = vmatpush.msra.mxu0 %v1927
    %1947 = vmatpush.msra.mxu0 %v1926
    %1948 = vmatmul.f32.gmra.mxu0 %v1896
    %v1949 = vpop.f32.mrf.mxu0
    %v1950 = vadd.f32 %v1931, %v1949
    %1951 = vmatmul.f32.gmra.mxu0 %v1899
    %v1952 = vpop.f32.mrf.mxu0
    %v1953 = vadd.f32 %v1931, %v1952
    %1954 = vdwg.mxu0
    %v1955 = vld [vmem:[%s1 + $0x4d8] sm:$0xff]
    %v1956 = vld [vmem:[%s1 + $0x4e0] sm:$0xff]
    %v1957 = vld [vmem:[%s1 + $0x4e8] sm:$0xff]
    %v1958 = vld [vmem:[%s1 + $0x4f0] sm:$0xff]
    %v1959 = vld [vmem:[%s1 + $0x4f8] sm:$0x1]
    %v1960 = vperm.slane %v1959, 0
    %1961 = vmatpush.msra.mxu0 0.0
    %1962 = vmatpush.msra.mxu0 0.0
    %1963 = vmatpush.msra.mxu0 0.0
    %1964 = vmatpush.msra.mxu0 0.0
    %1965 = vmatpush.msra.mxu0 0.0
    %1966 = vmatpush.msra.mxu0 0.0
    %1967 = vmatpush.msra.mxu0 0.0
    %1968 = vmatpush.msra.mxu0 0.0
    %1969 = vmatpush.msra.mxu0 0.0
    %1970 = vmatpush.msra.mxu0 0.0
    %1971 = vmatpush.msra.mxu0 0.0
    %1972 = vmatpush.msra.mxu0 0.0
    %1973 = vmatpush.msra.mxu0 %v1958
    %1974 = vmatpush.msra.mxu0 %v1957
    %1975 = vmatpush.msra.mxu0 %v1956
    %1976 = vmatpush.msra.mxu0 %v1955
    %1977 = vmatmul.f32.gmra.mxu0 %v1896
    %v1978 = vpop.f32.mrf.mxu0
    %v1979 = vadd.f32 %v1960, %v1978
    %1980 = vmatmul.f32.gmra.mxu0 %v1899
    %v1981 = vpop.f32.mrf.mxu0
    %v1982 = vadd.f32 %v1960, %v1981
    %1983 = vdwg.mxu0
    %v1984 = vmul.f32 %v1924, %v1950
    %v1985 = vmul.f32 %v1924, %v1953
    %v1986 = vmul.f32 %v1925, %v1950
    %v1987 = vmul.f32 %v1925, %v1953
    %v1989 = vsel %vm63, %v1984, 0
    %v1992 = vsel %vm63, %v1985, 0
    %v1995 = vsel %vm63, %v1986, 0
    %v1998 = vsel %vm63, %v1987, 0
    %2000 = vmatpush.msra.mxu0 0.0
    %2001 = vmatpush.msra.mxu0 0.0
    %2002 = vmatpush.msra.mxu0 0.0
    %2003 = vmatpush.msra.mxu0 0.0
    %2004 = vmatpush.msra.mxu0 0.0
    %2005 = vmatpush.msra.mxu0 0.0
    %2006 = vmatpush.msra.mxu0 0.0
    %2007 = vmatpush.msra.mxu0 0.0
    %2008 = vmatpush.msra.mxu0 0.0
    %2009 = vmatpush.msra.mxu0 0.0
    %2010 = vmatpush.msra.mxu0 0.0
    %2011 = vmatpush.msra.mxu0 0.0
    %2012 = vmatpush.msra.mxu0 %v15
    %2013 = vmatpush.msra.mxu0 %v14
    %2014 = vmatpush.msra.mxu0 %v13
    %2015 = vmatpush.msra.mxu0 %v12
    %2016 = vmatmul.f32.gmra.mxu0 %v1989
    %v2017 = vpop.f32.mrf.mxu0
    %v2018 = vadd.f32 0.0, %v2017
    %2019 = vmatmul.f32.gmra.mxu0 %v1992
    %v2020 = vpop.f32.mrf.mxu0
    %v2021 = vadd.f32 0.0, %v2020
    %2022 = vmatmul.f32.gmra.mxu0 %v1995
    %v2023 = vpop.f32.mrf.mxu0
    %v2024 = vadd.f32 0.0, %v2023
    %2025 = vmatmul.f32.gmra.mxu0 %v1998
    %v2026 = vpop.f32.mrf.mxu0
    %v2027 = vadd.f32 0.0, %v2026
    %2028 = vdwg.mxu0
    %v2029 = vmax.f32 %v2018, %v2021
    %v2030 = vsub.f32 %v2018, %v2029
    %v2031 = vmul.f32 %v2030, 1.442695
    %v2032 = vpow.pop %v2031
    %v2033 = vsub.f32 %v2021, %v2029
    %v2034 = vmul.f32 %v2033, 1.442695
    %v2035 = vpow.pop %v2034
    %v2036 = vadd.f32 %v2032, %v2035
    %v2037 = vrcp.pop %v2036
    %v2038 = vmul.f32 %v2036, %v2037
    %v2039 = vsub.f32 1.0, %v2038
    %v2040 = vmul.f32 %v2037, %v2039
    %v2041 = vadd.f32 %v2037, %v2040
    %vm2042 = vweird.f32 %v2036
    %vm2043 = vweird.f32 %v2037
    %vm2044 = vmor %vm2042, %vm2043
    %v2045 = vsel %vm2044, %v2037, %v2041
    %v2046 = vand.u32 2147483647, %v2036
    %vm2047 = vcmp.eq.f32.partialorder %v2046, 8.507059e+37
    %v2048 = vand.u32 %v2036, 2147483648
    %v2049 = vor.u32 1.1754944e-38, %v2048
    %v2050 = vsel %vm2047, %v2049, %v2045
    %v2051 = vmul.f32 1.0, %v2050
    %v2052 = vmul.f32 %v2032, %v2051
    %v2053 = vmul.f32 %v2035, %v2051
    %v2054 = vmax.f32 %v2024, %v2027
    %v2055 = vsub.f32 %v2024, %v2054
    %v2056 = vmul.f32 %v2055, 1.442695
    %v2057 = vpow.pop %v2056
    %v2058 = vsub.f32 %v2027, %v2054
    %v2059 = vmul.f32 %v2058, 1.442695
    %v2060 = vpow.pop %v2059
    %v2061 = vadd.f32 %v2057, %v2060
    %v2062 = vrcp.pop %v2061
    %v2063 = vmul.f32 %v2061, %v2062
    %v2064 = vsub.f32 1.0, %v2063
    %v2065 = vmul.f32 %v2062, %v2064
    %v2066 = vadd.f32 %v2062, %v2065
    %vm2067 = vweird.f32 %v2061
    %vm2068 = vweird.f32 %v2062
    %vm2069 = vmor %vm2067, %vm2068
    %v2070 = vsel %vm2069, %v2062, %v2066
    %v2071 = vand.u32 2147483647, %v2061
    %vm2072 = vcmp.eq.f32.partialorder %v2071, 8.507059e+37
    %v2073 = vand.u32 %v2061, 2147483648
    %v2074 = vor.u32 1.1754944e-38, %v2073
    %v2075 = vsel %vm2072, %v2074, %v2070
    %v2076 = vmul.f32 1.0, %v2075
    %v2077 = vmul.f32 %v2057, %v2076
    %v2078 = vmul.f32 %v2060, %v2076
    %v2080 = vsel %vm63, %v2052, 0
    %v2083 = vsel %vm63, %v2053, 0
    %v2086 = vsel %vm63, %v2077, 0
    %v2089 = vsel %vm63, %v2078, 0
    %2091 = vmatpush.msra.mxu0 0.0
    %2092 = vmatpush.msra.mxu0 0.0
    %2093 = vmatpush.msra.mxu0 0.0
    %2094 = vmatpush.msra.mxu0 0.0
    %2095 = vmatpush.msra.mxu0 0.0
    %2096 = vmatpush.msra.mxu0 0.0
    %2097 = vmatpush.msra.mxu0 0.0
    %2098 = vmatpush.msra.mxu0 0.0
    %2099 = vmatpush.msra.mxu0 0.0
    %2100 = vmatpush.msra.mxu0 0.0
    %2101 = vmatpush.msra.mxu0 0.0
    %2102 = vmatpush.msra.mxu0 0.0
    %2103 = vmatpush.msra.mxu0 %v19
    %2104 = vmatpush.msra.mxu0 %v18
    %2105 = vmatpush.msra.mxu0 %v17
    %2106 = vmatpush.msra.mxu0 %v16
    %2107 = vmatmul.f32.gmra.mxu0 %v2080
    %v2108 = vpop.f32.mrf.mxu0
    %v2109 = vadd.f32 0.0, %v2108
    %2110 = vmatmul.f32.gmra.mxu0 %v2083
    %v2111 = vpop.f32.mrf.mxu0
    %v2112 = vadd.f32 0.0, %v2111
    %2113 = vmatmul.f32.gmra.mxu0 %v2086
    %v2114 = vpop.f32.mrf.mxu0
    %v2115 = vadd.f32 0.0, %v2114
    %2116 = vmatmul.f32.gmra.mxu0 %v2089
    %v2117 = vpop.f32.mrf.mxu0
    %v2118 = vadd.f32 0.0, %v2117
    %2119 = vdwg.mxu0
    %v2120 = vmul.f32 %v2109, %v1979
    %v2121 = vmul.f32 %v2112, %v1982
    %v2122 = vmul.f32 %v2115, %v1979
    %v2123 = vmul.f32 %v2118, %v1982
    %2124 = vmatpush.msra.mxu0 0.0
    %2125 = vmatpush.msra.mxu0 0.0
    %2126 = vmatpush.msra.mxu0 0.0
    %2127 = vmatpush.msra.mxu0 0.0
    %2128 = vmatpush.msra.mxu0 0.0
    %2129 = vmatpush.msra.mxu0 0.0
    %2130 = vmatpush.msra.mxu0 0.0
    %2131 = vmatpush.msra.mxu0 0.0
    %2132 = vmatpush.msra.mxu0 0.0
    %2133 = vmatpush.msra.mxu0 0.0
    %2134 = vmatpush.msra.mxu0 0.0
    %2135 = vmatpush.msra.mxu0 0.0
    %2136 = vmatpush.msra.mxu0 %v2123
    %2137 = vmatpush.msra.mxu0 %v2122
    %2138 = vmatpush.msra.mxu0 %v2121
    %2139 = vmatpush.msra.mxu0 %v2120
    %2140 = vmatmul.f32.gmra.mxu0 %v294
    %v2141 = vpop.f32.mrf.mxu0
    %v2142 = vadd.f32 0.0, %v2141
    %2143 = vmatmul.f32.gmra.mxu0 %v297
    %v2144 = vpop.f32.mrf.mxu0
    %v2145 = vadd.f32 0.0, %v2144
    %2146 = vdwg.mxu0
    %v2147 = vld [vmem:[%s1 + $0x500] sm:$0xff]
    %v2148 = vld [vmem:[%s1 + $0x508] sm:$0xff]
    %v2149 = vld [vmem:[%s1 + $0x510] sm:$0xff]
    %v2150 = vld [vmem:[%s1 + $0x518] sm:$0xff]
    %v2151 = vld [vmem:[%s1 + $0x520] sm:$0x1]
    %v2152 = vperm.slane %v2151, 0
    %v2154 = vsel %vm63, %v2142, 0
    %v2157 = vsel %vm63, %v2145, 0
    %2159 = vmatpush.msra.mxu0 0.0
    %2160 = vmatpush.msra.mxu0 0.0
    %2161 = vmatpush.msra.mxu0 0.0
    %2162 = vmatpush.msra.mxu0 0.0
    %2163 = vmatpush.msra.mxu0 0.0
    %2164 = vmatpush.msra.mxu0 0.0
    %2165 = vmatpush.msra.mxu0 0.0
    %2166 = vmatpush.msra.mxu0 0.0
    %2167 = vmatpush.msra.mxu0 0.0
    %2168 = vmatpush.msra.mxu0 0.0
    %2169 = vmatpush.msra.mxu0 0.0
    %2170 = vmatpush.msra.mxu0 0.0
    %2171 = vmatpush.msra.mxu0 %v2150
    %2172 = vmatpush.msra.mxu0 %v2149
    %2173 = vmatpush.msra.mxu0 %v2148
    %2174 = vmatpush.msra.mxu0 %v2147
    %2175 = vmatmul.f32.gmra.mxu0 %v2154
    %v2176 = vpop.f32.mrf.mxu0
    %v2177 = vadd.f32 %v2152, %v2176
    %2178 = vmatmul.f32.gmra.mxu0 %v2157
    %v2179 = vpop.f32.mrf.mxu0
    %v2180 = vadd.f32 %v2152, %v2179
    %2181 = vdwg.mxu0
    %v2182 = vadd.f32 %v1887, %v2177
    %v2183 = vadd.f32 %v1888, %v2180
    %v2184 = vsel %vm63, %v2182, 0.0
    %2185 = vadd.xlane.f32.xlu0 %v2184
    %v2186 = vpop.xlane.xlu0 %2185
    %v2187 = vsel %vm63, %v2183, 0.0
    %2188 = vadd.xlane.f32.xlu0 %v2187
    %v2189 = vpop.xlane.xlu0 %2188
    %v2190 = vmul.f32 %v2186, %v371
    %v2191 = vmul.f32 %v2189, %v371
    %v2192 = vsub.f32 %v2182, %v2190
    %v2193 = vsub.f32 %v2183, %v2191
    %v2194 = vmul.f32 %v2192, %v2192
    %v2195 = vmul.f32 %v2193, %v2193
    %v2196 = vsel %vm63, %v2194, 0.0
    %2197 = vadd.xlane.f32.xlu0 %v2196
    %v2198 = vpop.xlane.xlu0 %2197
    %v2199 = vsel %vm63, %v2195, 0.0
    %2200 = vadd.xlane.f32.xlu0 %v2199
    %v2201 = vpop.xlane.xlu0 %2200
    %v2202 = vmul.f32 %v2198, %v371
    %v2203 = vmul.f32 %v2201, %v371
    %v2204 = vadd.f32 %v2202, 1e-05
    %v2205 = vadd.f32 %v2203, 1e-05
    %v2206 = vrsqrt.pop %v2204
    %v2207 = vmul.f32 %v2206, %v2204
    %v2208 = vmul.f32 %v2207, %v2206
    %v2209 = vmul.f32 0.5, %v2208
    %v2210 = vsub.f32 1.5, %v2209
    %v2211 = vmul.f32 %v2206, %v2210
    %vm2212 = vweird.f32 %v2204
    %vm2213 = vweird.f32 %v2206
    %vm2214 = vmor %vm2212, %vm2213
    %v2215 = vsel %vm2214, %v2206, %v2211
    %v2216 = vrsqrt.pop %v2205
    %v2217 = vmul.f32 %v2216, %v2205
    %v2218 = vmul.f32 %v2217, %v2216
    %v2219 = vmul.f32 0.5, %v2218
    %v2220 = vsub.f32 1.5, %v2219
    %v2221 = vmul.f32 %v2216, %v2220
    %vm2222 = vweird.f32 %v2205
    %vm2223 = vweird.f32 %v2216
    %vm2224 = vmor %vm2222, %vm2223
    %v2225 = vsel %vm2224, %v2216, %v2221
    %v2226 = vmul.f32 %v2192, %v2215
    %v2227 = vmul.f32 %v2193, %v2225
    %v2228 = vld [vmem:[%s1 + $0x618] sm:$0x1]
    %v2229 = vperm.slane %v2228, 0
    %v2230 = vmul.f32 %v2226, %v2229
    %v2231 = vmul.f32 %v2227, %v2229
    %v2232 = vld [vmem:[%s1 + $0x620] sm:$0x1]
    %v2233 = vperm.slane %v2232, 0
    %v2234 = vadd.f32 %v2230, %v2233
    %v2235 = vadd.f32 %v2231, %v2233
    %v2236 = vld [vmem:[%s1 + $0x528] sm:$0xff]
    %v2237 = vld [vmem:[%s1 + $0x530] sm:$0xff]
    %v2238 = vld [vmem:[%s1 + $0x538] sm:$0xff]
    %v2239 = vld [vmem:[%s1 + $0x540] sm:$0xff]
    %v2240 = vld [vmem:[%s1 + $0x548] sm:$0x1]
    %v2241 = vperm.slane %v2240, 0
    %v2243 = vsel %vm63, %v2234, 0
    %v2246 = vsel %vm63, %v2235, 0
    %2248 = vmatpush.msra.mxu0 0.0
    %2249 = vmatpush.msra.mxu0 0.0
    %2250 = vmatpush.msra.mxu0 0.0
    %2251 = vmatpush.msra.mxu0 0.0
    %2252 = vmatpush.msra.mxu0 0.0
    %2253 = vmatpush.msra.mxu0 0.0
    %2254 = vmatpush.msra.mxu0 0.0
    %2255 = vmatpush.msra.mxu0 0.0
    %2256 = vmatpush.msra.mxu0 0.0
    %2257 = vmatpush.msra.mxu0 0.0
    %2258 = vmatpush.msra.mxu0 0.0
    %2259 = vmatpush.msra.mxu0 0.0
    %2260 = vmatpush.msra.mxu0 %v2239
    %2261 = vmatpush.msra.mxu0 %v2238
    %2262 = vmatpush.msra.mxu0 %v2237
    %2263 = vmatpush.msra.mxu0 %v2236
    %2264 = vmatmul.f32.gmra.mxu0 %v2243
    %v2265 = vpop.f32.mrf.mxu0
    %v2266 = vadd.f32 %v2241, %v2265
    %2267 = vmatmul.f32.gmra.mxu0 %v2246
    %v2268 = vpop.f32.mrf.mxu0
    %v2269 = vadd.f32 %v2241, %v2268
    %2270 = vdwg.mxu0
    %v2271 = vmul.f32 %v2266, 0.35355338
    %v2272 = vmul.f32 %v2269, 0.35355338
    %v2273 = vld [vmem:[%s1 + $0x550] sm:$0xff]
    %v2274 = vld [vmem:[%s1 + $0x558] sm:$0xff]
    %v2275 = vld [vmem:[%s1 + $0x560] sm:$0xff]
    %v2276 = vld [vmem:[%s1 + $0x568] sm:$0xff]
    %v2277 = vld [vmem:[%s1 + $0x570] sm:$0x1]
    %v2278 = vperm.slane %v2277, 0
    %2279 = vmatpush.msra.mxu0 0.0
    %2280 = vmatpush.msra.mxu0 0.0
    %2281 = vmatpush.msra.mxu0 0.0
    %2282 = vmatpush.msra.mxu0 0.0
    %2283 = vmatpush.msra.mxu0 0.0
    %2284 = vmatpush.msra.mxu0 0.0
    %2285 = vmatpush.msra.mxu0 0.0
    %2286 = vmatpush.msra.mxu0 0.0
    %2287 = vmatpush.msra.mxu0 0.0
    %2288 = vmatpush.msra.mxu0 0.0
    %2289 = vmatpush.msra.mxu0 0.0
    %2290 = vmatpush.msra.mxu0 0.0
    %2291 = vmatpush.msra.mxu0 %v2276
    %2292 = vmatpush.msra.mxu0 %v2275
    %2293 = vmatpush.msra.mxu0 %v2274
    %2294 = vmatpush.msra.mxu0 %v2273
    %2295 = vmatmul.f32.gmra.mxu0 %v1454
    %v2296 = vpop.f32.mrf.mxu0
    %v2297 = vadd.f32 %v2278, %v2296
    %2298 = vmatmul.f32.gmra.mxu0 %v1457
    %v2299 = vpop.f32.mrf.mxu0
    %v2300 = vadd.f32 %v2278, %v2299
    %2301 = vdwg.mxu0
    %v2302 = vld [vmem:[%s1 + $0x578] sm:$0xff]
    %v2303 = vld [vmem:[%s1 + $0x580] sm:$0xff]
    %v2304 = vld [vmem:[%s1 + $0x588] sm:$0xff]
    %v2305 = vld [vmem:[%s1 + $0x590] sm:$0xff]
    %v2306 = vld [vmem:[%s1 + $0x598] sm:$0x1]
    %v2307 = vperm.slane %v2306, 0
    %2308 = vmatpush.msra.mxu0 0.0
    %2309 = vmatpush.msra.mxu0 0.0
    %2310 = vmatpush.msra.mxu0 0.0
    %2311 = vmatpush.msra.mxu0 0.0
    %2312 = vmatpush.msra.mxu0 0.0
    %2313 = vmatpush.msra.mxu0 0.0
    %2314 = vmatpush.msra.mxu0 0.0
    %2315 = vmatpush.msra.mxu0 0.0
    %2316 = vmatpush.msra.mxu0 0.0
    %2317 = vmatpush.msra.mxu0 0.0
    %2318 = vmatpush.msra.mxu0 0.0
    %2319 = vmatpush.msra.mxu0 0.0
    %2320 = vmatpush.msra.mxu0 %v2305
    %2321 = vmatpush.msra.mxu0 %v2304
    %2322 = vmatpush.msra.mxu0 %v2303
    %2323 = vmatpush.msra.mxu0 %v2302
    %2324 = vmatmul.f32.gmra.mxu0 %v1454
    %v2325 = vpop.f32.mrf.mxu0
    %v2326 = vadd.f32 %v2307, %v2325
    %2327 = vmatmul.f32.gmra.mxu0 %v1457
    %v2328 = vpop.f32.mrf.mxu0
    %v2329 = vadd.f32 %v2307, %v2328
    %2330 = vdwg.mxu0
    %v2331 = vmul.f32 %v2271, %v2297
    %v2332 = vmul.f32 %v2271, %v2300
    %v2333 = vmul.f32 %v2272, %v2297
    %v2334 = vmul.f32 %v2272, %v2300
    %v2336 = vsel %vm63, %v2331, 0
    %v2339 = vsel %vm63, %v2332, 0
    %v2342 = vsel %vm63, %v2333, 0
    %v2345 = vsel %vm63, %v2334, 0
    %2347 = vmatpush.msra.mxu0 0.0
    %2348 = vmatpush.msra.mxu0 0.0
    %2349 = vmatpush.msra.mxu0 0.0
    %2350 = vmatpush.msra.mxu0 0.0
    %2351 = vmatpush.msra.mxu0 0.0
    %2352 = vmatpush.msra.mxu0 0.0
    %2353 = vmatpush.msra.mxu0 0.0
    %2354 = vmatpush.msra.mxu0 0.0
    %2355 = vmatpush.msra.mxu0 0.0
    %2356 = vmatpush.msra.mxu0 0.0
    %2357 = vmatpush.msra.mxu0 0.0
    %2358 = vmatpush.msra.mxu0 0.0
    %2359 = vmatpush.msra.mxu0 %v15
    %2360 = vmatpush.msra.mxu0 %v14
    %2361 = vmatpush.msra.mxu0 %v13
    %2362 = vmatpush.msra.mxu0 %v12
    %2363 = vmatmul.f32.gmra.mxu0 %v2336
    %v2364 = vpop.f32.mrf.mxu0
    %v2365 = vadd.f32 0.0, %v2364
    %2366 = vmatmul.f32.gmra.mxu0 %v2339
    %v2367 = vpop.f32.mrf.mxu0
    %v2368 = vadd.f32 0.0, %v2367
    %2369 = vmatmul.f32.gmra.mxu0 %v2342
    %v2370 = vpop.f32.mrf.mxu0
    %v2371 = vadd.f32 0.0, %v2370
    %2372 = vmatmul.f32.gmra.mxu0 %v2345
    %v2373 = vpop.f32.mrf.mxu0
    %v2374 = vadd.f32 0.0, %v2373
    %2375 = vdwg.mxu0
    %v2376 = vmax.f32 %v2365, %v2368
    %v2377 = vsub.f32 %v2365, %v2376
    %v2378 = vmul.f32 %v2377, 1.442695
    %v2379 = vpow.pop %v2378
    %v2380 = vsub.f32 %v2368, %v2376
    %v2381 = vmul.f32 %v2380, 1.442695
    %v2382 = vpow.pop %v2381
    %v2383 = vadd.f32 %v2379, %v2382
    %v2384 = vrcp.pop %v2383
    %v2385 = vmul.f32 %v2383, %v2384
    %v2386 = vsub.f32 1.0, %v2385
    %v2387 = vmul.f32 %v2384, %v2386
    %v2388 = vadd.f32 %v2384, %v2387
    %vm2389 = vweird.f32 %v2383
    %vm2390 = vweird.f32 %v2384
    %vm2391 = vmor %vm2389, %vm2390
    %v2392 = vsel %vm2391, %v2384, %v2388
    %v2393 = vand.u32 2147483647, %v2383
    %vm2394 = vcmp.eq.f32.partialorder %v2393, 8.507059e+37
    %v2395 = vand.u32 %v2383, 2147483648
    %v2396 = vor.u32 1.1754944e-38, %v2395
    %v2397 = vsel %vm2394, %v2396, %v2392
    %v2398 = vmul.f32 1.0, %v2397
    %v2399 = vmul.f32 %v2379, %v2398
    %v2400 = vmul.f32 %v2382, %v2398
    %v2401 = vmax.f32 %v2371, %v2374
    %v2402 = vsub.f32 %v2371, %v2401
    %v2403 = vmul.f32 %v2402, 1.442695
    %v2404 = vpow.pop %v2403
    %v2405 = vsub.f32 %v2374, %v2401
    %v2406 = vmul.f32 %v2405, 1.442695
    %v2407 = vpow.pop %v2406
    %v2408 = vadd.f32 %v2404, %v2407
    %v2409 = vrcp.pop %v2408
    %v2410 = vmul.f32 %v2408, %v2409
    %v2411 = vsub.f32 1.0, %v2410
    %v2412 = vmul.f32 %v2409, %v2411
    %v2413 = vadd.f32 %v2409, %v2412
    %vm2414 = vweird.f32 %v2408
    %vm2415 = vweird.f32 %v2409
    %vm2416 = vmor %vm2414, %vm2415
    %v2417 = vsel %vm2416, %v2409, %v2413
    %v2418 = vand.u32 2147483647, %v2408
    %vm2419 = vcmp.eq.f32.partialorder %v2418, 8.507059e+37
    %v2420 = vand.u32 %v2408, 2147483648
    %v2421 = vor.u32 1.1754944e-38, %v2420
    %v2422 = vsel %vm2419, %v2421, %v2417
    %v2423 = vmul.f32 1.0, %v2422
    %v2424 = vmul.f32 %v2404, %v2423
    %v2425 = vmul.f32 %v2407, %v2423
    %v2427 = vsel %vm63, %v2399, 0
    %v2430 = vsel %vm63, %v2400, 0
    %v2433 = vsel %vm63, %v2424, 0
    %v2436 = vsel %vm63, %v2425, 0
    %2438 = vmatpush.msra.mxu0 0.0
    %2439 = vmatpush.msra.mxu0 0.0
    %2440 = vmatpush.msra.mxu0 0.0
    %2441 = vmatpush.msra.mxu0 0.0
    %2442 = vmatpush.msra.mxu0 0.0
    %2443 = vmatpush.msra.mxu0 0.0
    %2444 = vmatpush.msra.mxu0 0.0
    %2445 = vmatpush.msra.mxu0 0.0
    %2446 = vmatpush.msra.mxu0 0.0
    %2447 = vmatpush.msra.mxu0 0.0
    %2448 = vmatpush.msra.mxu0 0.0
    %2449 = vmatpush.msra.mxu0 0.0
    %2450 = vmatpush.msra.mxu0 %v19
    %2451 = vmatpush.msra.mxu0 %v18
    %2452 = vmatpush.msra.mxu0 %v17
    %2453 = vmatpush.msra.mxu0 %v16
    %2454 = vmatmul.f32.gmra.mxu0 %v2427
    %v2455 = vpop.f32.mrf.mxu0
    %v2456 = vadd.f32 0.0, %v2455
    %2457 = vmatmul.f32.gmra.mxu0 %v2430
    %v2458 = vpop.f32.mrf.mxu0
    %v2459 = vadd.f32 0.0, %v2458
    %2460 = vmatmul.f32.gmra.mxu0 %v2433
    %v2461 = vpop.f32.mrf.mxu0
    %v2462 = vadd.f32 0.0, %v2461
    %2463 = vmatmul.f32.gmra.mxu0 %v2436
    %v2464 = vpop.f32.mrf.mxu0
    %v2465 = vadd.f32 0.0, %v2464
    %2466 = vdwg.mxu0
    %v2467 = vmul.f32 %v2456, %v2326
    %v2468 = vmul.f32 %v2459, %v2329
    %v2469 = vmul.f32 %v2462, %v2326
    %v2470 = vmul.f32 %v2465, %v2329
    %2471 = vmatpush.msra.mxu0 0.0
    %2472 = vmatpush.msra.mxu0 0.0
    %2473 = vmatpush.msra.mxu0 0.0
    %2474 = vmatpush.msra.mxu0 0.0
    %2475 = vmatpush.msra.mxu0 0.0
    %2476 = vmatpush.msra.mxu0 0.0
    %2477 = vmatpush.msra.mxu0 0.0
    %2478 = vmatpush.msra.mxu0 0.0
    %2479 = vmatpush.msra.mxu0 0.0
    %2480 = vmatpush.msra.mxu0 0.0
    %2481 = vmatpush.msra.mxu0 0.0
    %2482 = vmatpush.msra.mxu0 0.0
    %2483 = vmatpush.msra.mxu0 %v2470
    %2484 = vmatpush.msra.mxu0 %v2469
    %2485 = vmatpush.msra.mxu0 %v2468
    %2486 = vmatpush.msra.mxu0 %v2467
    %2487 = vmatmul.f32.gmra.mxu0 %v294
    %v2488 = vpop.f32.mrf.mxu0
    %v2489 = vadd.f32 0.0, %v2488
    %2490 = vmatmul.f32.gmra.mxu0 %v297
    %v2491 = vpop.f32.mrf.mxu0
    %v2492 = vadd.f32 0.0, %v2491
    %2493 = vdwg.mxu0
    %v2494 = vld [vmem:[%s1 + $0x5a0] sm:$0xff]
    %v2495 = vld [vmem:[%s1 + $0x5a8] sm:$0xff]
    %v2496 = vld [vmem:[%s1 + $0x5b0] sm:$0xff]
    %v2497 = vld [vmem:[%s1 + $0x5b8] sm:$0xff]
    %v2498 = vld [vmem:[%s1 + $0x5c0] sm:$0x1]
    %v2499 = vperm.slane %v2498, 0
    %v2501 = vsel %vm63, %v2489, 0
    %v2504 = vsel %vm63, %v2492, 0
    %2506 = vmatpush.msra.mxu0 0.0
    %2507 = vmatpush.msra.mxu0 0.0
    %2508 = vmatpush.msra.mxu0 0.0
    %2509 = vmatpush.msra.mxu0 0.0
    %2510 = vmatpush.msra.mxu0 0.0
    %2511 = vmatpush.msra.mxu0 0.0
    %2512 = vmatpush.msra.mxu0 0.0
    %2513 = vmatpush.msra.mxu0 0.0
    %2514 = vmatpush.msra.mxu0 0.0
    %2515 = vmatpush.msra.mxu0 0.0
    %2516 = vmatpush.msra.mxu0 0.0
    %2517 = vmatpush.msra.mxu0 0.0
    %2518 = vmatpush.msra.mxu0 %v2497
    %2519 = vmatpush.msra.mxu0 %v2496
    %2520 = vmatpush.msra.mxu0 %v2495
    %2521 = vmatpush.msra.mxu0 %v2494
    %2522 = vmatmul.f32.gmra.mxu0 %v2501
    %v2523 = vpop.f32.mrf.mxu0
    %v2524 = vadd.f32 %v2499, %v2523
    %2525 = vmatmul.f32.gmra.mxu0 %v2504
    %v2526 = vpop.f32.mrf.mxu0
    %v2527 = vadd.f32 %v2499, %v2526
    %2528 = vdwg.mxu0
    %v2529 = vadd.f32 %v2234, %v2524
    %v2530 = vadd.f32 %v2235, %v2527
    %v2531 = vsel %vm63, %v2529, 0.0
    %2532 = vadd.xlane.f32.xlu0 %v2531
    %v2533 = vpop.xlane.xlu0 %2532
    %v2534 = vsel %vm63, %v2530, 0.0
    %2535 = vadd.xlane.f32.xlu0 %v2534
    %v2536 = vpop.xlane.xlu0 %2535
    %v2537 = vmul.f32 %v2533, %v371
    %v2538 = vmul.f32 %v2536, %v371
    %v2539 = vsub.f32 %v2529, %v2537
    %v2540 = vsub.f32 %v2530, %v2538
    %v2541 = vmul.f32 %v2539, %v2539
    %v2542 = vmul.f32 %v2540, %v2540
    %v2543 = vsel %vm63, %v2541, 0.0
    %2544 = vadd.xlane.f32.xlu0 %v2543
    %v2545 = vpop.xlane.xlu0 %2544
    %v2546 = vsel %vm63, %v2542, 0.0
    %2547 = vadd.xlane.f32.xlu0 %v2546
    %v2548 = vpop.xlane.xlu0 %2547
    %v2549 = vmul.f32 %v2545, %v371
    %v2550 = vmul.f32 %v2548, %v371
    %v2551 = vadd.f32 %v2549, 1e-05
    %v2552 = vadd.f32 %v2550, 1e-05
    %v2553 = vrsqrt.pop %v2551
    %v2554 = vmul.f32 %v2553, %v2551
    %v2555 = vmul.f32 %v2554, %v2553
    %v2556 = vmul.f32 0.5, %v2555
    %v2557 = vsub.f32 1.5, %v2556
    %v2558 = vmul.f32 %v2553, %v2557
    %vm2559 = vweird.f32 %v2551
    %vm2560 = vweird.f32 %v2553
    %vm2561 = vmor %vm2559, %vm2560
    %v2562 = vsel %vm2561, %v2553, %v2558
    %v2563 = vrsqrt.pop %v2552
    %v2564 = vmul.f32 %v2563, %v2552
    %v2565 = vmul.f32 %v2564, %v2563
    %v2566 = vmul.f32 0.5, %v2565
    %v2567 = vsub.f32 1.5, %v2566
    %v2568 = vmul.f32 %v2563, %v2567
    %vm2569 = vweird.f32 %v2552
    %vm2570 = vweird.f32 %v2563
    %vm2571 = vmor %vm2569, %vm2570
    %v2572 = vsel %vm2571, %v2563, %v2568
    %v2573 = vmul.f32 %v2539, %v2562
    %v2574 = vmul.f32 %v2540, %v2572
    %v2575 = vld [vmem:[%s1 + $0x628] sm:$0x1]
    %v2576 = vperm.slane %v2575, 0
    %v2577 = vmul.f32 %v2573, %v2576
    %v2578 = vmul.f32 %v2574, %v2576
    %v2579 = vld [vmem:[%s1 + $0x630] sm:$0x1]
    %v2580 = vperm.slane %v2579, 0
    %v2581 = vadd.f32 %v2577, %v2580
    %v2582 = vadd.f32 %v2578, %v2580
    %v2583 = vld [vmem:[%s1 + $0x5c8] sm:$0xff]
    %v2584 = vld [vmem:[%s1 + $0x5d0] sm:$0xff]
    %v2585 = vld [vmem:[%s1 + $0x5d8] sm:$0xff]
    %v2586 = vld [vmem:[%s1 + $0x5e0] sm:$0xff]
    %v2587 = vld [vmem:[%s1 + $0x5e8] sm:$0x1]
    %v2588 = vperm.slane %v2587, 0
    %v2590 = vsel %vm63, %v2581, 0
    %v2593 = vsel %vm63, %v2582, 0
    %2595 = vmatpush.msra.mxu0 0.0
    %2596 = vmatpush.msra.mxu0 0.0
    %2597 = vmatpush.msra.mxu0 0.0
    %2598 = vmatpush.msra.mxu0 0.0
    %2599 = vmatpush.msra.mxu0 0.0
    %2600 = vmatpush.msra.mxu0 0.0
    %2601 = vmatpush.msra.mxu0 0.0
    %2602 = vmatpush.msra.mxu0 0.0
    %2603 = vmatpush.msra.mxu0 0.0
    %2604 = vmatpush.msra.mxu0 0.0
    %2605 = vmatpush.msra.mxu0 0.0
    %2606 = vmatpush.msra.mxu0 0.0
    %2607 = vmatpush.msra.mxu0 %v2586
    %2608 = vmatpush.msra.mxu0 %v2585
    %2609 = vmatpush.msra.mxu0 %v2584
    %2610 = vmatpush.msra.mxu0 %v2583
    %2611 = vmatmul.f32.gmra.mxu0 %v2590
    %v2612 = vpop.f32.mrf.mxu0
    %v2613 = vadd.f32 %v2588, %v2612
    %2614 = vmatmul.f32.gmra.mxu0 %v2593
    %v2615 = vpop.f32.mrf.mxu0
    %v2616 = vadd.f32 %v2588, %v2615
    %2617 = vdwg.mxu0
    %v2618 = vmax.f32 %v2613, 0.0
    %v2619 = vmax.f32 %v2616, 0.0
    %v2620 = vld [vmem:[%s1 + $0x5f0] sm:$0xff]
    %v2621 = vld [vmem:[%s1 + $0x5f8] sm:$0xff]
    %v2622 = vld [vmem:[%s1 + $0x600] sm:$0xff]
    %v2623 = vld [vmem:[%s1 + $0x608] sm:$0xff]
    %v2624 = vld [vmem:[%s1 + $0x610] sm:$0x1]
    %v2625 = vperm.slane %v2624, 0
    %v2627 = vsel %vm63, %v2618, 0
    %v2630 = vsel %vm63, %v2619, 0
    %2632 = vmatpush.msra.mxu0 0.0
    %2633 = vmatpush.msra.mxu0 0.0
    %2634 = vmatpush.msra.mxu0 0.0
    %2635 = vmatpush.msra.mxu0 0.0
    %2636 = vmatpush.msra.mxu0 0.0
    %2637 = vmatpush.msra.mxu0 0.0
    %2638 = vmatpush.msra.mxu0 0.0
    %2639 = vmatpush.msra.mxu0 0.0
    %2640 = vmatpush.msra.mxu0 0.0
    %2641 = vmatpush.msra.mxu0 0.0
    %2642 = vmatpush.msra.mxu0 0.0
    %2643 = vmatpush.msra.mxu0 0.0
    %2644 = vmatpush.msra.mxu0 %v2623
    %2645 = vmatpush.msra.mxu0 %v2622
    %2646 = vmatpush.msra.mxu0 %v2621
    %2647 = vmatpush.msra.mxu0 %v2620
    %2648 = vmatmul.f32.gmra.mxu0 %v2627
    %v2649 = vpop.f32.mrf.mxu0
    %v2650 = vadd.f32 %v2625, %v2649
    %2651 = vmatmul.f32.gmra.mxu0 %v2630
    %v2652 = vpop.f32.mrf.mxu0
    %v2653 = vadd.f32 %v2625, %v2652
    %2654 = vdwg.mxu0
    %v2655 = vadd.f32 %v2581, %v2650
    %v2656 = vadd.f32 %v2582, %v2653
    %v2657 = vsel %vm63, %v2655, 0.0
    %2658 = vadd.xlane.f32.xlu0 %v2657
    %v2659 = vpop.xlane.xlu0 %2658
    %v2660 = vsel %vm63, %v2656, 0.0
    %2661 = vadd.xlane.f32.xlu0 %v2660
    %v2662 = vpop.xlane.xlu0 %2661
    %v2663 = vmul.f32 %v2659, %v371
    %v2664 = vmul.f32 %v2662, %v371
    %v2665 = vsub.f32 %v2655, %v2663
    %v2666 = vsub.f32 %v2656, %v2664
    %v2667 = vmul.f32 %v2665, %v2665
    %v2668 = vmul.f32 %v2666, %v2666
    %v2669 = vsel %vm63, %v2667, 0.0
    %2670 = vadd.xlane.f32.xlu0 %v2669
    %v2671 = vpop.xlane.xlu0 %2670
    %v2672 = vsel %vm63, %v2668, 0.0
    %2673 = vadd.xlane.f32.xlu0 %v2672
    %v2674 = vpop.xlane.xlu0 %2673
    %v2675 = vmul.f32 %v2671, %v371
    %v2676 = vmul.f32 %v2674, %v371
    %v2677 = vadd.f32 %v2675, 1e-05
    %v2678 = vadd.f32 %v2676, 1e-05
    %v2679 = vrsqrt.pop %v2677
    %v2680 = vmul.f32 %v2679, %v2677
    %v2681 = vmul.f32 %v2680, %v2679
    %v2682 = vmul.f32 0.5, %v2681
    %v2683 = vsub.f32 1.5, %v2682
    %v2684 = vmul.f32 %v2679, %v2683
    %vm2685 = vweird.f32 %v2677
    %vm2686 = vweird.f32 %v2679
    %vm2687 = vmor %vm2685, %vm2686
    %v2688 = vsel %vm2687, %v2679, %v2684
    %v2689 = vrsqrt.pop %v2678
    %v2690 = vmul.f32 %v2689, %v2678
    %v2691 = vmul.f32 %v2690, %v2689
    %v2692 = vmul.f32 0.5, %v2691
    %v2693 = vsub.f32 1.5, %v2692
    %v2694 = vmul.f32 %v2689, %v2693
    %vm2695 = vweird.f32 %v2678
    %vm2696 = vweird.f32 %v2689
    %vm2697 = vmor %vm2695, %vm2696
    %v2698 = vsel %vm2697, %v2689, %v2694
    %v2699 = vmul.f32 %v2665, %v2688
    %v2700 = vmul.f32 %v2666, %v2698
    %v2701 = vld [vmem:[%s1 + $0x638] sm:$0x1]
    %v2702 = vperm.slane %v2701, 0
    %v2703 = vmul.f32 %v2699, %v2702
    %v2704 = vmul.f32 %v2700, %v2702
    %v2705 = vld [vmem:[%s1 + $0x640] sm:$0x1]
    %v2706 = vperm.slane %v2705, 0
    %v2707 = vadd.f32 %v2703, %v2706
    %v2708 = vadd.f32 %v2704, %v2706
    %v2709 = vsel %vm63, %v2707, 0.0
    %2710 = vadd.xlane.f32.xlu0 %v2709
    %v2711 = vpop.xlane.xlu0 %2710
    %v2712 = vsel %vm63, %v2708, 0.0
    %2713 = vadd.xlane.f32.xlu0 %v2712
    %v2714 = vpop.xlane.xlu0 %2713
    %v2715 = vmul.f32 %v2711, %v371
    %v2716 = vmul.f32 %v2714, %v371
    %v2717 = vsub.f32 %v2707, %v2715
    %v2718 = vsub.f32 %v2708, %v2716
    %v2719 = vmul.f32 %v2717, %v2717
    %v2720 = vmul.f32 %v2718, %v2718
    %v2721 = vsel %vm63, %v2719, 0.0
    %2722 = vadd.xlane.f32.xlu0 %v2721
    %v2723 = vpop.xlane.xlu0 %2722
    %v2724 = vsel %vm63, %v2720, 0.0
    %2725 = vadd.xlane.f32.xlu0 %v2724
    %v2726 = vpop.xlane.xlu0 %2725
    %v2727 = vmul.f32 %v2723, %v371
    %v2728 = vmul.f32 %v2726, %v371
    %v2729 = vadd.f32 %v2727, 1e-05
    %v2730 = vadd.f32 %v2728, 1e-05
    %v2731 = vrsqrt.pop %v2729
    %v2732 = vmul.f32 %v2731, %v2729
    %v2733 = vmul.f32 %v2732, %v2731
    %v2734 = vmul.f32 0.5, %v2733
    %v2735 = vsub.f32 1.5, %v2734
    %v2736 = vmul.f32 %v2731, %v2735
    %vm2737 = vweird.f32 %v2729
    %vm2738 = vweird.f32 %v2731
    %vm2739 = vmor %vm2737, %vm2738
    %v2740 = vsel %vm2739, %v2731, %v2736
    %v2741 = vrsqrt.pop %v2730
    %v2742 = vmul.f32 %v2741, %v2730
    %v2743 = vmul.f32 %v2742, %v2741
    %v2744 = vmul.f32 0.5, %v2743
    %v2745 = vsub.f32 1.5, %v2744
    %v2746 = vmul.f32 %v2741, %v2745
    %vm2747 = vweird.f32 %v2730
    %vm2748 = vweird.f32 %v2741
    %vm2749 = vmor %vm2747, %vm2748
    %v2750 = vsel %vm2749, %v2741, %v2746
    %v2751 = vmul.f32 %v2717, %v2740
    %v2752 = vmul.f32 %v2718, %v2750
    %v2753 = vld [vmem:[%s1 + $0x648] sm:$0x1]
    %v2754 = vperm.slane %v2753, 0
    %v2755 = vmul.f32 %v2751, %v2754
    %v2756 = vmul.f32 %v2752, %v2754
    %v2757 = vld [vmem:[%s1 + $0x650] sm:$0x1]
    %v2758 = vperm.slane %v2757, 0
    %v2759 = vadd.f32 %v2755, %v2758
    %v2760 = vadd.f32 %v2756, %v2758
    %v2761 = vld [vmem:[%s1 + $0x68] sm:$0x3]
    %vm2762 = vcmask 130048
    %v2764 = vsel %vm2762, %v2761, 0
    %2766 = vmatpush.msra.mxu0 0.0
    %2767 = vmatpush.msra.mxu0 0.0
    %2768 = vmatpush.msra.mxu0 0.0
    %2769 = vmatpush.msra.mxu0 0.0
    %2770 = vmatpush.msra.mxu0 0.0
    %2771 = vmatpush.msra.mxu0 0.0
    %2772 = vmatpush.msra.mxu0 0.0
    %2773 = vmatpush.msra.mxu0 0.0
    %2774 = vmatpush.msra.mxu0 0.0
    %2775 = vmatpush.msra.mxu0 0.0
    %2776 = vmatpush.msra.mxu0 0.0
    %2777 = vmatpush.msra.mxu0 0.0
    %2778 = vmatpush.msra.mxu0 0.0
    %2779 = vmatpush.msra.mxu0 0.0
    %2780 = vmatpush.msra.mxu0 %v2760
    %2781 = vmatpush.msra.mxu0 %v2759
    %2782 = vmatmul.f32.gmra.mxu0 %v2764
    %v2783 = vpop.f32.mrf.mxu0
    %v2784 = vadd.f32 0.0, %v2783
    %2785 = vdwg.mxu0
    %v2786 = vld [vmem:[%s1 + $0x70] sm:$0xff]
    %v2787 = vld [vmem:[%s1 + $0x78] sm:$0xff]
    %v2788 = vld [vmem:[%s1 + $0x80] sm:$0xff]
    %v2789 = vld [vmem:[%s1 + $0x88] sm:$0xff]
    %v2790 = vld [vmem:[%s1 + $0x90] sm:$0x1]
    %v2791 = vperm.slane %v2790, 0
    %v2793 = vsel %vm63, %v2784, 0
    %2795 = vmatpush.msra.mxu0 0.0
    %2796 = vmatpush.msra.mxu0 0.0
    %2797 = vmatpush.msra.mxu0 0.0
    %2798 = vmatpush.msra.mxu0 0.0
    %2799 = vmatpush.msra.mxu0 0.0
    %2800 = vmatpush.msra.mxu0 0.0
    %2801 = vmatpush.msra.mxu0 0.0
    %2802 = vmatpush.msra.mxu0 0.0
    %2803 = vmatpush.msra.mxu0 0.0
    %2804 = vmatpush.msra.mxu0 0.0
    %2805 = vmatpush.msra.mxu0 0.0
    %2806 = vmatpush.msra.mxu0 0.0
    %2807 = vmatpush.msra.mxu0 %v2789
    %2808 = vmatpush.msra.mxu0 %v2788
    %2809 = vmatpush.msra.mxu0 %v2787
    %2810 = vmatpush.msra.mxu0 %v2786
    %2811 = vmatmul.f32.gmra.mxu0 %v2793
    %v2812 = vpop.f32.mrf.mxu0
    %v2813 = vadd.f32 %v2791, %v2812
    %2814 = vdwg.mxu0
    %vm2815 = vcmask 25600
    %2816 = vst.msk [vmem:[#allocation2] sm:$0x3] %vm2815, %v2813
    // Predicated region
    $region10: #{text_transformer_forward.1} parent=1 // pred_check
      _
    $region11: #{text_transformer_forward.1} parent=1 // pred_check_branch
      %2818 = sbr.rel (0) target = $region13
    $region12: #{text_transformer_forward.1} parent=1 // pred_region
      %2820 = vsyncadd [#allocation3], 0
      %s2822 = sshll.u32 [#allocation2], 4
      %s2823 = int_to_ptr.vmem [resolvable:$true] %s2822
      %s2824 = sshll.u32 %s2, 4
      %s2825 = int_to_ptr.hbm [resolvable:$true] %s2824
      %2827 = dma.vmem_to_hbm [thread:$0]  %s2823, 32, %s2825, [#allocation3]
    $region13: #{text_transformer_forward.1} parent=1 // pred_fallthru
      _
    // Predicated region
    $region14: #{text_transformer_forward.1} parent=1 // pred_check
      _
    $region15: #{text_transformer_forward.1} parent=1 // pred_check_branch
      %2829 = sbr.rel (0) target = $region17
    $region16: #{text_transformer_forward.1} parent=1 // pred_region
      %2831 = dma.done [#allocation3], 32
    $region17: #{text_transformer_forward.1} parent=1 // pred_fallthru
      _
    %2832 = vsyncpa [#allocation3], 1

</llo_original>
